<compile_context>
chip_gen: v7x
topology: tpu7x:2x2x1
jax: 0.10.0
libtpu: 0.0.40
codegen_flags: <defaults>
</compile_context>

<pallas_src>
import functools

import jax
import jax.numpy as jnp
from jax.experimental import pallas as pl
from jax.experimental.pallas import tpu as pltpu

# ----- hyper-parameters (the undefined globals of the reference file) -----
LAYER_NUMBER = 3          # LayerNumber
NE_FILTERS = 4            # NumberofFeatureChannel
RES_CH_NO = 4             # ResCHNo
SEQ_LEN = 64              # W (signal length)
BATCH = 4                 # N * L == 256 -> fills the 256-wide MXU on v6e/v7x

ECH_IN = [RES_CH_NO] + [(i + RES_CH_NO) * NE_FILTERS for i in range(LAYER_NUMBER - 1)]
ECH_OUT = [(i + RES_CH_NO) * NE_FILTERS for i in range(LAYER_NUMBER)]
DCH_OUT = ECH_OUT[::-1]


# --------------------------- static layer / slab layout ----------------------------
def _layer_specs():
    """(name, (cin per input part,), cout, has_bn, act) for every conv in forward order."""
    specs = []
    for i in range(LAYER_NUMBER):
        specs.append((f"enc{i}", (ECH_IN[i],), ECH_OUT[i], True, "leaky"))
    specs.append(("mid", (ECH_OUT[-1],), ECH_OUT[-1], True, "tanh"))
    prev = ECH_OUT[-1]
    for i in range(LAYER_NUMBER):
        skip_c = ECH_OUT[LAYER_NUMBER - 1 - i]
        specs.append((f"dec{i}", (prev, skip_c), DCH_OUT[i], True, "leaky"))
        prev = DCH_OUT[i]
    specs.append(("out", (DCH_OUT[-1],), DCH_OUT[-1], False, "leaky"))
    specs.append(("smooth", (DCH_OUT[-1], RES_CH_NO), 1, False, "leaky"))
    return specs


LAYER_SPECS = _layer_specs()


def _round_up(n, m):
    return (n + m - 1) // m * m


def _build_layout():
    """Row offsets of every weight block / per-channel vector inside the two slabs."""
    w_layout, p_layout = {}, {}
    wro, pro = 0, 0
    for name, parts, cout, has_bn, _ in LAYER_SPECS:
        for p, cin in enumerate(parts):
            for t in range(3):                       # t: 0=left tap, 1=centre, 2=right
                w_layout[(name, p, t)] = (wro, cout, cin)
                wro += _round_up(cout, 16)           # bf16 sublane-tile aligned
        if has_bn:
            for suffix in ("g", "b"):
                p_layout[(name, suffix)] = (pro, cout)
                pro += _round_up(cout, 8)            # f32 sublane-tile aligned
        else:
            p_layout[(name, "bias")] = (pro, cout)
            pro += _round_up(cout, 8)
    return w_layout, p_layout, wro, pro


W_LAYOUT, P_LAYOUT, W_ROWS, P_ROWS = _build_layout()


# --------------------------- fused Pallas kernel ----------------------------
def _fused_unet_kernel(x_ref, w_ref, p_ref, o_ref, *, seq_len):
    """Whole UNet forward: 3 encoders, middle, 3 decoders (with skips), out, smooth."""
    nl = x_ref.shape[1]
    # within-batch position of every lane (lane j -> sample j // L, position j % L)
    pos = jax.lax.broadcasted_iota(jnp.int32, (1, nl), 1) % seq_len
    is_first = pos == 0
    is_last = pos == seq_len - 1

    def wblk(name, p, t):
        ro, cout, cin = W_LAYOUT[(name, p, t)]
        return w_ref[pl.ds(ro, cout), pl.ds(0, cin)]          # (cout, cin) bf16

    def pvec(name, suffix):
        ro, c = P_LAYOUT[(name, suffix)]
        return p_ref[pl.ds(ro, c), pl.ds(0, 1)]               # (c, 1) f32

    def taps(a):
        # k=3, pad=1 per batch element: neighbours via lane rotation (XLU), zeros at the
        # per-batch boundaries so padding never leaks across batch elements.
        left = jnp.where(is_first, 0.0, pltpu.roll(a, shift=1, axis=1))        # x[p-1]
        right = jnp.where(is_last, 0.0, pltpu.roll(a, shift=nl - 1, axis=1))   # x[p+1]
        return (left.astype(jnp.bfloat16), a.astype(jnp.bfloat16),
                right.astype(jnp.bfloat16))

    def conv(name, part_acts):
        # sum of small accumulating MXU matmuls (3 taps x num input parts); no concat
        acc = None
        for p, a in enumerate(part_acts):
            for t, tap in enumerate(taps(a)):
                y = jnp.dot(wblk(name, p, t), tap, preferred_element_type=jnp.float32)
                acc = y if acc is None else acc + y
        return acc

    def bn_act(name, y, act):
        # PyTorch BatchNorm2d training mode (biased batch stats over N,H,W), folded into
        # a single scale/shift; the conv bias is dropped (cancelled by the mean subtract).
        mean = jnp.mean(y, axis=1, keepdims=True)
        var = jnp.maximum(jnp.mean(y * y, axis=1, keepdims=True) - mean * mean, 0.0)
        scale = pvec(name, "g") * jax.lax.rsqrt(var + 1e-5)
        shift = pvec(name, "b") - mean * scale
        y = y * scale + shift
        if act == "leaky":
            return jnp.maximum(y, 0.1 * y)                    # F.leaky_relu(x, 0.1)
        return jnp.tanh(y)

    def bias_leaky(name, y):
        y = y + pvec(name, "bias")
        return jnp.maximum(y, 0.1 * y)

    x = x_ref[...]                                            # (RES_CH_NO, N*L) f32
    inp = x

    skips = []
    for i in range(LAYER_NUMBER):
        x = bn_act(f"enc{i}", conv(f"enc{i}", [x]), "leaky")
        skips.append(x)
        # reference: x = x[:, :, ::2] strides NCHW dim-2 (H); with H == 1 it is a no-op.

    x = bn_act("mid", conv("mid", [x]), "tanh")               # middle

    for i in range(LAYER_NUMBER):
        skip = skips[LAYER_NUMBER - 1 - i]
        # torch.cat([x, skip], dim=1) @ W  ==  W_x @ x + W_skip @ skip (split weights)
        x = bn_act(f"dec{i}", conv(f"dec{i}", [x, skip]), "leaky")

    x = bias_leaky("out", conv("out", [x]))                   # out
    x = bias_leaky("smooth", conv("smooth", [x, inp]))        # smooth (concat w/ input)

    o_ref[...] = x                                            # single (1, N*L) store


def unet_fused(x2d, wslab, pslab, *, seq_len):
    return pl.pallas_call(
        functools.partial(_fused_unet_kernel, seq_len=seq_len),
        out_shape=jax.ShapeDtypeStruct((1, x2d.shape[1]), jnp.float32),
        in_specs=[pl.BlockSpec(memory_space=pltpu.MemorySpace.VMEM)] * 3,
        out_specs=pl.BlockSpec(memory_space=pltpu.MemorySpace.VMEM),
    )(x2d, wslab, pslab)


# --------------------------- parameters ------------------------------------
def init_params(key):
    """Per-layer params: conv weight (cout, cin_total, 3) f32 (the middle kernel row of the
    PyTorch (cout,cin,3,3) weight), BN gamma/beta (PyTorch init: 1/0), bias for out/smooth.
    Biases of BN-followed convs are omitted: BN mean-subtraction cancels them exactly."""
    params = {}
    keys = jax.random.split(key, len(LAYER_SPECS))
    for k, (name, parts, cout, has_bn, _) in zip(keys, LAYER_SPECS):
        cin_tot = sum(parts)
        kw, kb = jax.random.split(k)
        bound = 1.0 / jnp.sqrt(3.0 * cin_tot)
        layer = {"w": jax.random.uniform(kw, (cout, cin_tot, 3), jnp.float32, -bound, bound)}
        if has_bn:
            layer["gamma"] = jnp.ones((cout,), jnp.float32)
            layer["beta"] = jnp.zeros((cout,), jnp.float32)
        else:
            layer["bias"] = jax.random.uniform(kb, (cout,), jnp.float32, -bound, bound)
        params[name] = layer
    return params


def pack_params(params):
    """Pack every conv weight (pre-cast to bf16, split per tap and per input part) into one
    (W_ROWS, 128) slab and every per-channel vector into one (P_ROWS, 1) f32 slab:
    2 HBM->VMEM DMAs for all parameters instead of ~33."""
    wslab = jnp.zeros((W_ROWS, 128), jnp.bfloat16)
    pslab = jnp.zeros((P_ROWS, 1), jnp.float32)
    for name, parts, cout, has_bn, _ in LAYER_SPECS:
        w = params[name]["w"]                                  # (cout, cin_total, 3)
        col = 0
        for p, cin in enumerate(parts):
            for t in range(3):
                ro, _, _ = W_LAYOUT[(name, p, t)]
                blk = w[:, col:col + cin, t].astype(jnp.bfloat16)
                wslab = wslab.at[ro:ro + cout, :cin].set(blk)
            col += cin
        if has_bn:
            ro, _ = P_LAYOUT[(name, "g")]
            pslab = pslab.at[ro:ro + cout, 0].set(params[name]["gamma"])
            ro, _ = P_LAYOUT[(name, "b")]
            pslab = pslab.at[ro:ro + cout, 0].set(params[name]["beta"])
        else:
            ro, _ = P_LAYOUT[(name, "bias")]
            pslab = pslab.at[ro:ro + cout, 0].set(params[name]["bias"])
    return wslab, pslab


# --------------------------- forward ----------------------------------------
@jax.jit
def unet_forward(x_nchw, wslab, pslab):
    # x_nchw: (N, ResCHNo, 1, L) -> (C, N*L): lanes = N*L, sublanes = channels
    n, c, _, seq_len = x_nchw.shape
    x2d = jnp.transpose(x_nchw[:, :, 0, :], (1, 0, 2)).reshape(c, n * seq_len)
    y2d = unet_fused(x2d.astype(jnp.float32), wslab, pslab, seq_len=seq_len)
    # back to PyTorch Conv1d output layout (N, 1, L)
    return y2d.reshape(n, seq_len)[:, None, :]


if __name__ == "__main__":
    x = jax.random.normal(jax.random.PRNGKey(0), (BATCH, RES_CH_NO, 1, SEQ_LEN), jnp.float32)
    params = init_params(jax.random.PRNGKey(42))
    wslab, pslab = pack_params(params)

    y = jax.block_until_ready(unet_forward(x, wslab, pslab))

    assert y.shape == (BATCH, 1, SEQ_LEN), y.shape
    assert bool(jnp.all(jnp.isfinite(y)))
    print("KERNEL_OK")
</pallas_src>

<mosaic_0001>
module attributes {stable_mosaic.version = 11 : i64} {
  func.func @_fused_unet_kernel(%arg0: memref<4x256xf32, #tpu.memory_space<vmem>>, %arg1: memref<960x128xbf16, #tpu.memory_space<vmem>>, %arg2: memref<328x1xf32, #tpu.memory_space<vmem>>, %arg3: memref<1x256xf32, #tpu.memory_space<vmem>>) attributes {dimension_semantics = [], scalar_prefetch = 0 : i64, scratch_operands = 0 : i64, tpu.core_type = #tpu.core_type<tc>} {
    %0 = tpu.iota {dimensions = array<i32: 1>} : vector<1x256xi32>
    %c64_i32 = arith.constant 64 : i32
    %c0_i32 = arith.constant 0 : i32
    %1 = arith.cmpi eq, %c64_i32, %c0_i32 : i32
    %c1_i32 = arith.constant 1 : i32
    %2 = arith.select %1, %c1_i32, %c64_i32 : i32
    %3 = vector.broadcast %2 : i32 to vector<1x256xi32>
    %4 = arith.remsi %0, %3 : vector<1x256xi32>
    %c0_i32_0 = arith.constant 0 : i32
    %5 = vector.broadcast %c0_i32_0 : i32 to vector<1x256xi32>
    %6 = arith.cmpi ne, %4, %5 : vector<1x256xi32>
    %c0_i32_1 = arith.constant 0 : i32
    %7 = vector.broadcast %c0_i32_1 : i32 to vector<1x256xi32>
    %8 = arith.cmpi slt, %4, %7 : vector<1x256xi32>
    %c0_i32_2 = arith.constant 0 : i32
    %9 = arith.cmpi slt, %2, %c0_i32_2 : i32
    %10 = vector.broadcast %9 : i1 to vector<1x256xi1>
    %11 = vector.broadcast %10 : vector<1x256xi1> to vector<1x256xi1>
    %12 = arith.xori %8, %11 : vector<1x256xi1>
    %13 = arith.andi %12, %6 : vector<1x256xi1>
    %14 = vector.broadcast %2 : i32 to vector<1x256xi32>
    %15 = arith.addi %4, %14 : vector<1x256xi32>
    %16 = arith.select %13, %15, %4 : vector<1x256xi1>, vector<1x256xi32>
    %c0_i32_3 = arith.constant 0 : i32
    %17 = vector.broadcast %c0_i32_3 : i32 to vector<1x256xi32>
    %18 = arith.cmpi eq, %16, %17 : vector<1x256xi32>
    %c63_i32 = arith.constant 63 : i32
    %19 = vector.broadcast %c63_i32 : i32 to vector<1x256xi32>
    %20 = arith.cmpi eq, %16, %19 : vector<1x256xi32>
    %c0 = arith.constant 0 : index
    %c0_4 = arith.constant 0 : index
    %21 = vector.load %arg0[%c0, %c0_4] : memref<4x256xf32, #tpu.memory_space<vmem>>, vector<4x256xf32>
    %c1_i32_5 = arith.constant 1 : i32
    %22 = tpu.dynamic_rotate %21 by %c1_i32_5 dim 1 : vector<4x256xf32>, i32 -> vector<4x256xf32>
    %cst = arith.constant 0.000000e+00 : f32
    %23 = vector.shape_cast %18 : vector<1x256xi1> to vector<1x256xi1>
    %24 = vector.broadcast %23 : vector<1x256xi1> to vector<4x256xi1>
    %25 = vector.broadcast %cst : f32 to vector<4x256xf32>
    %26 = arith.select %24, %25, %22 : vector<4x256xi1>, vector<4x256xf32>
    %c255_i32 = arith.constant 255 : i32
    %27 = tpu.dynamic_rotate %21 by %c255_i32 dim 1 : vector<4x256xf32>, i32 -> vector<4x256xf32>
    %cst_6 = arith.constant 0.000000e+00 : f32
    %28 = vector.shape_cast %20 : vector<1x256xi1> to vector<1x256xi1>
    %29 = vector.broadcast %28 : vector<1x256xi1> to vector<4x256xi1>
    %30 = vector.broadcast %cst_6 : f32 to vector<4x256xf32>
    %31 = arith.select %29, %30, %27 : vector<4x256xi1>, vector<4x256xf32>
    %32 = arith.truncf %26 : vector<4x256xf32> to vector<4x256xbf16>
    %33 = arith.truncf %21 : vector<4x256xf32> to vector<4x256xbf16>
    %34 = arith.truncf %31 : vector<4x256xf32> to vector<4x256xbf16>
    %c0_7 = arith.constant 0 : index
    %c0_8 = arith.constant 0 : index
    %35 = vector.load %arg1[%c0_7, %c0_8] : memref<960x128xbf16, #tpu.memory_space<vmem>>, vector<16x4xbf16>
    %cst_9 = arith.constant dense<0.000000e+00> : vector<16x256xf32>
    %36 = tpu.matmul %35, %32, %cst_9 {dimension_numbers = #tpu.dot_dimension_numbers<[1], [0], [0], [1], [0, 0, 1, 1], [], []>} : vector<16x4xbf16>, vector<4x256xbf16>, vector<16x256xf32> -> vector<16x256xf32>
    %c16 = arith.constant 16 : index
    %c0_10 = arith.constant 0 : index
    %37 = vector.load %arg1[%c16, %c0_10] : memref<960x128xbf16, #tpu.memory_space<vmem>>, vector<16x4xbf16>
    %cst_11 = arith.constant dense<0.000000e+00> : vector<16x256xf32>
    %38 = tpu.matmul %37, %33, %cst_11 {dimension_numbers = #tpu.dot_dimension_numbers<[1], [0], [0], [1], [0, 0, 1, 1], [], []>} : vector<16x4xbf16>, vector<4x256xbf16>, vector<16x256xf32> -> vector<16x256xf32>
    %39 = arith.addf %36, %38 : vector<16x256xf32>
    %c32 = arith.constant 32 : index
    %c0_12 = arith.constant 0 : index
    %40 = vector.load %arg1[%c32, %c0_12] : memref<960x128xbf16, #tpu.memory_space<vmem>>, vector<16x4xbf16>
    %cst_13 = arith.constant dense<0.000000e+00> : vector<16x256xf32>
    %41 = tpu.matmul %40, %34, %cst_13 {dimension_numbers = #tpu.dot_dimension_numbers<[1], [0], [0], [1], [0, 0, 1, 1], [], []>} : vector<16x4xbf16>, vector<4x256xbf16>, vector<16x256xf32> -> vector<16x256xf32>
    %42 = arith.addf %39, %41 : vector<16x256xf32>
    %cst_14 = arith.constant dense<0.000000e+00> : vector<16xf32>
    %43 = vector.multi_reduction <add>, %42, %cst_14 [1] : vector<16x256xf32> to vector<16xf32>
    %44 = vector.shape_cast %43 : vector<16xf32> to vector<16x1xf32>
    %cst_15 = arith.constant 2.560000e+02 : f32
    %45 = vector.broadcast %cst_15 : f32 to vector<16x1xf32>
    %46 = arith.divf %44, %45 : vector<16x1xf32>
    %47 = arith.mulf %42, %42 : vector<16x256xf32>
    %cst_16 = arith.constant dense<0.000000e+00> : vector<16xf32>
    %48 = vector.multi_reduction <add>, %47, %cst_16 [1] : vector<16x256xf32> to vector<16xf32>
    %49 = vector.shape_cast %48 : vector<16xf32> to vector<16x1xf32>
    %cst_17 = arith.constant 2.560000e+02 : f32
    %50 = vector.broadcast %cst_17 : f32 to vector<16x1xf32>
    %51 = arith.divf %49, %50 : vector<16x1xf32>
    %52 = arith.mulf %46, %46 : vector<16x1xf32>
    %53 = arith.subf %51, %52 : vector<16x1xf32>
    %cst_18 = arith.constant 0.000000e+00 : f32
    %54 = vector.broadcast %cst_18 : f32 to vector<16x1xf32>
    %55 = arith.maximumf %53, %54 : vector<16x1xf32>
    %c0_19 = arith.constant 0 : index
    %c0_20 = arith.constant 0 : index
    %56 = vector.load %arg2[%c0_19, %c0_20] : memref<328x1xf32, #tpu.memory_space<vmem>>, vector<16x1xf32>
    %cst_21 = arith.constant 9.99999974E-6 : f32
    %57 = vector.broadcast %cst_21 : f32 to vector<16x1xf32>
    %58 = arith.addf %55, %57 : vector<16x1xf32>
    %59 = math.rsqrt %58 : vector<16x1xf32>
    %60 = arith.mulf %56, %59 : vector<16x1xf32>
    %c16_22 = arith.constant 16 : index
    %c0_23 = arith.constant 0 : index
    %61 = vector.load %arg2[%c16_22, %c0_23] : memref<328x1xf32, #tpu.memory_space<vmem>>, vector<16x1xf32>
    %62 = arith.mulf %46, %60 : vector<16x1xf32>
    %63 = arith.subf %61, %62 : vector<16x1xf32>
    %64 = vector.broadcast %60 : vector<16x1xf32> to vector<16x256xf32>
    %65 = arith.mulf %42, %64 : vector<16x256xf32>
    %66 = vector.broadcast %63 : vector<16x1xf32> to vector<16x256xf32>
    %67 = arith.addf %65, %66 : vector<16x256xf32>
    %cst_24 = arith.constant 1.000000e-01 : f32
    %68 = vector.broadcast %cst_24 : f32 to vector<16x256xf32>
    %69 = arith.mulf %68, %67 : vector<16x256xf32>
    %70 = arith.maximumf %67, %69 : vector<16x256xf32>
    %c1_i32_25 = arith.constant 1 : i32
    %71 = tpu.dynamic_rotate %70 by %c1_i32_25 dim 1 : vector<16x256xf32>, i32 -> vector<16x256xf32>
    %cst_26 = arith.constant 0.000000e+00 : f32
    %72 = vector.shape_cast %18 : vector<1x256xi1> to vector<1x256xi1>
    %73 = vector.broadcast %72 : vector<1x256xi1> to vector<16x256xi1>
    %74 = vector.broadcast %cst_26 : f32 to vector<16x256xf32>
    %75 = arith.select %73, %74, %71 : vector<16x256xi1>, vector<16x256xf32>
    %c255_i32_27 = arith.constant 255 : i32
    %76 = tpu.dynamic_rotate %70 by %c255_i32_27 dim 1 : vector<16x256xf32>, i32 -> vector<16x256xf32>
    %cst_28 = arith.constant 0.000000e+00 : f32
    %77 = vector.shape_cast %20 : vector<1x256xi1> to vector<1x256xi1>
    %78 = vector.broadcast %77 : vector<1x256xi1> to vector<16x256xi1>
    %79 = vector.broadcast %cst_28 : f32 to vector<16x256xf32>
    %80 = arith.select %78, %79, %76 : vector<16x256xi1>, vector<16x256xf32>
    %81 = arith.truncf %75 : vector<16x256xf32> to vector<16x256xbf16>
    %82 = arith.truncf %70 : vector<16x256xf32> to vector<16x256xbf16>
    %83 = arith.truncf %80 : vector<16x256xf32> to vector<16x256xbf16>
    %c48 = arith.constant 48 : index
    %c0_29 = arith.constant 0 : index
    %84 = vector.load %arg1[%c48, %c0_29] : memref<960x128xbf16, #tpu.memory_space<vmem>>, vector<20x16xbf16>
    %cst_30 = arith.constant dense<0.000000e+00> : vector<20x256xf32>
    %85 = tpu.matmul %84, %81, %cst_30 {dimension_numbers = #tpu.dot_dimension_numbers<[1], [0], [0], [1], [0, 0, 1, 1], [], []>} : vector<20x16xbf16>, vector<16x256xbf16>, vector<20x256xf32> -> vector<20x256xf32>
    %c80 = arith.constant 80 : index
    %c0_31 = arith.constant 0 : index
    %86 = vector.load %arg1[%c80, %c0_31] : memref<960x128xbf16, #tpu.memory_space<vmem>>, vector<20x16xbf16>
    %cst_32 = arith.constant dense<0.000000e+00> : vector<20x256xf32>
    %87 = tpu.matmul %86, %82, %cst_32 {dimension_numbers = #tpu.dot_dimension_numbers<[1], [0], [0], [1], [0, 0, 1, 1], [], []>} : vector<20x16xbf16>, vector<16x256xbf16>, vector<20x256xf32> -> vector<20x256xf32>
    %88 = arith.addf %85, %87 : vector<20x256xf32>
    %c112 = arith.constant 112 : index
    %c0_33 = arith.constant 0 : index
    %89 = vector.load %arg1[%c112, %c0_33] : memref<960x128xbf16, #tpu.memory_space<vmem>>, vector<20x16xbf16>
    %cst_34 = arith.constant dense<0.000000e+00> : vector<20x256xf32>
    %90 = tpu.matmul %89, %83, %cst_34 {dimension_numbers = #tpu.dot_dimension_numbers<[1], [0], [0], [1], [0, 0, 1, 1], [], []>} : vector<20x16xbf16>, vector<16x256xbf16>, vector<20x256xf32> -> vector<20x256xf32>
    %91 = arith.addf %88, %90 : vector<20x256xf32>
    %cst_35 = arith.constant dense<0.000000e+00> : vector<20xf32>
    %92 = vector.multi_reduction <add>, %91, %cst_35 [1] : vector<20x256xf32> to vector<20xf32>
    %93 = vector.shape_cast %92 : vector<20xf32> to vector<20x1xf32>
    %cst_36 = arith.constant 2.560000e+02 : f32
    %94 = vector.broadcast %cst_36 : f32 to vector<20x1xf32>
    %95 = arith.divf %93, %94 : vector<20x1xf32>
    %96 = arith.mulf %91, %91 : vector<20x256xf32>
    %cst_37 = arith.constant dense<0.000000e+00> : vector<20xf32>
    %97 = vector.multi_reduction <add>, %96, %cst_37 [1] : vector<20x256xf32> to vector<20xf32>
    %98 = vector.shape_cast %97 : vector<20xf32> to vector<20x1xf32>
    %cst_38 = arith.constant 2.560000e+02 : f32
    %99 = vector.broadcast %cst_38 : f32 to vector<20x1xf32>
    %100 = arith.divf %98, %99 : vector<20x1xf32>
    %101 = arith.mulf %95, %95 : vector<20x1xf32>
    %102 = arith.subf %100, %101 : vector<20x1xf32>
    %cst_39 = arith.constant 0.000000e+00 : f32
    %103 = vector.broadcast %cst_39 : f32 to vector<20x1xf32>
    %104 = arith.maximumf %102, %103 : vector<20x1xf32>
    %c32_40 = arith.constant 32 : index
    %c0_41 = arith.constant 0 : index
    %105 = vector.load %arg2[%c32_40, %c0_41] : memref<328x1xf32, #tpu.memory_space<vmem>>, vector<20x1xf32>
    %cst_42 = arith.constant 9.99999974E-6 : f32
    %106 = vector.broadcast %cst_42 : f32 to vector<20x1xf32>
    %107 = arith.addf %104, %106 : vector<20x1xf32>
    %108 = math.rsqrt %107 : vector<20x1xf32>
    %109 = arith.mulf %105, %108 : vector<20x1xf32>
    %c56 = arith.constant 56 : index
    %c0_43 = arith.constant 0 : index
    %110 = vector.load %arg2[%c56, %c0_43] : memref<328x1xf32, #tpu.memory_space<vmem>>, vector<20x1xf32>
    %111 = arith.mulf %95, %109 : vector<20x1xf32>
    %112 = arith.subf %110, %111 : vector<20x1xf32>
    %113 = vector.broadcast %109 : vector<20x1xf32> to vector<20x256xf32>
    %114 = arith.mulf %91, %113 : vector<20x256xf32>
    %115 = vector.broadcast %112 : vector<20x1xf32> to vector<20x256xf32>
    %116 = arith.addf %114, %115 : vector<20x256xf32>
    %cst_44 = arith.constant 1.000000e-01 : f32
    %117 = vector.broadcast %cst_44 : f32 to vector<20x256xf32>
    %118 = arith.mulf %117, %116 : vector<20x256xf32>
    %119 = arith.maximumf %116, %118 : vector<20x256xf32>
    %c1_i32_45 = arith.constant 1 : i32
    %120 = tpu.dynamic_rotate %119 by %c1_i32_45 dim 1 : vector<20x256xf32>, i32 -> vector<20x256xf32>
    %cst_46 = arith.constant 0.000000e+00 : f32
    %121 = vector.shape_cast %18 : vector<1x256xi1> to vector<1x256xi1>
    %122 = vector.broadcast %121 : vector<1x256xi1> to vector<20x256xi1>
    %123 = vector.broadcast %cst_46 : f32 to vector<20x256xf32>
    %124 = arith.select %122, %123, %120 : vector<20x256xi1>, vector<20x256xf32>
    %c255_i32_47 = arith.constant 255 : i32
    %125 = tpu.dynamic_rotate %119 by %c255_i32_47 dim 1 : vector<20x256xf32>, i32 -> vector<20x256xf32>
    %cst_48 = arith.constant 0.000000e+00 : f32
    %126 = vector.shape_cast %20 : vector<1x256xi1> to vector<1x256xi1>
    %127 = vector.broadcast %126 : vector<1x256xi1> to vector<20x256xi1>
    %128 = vector.broadcast %cst_48 : f32 to vector<20x256xf32>
    %129 = arith.select %127, %128, %125 : vector<20x256xi1>, vector<20x256xf32>
    %130 = arith.truncf %124 : vector<20x256xf32> to vector<20x256xbf16>
    %131 = arith.truncf %119 : vector<20x256xf32> to vector<20x256xbf16>
    %132 = arith.truncf %129 : vector<20x256xf32> to vector<20x256xbf16>
    %c144 = arith.constant 144 : index
    %c0_49 = arith.constant 0 : index
    %133 = vector.load %arg1[%c144, %c0_49] : memref<960x128xbf16, #tpu.memory_space<vmem>>, vector<24x20xbf16>
    %cst_50 = arith.constant dense<0.000000e+00> : vector<24x256xf32>
    %134 = tpu.matmul %133, %130, %cst_50 {dimension_numbers = #tpu.dot_dimension_numbers<[1], [0], [0], [1], [0, 0, 1, 1], [], []>} : vector<24x20xbf16>, vector<20x256xbf16>, vector<24x256xf32> -> vector<24x256xf32>
    %c176 = arith.constant 176 : index
    %c0_51 = arith.constant 0 : index
    %135 = vector.load %arg1[%c176, %c0_51] : memref<960x128xbf16, #tpu.memory_space<vmem>>, vector<24x20xbf16>
    %cst_52 = arith.constant dense<0.000000e+00> : vector<24x256xf32>
    %136 = tpu.matmul %135, %131, %cst_52 {dimension_numbers = #tpu.dot_dimension_numbers<[1], [0], [0], [1], [0, 0, 1, 1], [], []>} : vector<24x20xbf16>, vector<20x256xbf16>, vector<24x256xf32> -> vector<24x256xf32>
    %137 = arith.addf %134, %136 : vector<24x256xf32>
    %c208 = arith.constant 208 : index
    %c0_53 = arith.constant 0 : index
    %138 = vector.load %arg1[%c208, %c0_53] : memref<960x128xbf16, #tpu.memory_space<vmem>>, vector<24x20xbf16>
    %cst_54 = arith.constant dense<0.000000e+00> : vector<24x256xf32>
    %139 = tpu.matmul %138, %132, %cst_54 {dimension_numbers = #tpu.dot_dimension_numbers<[1], [0], [0], [1], [0, 0, 1, 1], [], []>} : vector<24x20xbf16>, vector<20x256xbf16>, vector<24x256xf32> -> vector<24x256xf32>
    %140 = arith.addf %137, %139 : vector<24x256xf32>
    %cst_55 = arith.constant dense<0.000000e+00> : vector<24xf32>
    %141 = vector.multi_reduction <add>, %140, %cst_55 [1] : vector<24x256xf32> to vector<24xf32>
    %142 = vector.shape_cast %141 : vector<24xf32> to vector<24x1xf32>
    %cst_56 = arith.constant 2.560000e+02 : f32
    %143 = vector.broadcast %cst_56 : f32 to vector<24x1xf32>
    %144 = arith.divf %142, %143 : vector<24x1xf32>
    %145 = arith.mulf %140, %140 : vector<24x256xf32>
    %cst_57 = arith.constant dense<0.000000e+00> : vector<24xf32>
    %146 = vector.multi_reduction <add>, %145, %cst_57 [1] : vector<24x256xf32> to vector<24xf32>
    %147 = vector.shape_cast %146 : vector<24xf32> to vector<24x1xf32>
    %cst_58 = arith.constant 2.560000e+02 : f32
    %148 = vector.broadcast %cst_58 : f32 to vector<24x1xf32>
    %149 = arith.divf %147, %148 : vector<24x1xf32>
    %150 = arith.mulf %144, %144 : vector<24x1xf32>
    %151 = arith.subf %149, %150 : vector<24x1xf32>
    %cst_59 = arith.constant 0.000000e+00 : f32
    %152 = vector.broadcast %cst_59 : f32 to vector<24x1xf32>
    %153 = arith.maximumf %151, %152 : vector<24x1xf32>
    %c80_60 = arith.constant 80 : index
    %c0_61 = arith.constant 0 : index
    %154 = vector.load %arg2[%c80_60, %c0_61] : memref<328x1xf32, #tpu.memory_space<vmem>>, vector<24x1xf32>
    %cst_62 = arith.constant 9.99999974E-6 : f32
    %155 = vector.broadcast %cst_62 : f32 to vector<24x1xf32>
    %156 = arith.addf %153, %155 : vector<24x1xf32>
    %157 = math.rsqrt %156 : vector<24x1xf32>
    %158 = arith.mulf %154, %157 : vector<24x1xf32>
    %c104 = arith.constant 104 : index
    %c0_63 = arith.constant 0 : index
    %159 = vector.load %arg2[%c104, %c0_63] : memref<328x1xf32, #tpu.memory_space<vmem>>, vector<24x1xf32>
    %160 = arith.mulf %144, %158 : vector<24x1xf32>
    %161 = arith.subf %159, %160 : vector<24x1xf32>
    %162 = vector.broadcast %158 : vector<24x1xf32> to vector<24x256xf32>
    %163 = arith.mulf %140, %162 : vector<24x256xf32>
    %164 = vector.broadcast %161 : vector<24x1xf32> to vector<24x256xf32>
    %165 = arith.addf %163, %164 : vector<24x256xf32>
    %cst_64 = arith.constant 1.000000e-01 : f32
    %166 = vector.broadcast %cst_64 : f32 to vector<24x256xf32>
    %167 = arith.mulf %166, %165 : vector<24x256xf32>
    %168 = arith.maximumf %165, %167 : vector<24x256xf32>
    %c1_i32_65 = arith.constant 1 : i32
    %169 = tpu.dynamic_rotate %168 by %c1_i32_65 dim 1 : vector<24x256xf32>, i32 -> vector<24x256xf32>
    %cst_66 = arith.constant 0.000000e+00 : f32
    %170 = vector.shape_cast %18 : vector<1x256xi1> to vector<1x256xi1>
    %171 = vector.broadcast %170 : vector<1x256xi1> to vector<24x256xi1>
    %172 = vector.broadcast %cst_66 : f32 to vector<24x256xf32>
    %173 = arith.select %171, %172, %169 : vector<24x256xi1>, vector<24x256xf32>
    %c255_i32_67 = arith.constant 255 : i32
    %174 = tpu.dynamic_rotate %168 by %c255_i32_67 dim 1 : vector<24x256xf32>, i32 -> vector<24x256xf32>
    %cst_68 = arith.constant 0.000000e+00 : f32
    %175 = vector.shape_cast %20 : vector<1x256xi1> to vector<1x256xi1>
    %176 = vector.broadcast %175 : vector<1x256xi1> to vector<24x256xi1>
    %177 = vector.broadcast %cst_68 : f32 to vector<24x256xf32>
    %178 = arith.select %176, %177, %174 : vector<24x256xi1>, vector<24x256xf32>
    %179 = arith.truncf %173 : vector<24x256xf32> to vector<24x256xbf16>
    %180 = arith.truncf %168 : vector<24x256xf32> to vector<24x256xbf16>
    %181 = arith.truncf %178 : vector<24x256xf32> to vector<24x256xbf16>
    %c240 = arith.constant 240 : index
    %c0_69 = arith.constant 0 : index
    %182 = vector.load %arg1[%c240, %c0_69] : memref<960x128xbf16, #tpu.memory_space<vmem>>, vector<24x24xbf16>
    %cst_70 = arith.constant dense<0.000000e+00> : vector<24x256xf32>
    %183 = tpu.matmul %182, %179, %cst_70 {dimension_numbers = #tpu.dot_dimension_numbers<[1], [0], [0], [1], [0, 0, 1, 1], [], []>} : vector<24x24xbf16>, vector<24x256xbf16>, vector<24x256xf32> -> vector<24x256xf32>
    %c272 = arith.constant 272 : index
    %c0_71 = arith.constant 0 : index
    %184 = vector.load %arg1[%c272, %c0_71] : memref<960x128xbf16, #tpu.memory_space<vmem>>, vector<24x24xbf16>
    %cst_72 = arith.constant dense<0.000000e+00> : vector<24x256xf32>
    %185 = tpu.matmul %184, %180, %cst_72 {dimension_numbers = #tpu.dot_dimension_numbers<[1], [0], [0], [1], [0, 0, 1, 1], [], []>} : vector<24x24xbf16>, vector<24x256xbf16>, vector<24x256xf32> -> vector<24x256xf32>
    %186 = arith.addf %183, %185 : vector<24x256xf32>
    %c304 = arith.constant 304 : index
    %c0_73 = arith.constant 0 : index
    %187 = vector.load %arg1[%c304, %c0_73] : memref<960x128xbf16, #tpu.memory_space<vmem>>, vector<24x24xbf16>
    %cst_74 = arith.constant dense<0.000000e+00> : vector<24x256xf32>
    %188 = tpu.matmul %187, %181, %cst_74 {dimension_numbers = #tpu.dot_dimension_numbers<[1], [0], [0], [1], [0, 0, 1, 1], [], []>} : vector<24x24xbf16>, vector<24x256xbf16>, vector<24x256xf32> -> vector<24x256xf32>
    %189 = arith.addf %186, %188 : vector<24x256xf32>
    %cst_75 = arith.constant dense<0.000000e+00> : vector<24xf32>
    %190 = vector.multi_reduction <add>, %189, %cst_75 [1] : vector<24x256xf32> to vector<24xf32>
    %191 = vector.shape_cast %190 : vector<24xf32> to vector<24x1xf32>
    %cst_76 = arith.constant 2.560000e+02 : f32
    %192 = vector.broadcast %cst_76 : f32 to vector<24x1xf32>
    %193 = arith.divf %191, %192 : vector<24x1xf32>
    %194 = arith.mulf %189, %189 : vector<24x256xf32>
    %cst_77 = arith.constant dense<0.000000e+00> : vector<24xf32>
    %195 = vector.multi_reduction <add>, %194, %cst_77 [1] : vector<24x256xf32> to vector<24xf32>
    %196 = vector.shape_cast %195 : vector<24xf32> to vector<24x1xf32>
    %cst_78 = arith.constant 2.560000e+02 : f32
    %197 = vector.broadcast %cst_78 : f32 to vector<24x1xf32>
    %198 = arith.divf %196, %197 : vector<24x1xf32>
    %199 = arith.mulf %193, %193 : vector<24x1xf32>
    %200 = arith.subf %198, %199 : vector<24x1xf32>
    %cst_79 = arith.constant 0.000000e+00 : f32
    %201 = vector.broadcast %cst_79 : f32 to vector<24x1xf32>
    %202 = arith.maximumf %200, %201 : vector<24x1xf32>
    %c128 = arith.constant 128 : index
    %c0_80 = arith.constant 0 : index
    %203 = vector.load %arg2[%c128, %c0_80] : memref<328x1xf32, #tpu.memory_space<vmem>>, vector<24x1xf32>
    %cst_81 = arith.constant 9.99999974E-6 : f32
    %204 = vector.broadcast %cst_81 : f32 to vector<24x1xf32>
    %205 = arith.addf %202, %204 : vector<24x1xf32>
    %206 = math.rsqrt %205 : vector<24x1xf32>
    %207 = arith.mulf %203, %206 : vector<24x1xf32>
    %c152 = arith.constant 152 : index
    %c0_82 = arith.constant 0 : index
    %208 = vector.load %arg2[%c152, %c0_82] : memref<328x1xf32, #tpu.memory_space<vmem>>, vector<24x1xf32>
    %209 = arith.mulf %193, %207 : vector<24x1xf32>
    %210 = arith.subf %208, %209 : vector<24x1xf32>
    %211 = vector.broadcast %207 : vector<24x1xf32> to vector<24x256xf32>
    %212 = arith.mulf %189, %211 : vector<24x256xf32>
    %213 = vector.broadcast %210 : vector<24x1xf32> to vector<24x256xf32>
    %214 = arith.addf %212, %213 : vector<24x256xf32>
    %215 = math.tanh %214 : vector<24x256xf32>
    %c1_i32_83 = arith.constant 1 : i32
    %216 = tpu.dynamic_rotate %215 by %c1_i32_83 dim 1 : vector<24x256xf32>, i32 -> vector<24x256xf32>
    %cst_84 = arith.constant 0.000000e+00 : f32
    %217 = vector.shape_cast %18 : vector<1x256xi1> to vector<1x256xi1>
    %218 = vector.broadcast %217 : vector<1x256xi1> to vector<24x256xi1>
    %219 = vector.broadcast %cst_84 : f32 to vector<24x256xf32>
    %220 = arith.select %218, %219, %216 : vector<24x256xi1>, vector<24x256xf32>
    %c255_i32_85 = arith.constant 255 : i32
    %221 = tpu.dynamic_rotate %215 by %c255_i32_85 dim 1 : vector<24x256xf32>, i32 -> vector<24x256xf32>
    %cst_86 = arith.constant 0.000000e+00 : f32
    %222 = vector.shape_cast %20 : vector<1x256xi1> to vector<1x256xi1>
    %223 = vector.broadcast %222 : vector<1x256xi1> to vector<24x256xi1>
    %224 = vector.broadcast %cst_86 : f32 to vector<24x256xf32>
    %225 = arith.select %223, %224, %221 : vector<24x256xi1>, vector<24x256xf32>
    %226 = arith.truncf %220 : vector<24x256xf32> to vector<24x256xbf16>
    %227 = arith.truncf %215 : vector<24x256xf32> to vector<24x256xbf16>
    %228 = arith.truncf %225 : vector<24x256xf32> to vector<24x256xbf16>
    %c336 = arith.constant 336 : index
    %c0_87 = arith.constant 0 : index
    %229 = vector.load %arg1[%c336, %c0_87] : memref<960x128xbf16, #tpu.memory_space<vmem>>, vector<24x24xbf16>
    %cst_88 = arith.constant dense<0.000000e+00> : vector<24x256xf32>
    %230 = tpu.matmul %229, %226, %cst_88 {dimension_numbers = #tpu.dot_dimension_numbers<[1], [0], [0], [1], [0, 0, 1, 1], [], []>} : vector<24x24xbf16>, vector<24x256xbf16>, vector<24x256xf32> -> vector<24x256xf32>
    %c368 = arith.constant 368 : index
    %c0_89 = arith.constant 0 : index
    %231 = vector.load %arg1[%c368, %c0_89] : memref<960x128xbf16, #tpu.memory_space<vmem>>, vector<24x24xbf16>
    %cst_90 = arith.constant dense<0.000000e+00> : vector<24x256xf32>
    %232 = tpu.matmul %231, %227, %cst_90 {dimension_numbers = #tpu.dot_dimension_numbers<[1], [0], [0], [1], [0, 0, 1, 1], [], []>} : vector<24x24xbf16>, vector<24x256xbf16>, vector<24x256xf32> -> vector<24x256xf32>
    %233 = arith.addf %230, %232 : vector<24x256xf32>
    %c400 = arith.constant 400 : index
    %c0_91 = arith.constant 0 : index
    %234 = vector.load %arg1[%c400, %c0_91] : memref<960x128xbf16, #tpu.memory_space<vmem>>, vector<24x24xbf16>
    %cst_92 = arith.constant dense<0.000000e+00> : vector<24x256xf32>
    %235 = tpu.matmul %234, %228, %cst_92 {dimension_numbers = #tpu.dot_dimension_numbers<[1], [0], [0], [1], [0, 0, 1, 1], [], []>} : vector<24x24xbf16>, vector<24x256xbf16>, vector<24x256xf32> -> vector<24x256xf32>
    %236 = arith.addf %233, %235 : vector<24x256xf32>
    %c1_i32_93 = arith.constant 1 : i32
    %237 = tpu.dynamic_rotate %168 by %c1_i32_93 dim 1 : vector<24x256xf32>, i32 -> vector<24x256xf32>
    %cst_94 = arith.constant 0.000000e+00 : f32
    %238 = vector.shape_cast %18 : vector<1x256xi1> to vector<1x256xi1>
    %239 = vector.broadcast %238 : vector<1x256xi1> to vector<24x256xi1>
    %240 = vector.broadcast %cst_94 : f32 to vector<24x256xf32>
    %241 = arith.select %239, %240, %237 : vector<24x256xi1>, vector<24x256xf32>
    %c255_i32_95 = arith.constant 255 : i32
    %242 = tpu.dynamic_rotate %168 by %c255_i32_95 dim 1 : vector<24x256xf32>, i32 -> vector<24x256xf32>
    %cst_96 = arith.constant 0.000000e+00 : f32
    %243 = vector.shape_cast %20 : vector<1x256xi1> to vector<1x256xi1>
    %244 = vector.broadcast %243 : vector<1x256xi1> to vector<24x256xi1>
    %245 = vector.broadcast %cst_96 : f32 to vector<24x256xf32>
    %246 = arith.select %244, %245, %242 : vector<24x256xi1>, vector<24x256xf32>
    %247 = arith.truncf %241 : vector<24x256xf32> to vector<24x256xbf16>
    %248 = arith.truncf %168 : vector<24x256xf32> to vector<24x256xbf16>
    %249 = arith.truncf %246 : vector<24x256xf32> to vector<24x256xbf16>
    %c432 = arith.constant 432 : index
    %c0_97 = arith.constant 0 : index
    %250 = vector.load %arg1[%c432, %c0_97] : memref<960x128xbf16, #tpu.memory_space<vmem>>, vector<24x24xbf16>
    %cst_98 = arith.constant dense<0.000000e+00> : vector<24x256xf32>
    %251 = tpu.matmul %250, %247, %cst_98 {dimension_numbers = #tpu.dot_dimension_numbers<[1], [0], [0], [1], [0, 0, 1, 1], [], []>} : vector<24x24xbf16>, vector<24x256xbf16>, vector<24x256xf32> -> vector<24x256xf32>
    %252 = arith.addf %236, %251 : vector<24x256xf32>
    %c464 = arith.constant 464 : index
    %c0_99 = arith.constant 0 : index
    %253 = vector.load %arg1[%c464, %c0_99] : memref<960x128xbf16, #tpu.memory_space<vmem>>, vector<24x24xbf16>
    %cst_100 = arith.constant dense<0.000000e+00> : vector<24x256xf32>
    %254 = tpu.matmul %253, %248, %cst_100 {dimension_numbers = #tpu.dot_dimension_numbers<[1], [0], [0], [1], [0, 0, 1, 1], [], []>} : vector<24x24xbf16>, vector<24x256xbf16>, vector<24x256xf32> -> vector<24x256xf32>
    %255 = arith.addf %252, %254 : vector<24x256xf32>
    %c496 = arith.constant 496 : index
    %c0_101 = arith.constant 0 : index
    %256 = vector.load %arg1[%c496, %c0_101] : memref<960x128xbf16, #tpu.memory_space<vmem>>, vector<24x24xbf16>
    %cst_102 = arith.constant dense<0.000000e+00> : vector<24x256xf32>
    %257 = tpu.matmul %256, %249, %cst_102 {dimension_numbers = #tpu.dot_dimension_numbers<[1], [0], [0], [1], [0, 0, 1, 1], [], []>} : vector<24x24xbf16>, vector<24x256xbf16>, vector<24x256xf32> -> vector<24x256xf32>
    %258 = arith.addf %255, %257 : vector<24x256xf32>
    %cst_103 = arith.constant dense<0.000000e+00> : vector<24xf32>
    %259 = vector.multi_reduction <add>, %258, %cst_103 [1] : vector<24x256xf32> to vector<24xf32>
    %260 = vector.shape_cast %259 : vector<24xf32> to vector<24x1xf32>
    %cst_104 = arith.constant 2.560000e+02 : f32
    %261 = vector.broadcast %cst_104 : f32 to vector<24x1xf32>
    %262 = arith.divf %260, %261 : vector<24x1xf32>
    %263 = arith.mulf %258, %258 : vector<24x256xf32>
    %cst_105 = arith.constant dense<0.000000e+00> : vector<24xf32>
    %264 = vector.multi_reduction <add>, %263, %cst_105 [1] : vector<24x256xf32> to vector<24xf32>
    %265 = vector.shape_cast %264 : vector<24xf32> to vector<24x1xf32>
    %cst_106 = arith.constant 2.560000e+02 : f32
    %266 = vector.broadcast %cst_106 : f32 to vector<24x1xf32>
    %267 = arith.divf %265, %266 : vector<24x1xf32>
    %268 = arith.mulf %262, %262 : vector<24x1xf32>
    %269 = arith.subf %267, %268 : vector<24x1xf32>
    %cst_107 = arith.constant 0.000000e+00 : f32
    %270 = vector.broadcast %cst_107 : f32 to vector<24x1xf32>
    %271 = arith.maximumf %269, %270 : vector<24x1xf32>
    %c176_108 = arith.constant 176 : index
    %c0_109 = arith.constant 0 : index
    %272 = vector.load %arg2[%c176_108, %c0_109] : memref<328x1xf32, #tpu.memory_space<vmem>>, vector<24x1xf32>
    %cst_110 = arith.constant 9.99999974E-6 : f32
    %273 = vector.broadcast %cst_110 : f32 to vector<24x1xf32>
    %274 = arith.addf %271, %273 : vector<24x1xf32>
    %275 = math.rsqrt %274 : vector<24x1xf32>
    %276 = arith.mulf %272, %275 : vector<24x1xf32>
    %c200 = arith.constant 200 : index
    %c0_111 = arith.constant 0 : index
    %277 = vector.load %arg2[%c200, %c0_111] : memref<328x1xf32, #tpu.memory_space<vmem>>, vector<24x1xf32>
    %278 = arith.mulf %262, %276 : vector<24x1xf32>
    %279 = arith.subf %277, %278 : vector<24x1xf32>
    %280 = vector.broadcast %276 : vector<24x1xf32> to vector<24x256xf32>
    %281 = arith.mulf %258, %280 : vector<24x256xf32>
    %282 = vector.broadcast %279 : vector<24x1xf32> to vector<24x256xf32>
    %283 = arith.addf %281, %282 : vector<24x256xf32>
    %cst_112 = arith.constant 1.000000e-01 : f32
    %284 = vector.broadcast %cst_112 : f32 to vector<24x256xf32>
    %285 = arith.mulf %284, %283 : vector<24x256xf32>
    %286 = arith.maximumf %283, %285 : vector<24x256xf32>
    %c1_i32_113 = arith.constant 1 : i32
    %287 = tpu.dynamic_rotate %286 by %c1_i32_113 dim 1 : vector<24x256xf32>, i32 -> vector<24x256xf32>
    %cst_114 = arith.constant 0.000000e+00 : f32
    %288 = vector.shape_cast %18 : vector<1x256xi1> to vector<1x256xi1>
    %289 = vector.broadcast %288 : vector<1x256xi1> to vector<24x256xi1>
    %290 = vector.broadcast %cst_114 : f32 to vector<24x256xf32>
    %291 = arith.select %289, %290, %287 : vector<24x256xi1>, vector<24x256xf32>
    %c255_i32_115 = arith.constant 255 : i32
    %292 = tpu.dynamic_rotate %286 by %c255_i32_115 dim 1 : vector<24x256xf32>, i32 -> vector<24x256xf32>
    %cst_116 = arith.constant 0.000000e+00 : f32
    %293 = vector.shape_cast %20 : vector<1x256xi1> to vector<1x256xi1>
    %294 = vector.broadcast %293 : vector<1x256xi1> to vector<24x256xi1>
    %295 = vector.broadcast %cst_116 : f32 to vector<24x256xf32>
    %296 = arith.select %294, %295, %292 : vector<24x256xi1>, vector<24x256xf32>
    %297 = arith.truncf %291 : vector<24x256xf32> to vector<24x256xbf16>
    %298 = arith.truncf %286 : vector<24x256xf32> to vector<24x256xbf16>
    %299 = arith.truncf %296 : vector<24x256xf32> to vector<24x256xbf16>
    %c528 = arith.constant 528 : index
    %c0_117 = arith.constant 0 : index
    %300 = vector.load %arg1[%c528, %c0_117] : memref<960x128xbf16, #tpu.memory_space<vmem>>, vector<20x24xbf16>
    %cst_118 = arith.constant dense<0.000000e+00> : vector<20x256xf32>
    %301 = tpu.matmul %300, %297, %cst_118 {dimension_numbers = #tpu.dot_dimension_numbers<[1], [0], [0], [1], [0, 0, 1, 1], [], []>} : vector<20x24xbf16>, vector<24x256xbf16>, vector<20x256xf32> -> vector<20x256xf32>
    %c560 = arith.constant 560 : index
    %c0_119 = arith.constant 0 : index
    %302 = vector.load %arg1[%c560, %c0_119] : memref<960x128xbf16, #tpu.memory_space<vmem>>, vector<20x24xbf16>
    %cst_120 = arith.constant dense<0.000000e+00> : vector<20x256xf32>
    %303 = tpu.matmul %302, %298, %cst_120 {dimension_numbers = #tpu.dot_dimension_numbers<[1], [0], [0], [1], [0, 0, 1, 1], [], []>} : vector<20x24xbf16>, vector<24x256xbf16>, vector<20x256xf32> -> vector<20x256xf32>
    %304 = arith.addf %301, %303 : vector<20x256xf32>
    %c592 = arith.constant 592 : index
    %c0_121 = arith.constant 0 : index
    %305 = vector.load %arg1[%c592, %c0_121] : memref<960x128xbf16, #tpu.memory_space<vmem>>, vector<20x24xbf16>
    %cst_122 = arith.constant dense<0.000000e+00> : vector<20x256xf32>
    %306 = tpu.matmul %305, %299, %cst_122 {dimension_numbers = #tpu.dot_dimension_numbers<[1], [0], [0], [1], [0, 0, 1, 1], [], []>} : vector<20x24xbf16>, vector<24x256xbf16>, vector<20x256xf32> -> vector<20x256xf32>
    %307 = arith.addf %304, %306 : vector<20x256xf32>
    %c1_i32_123 = arith.constant 1 : i32
    %308 = tpu.dynamic_rotate %119 by %c1_i32_123 dim 1 : vector<20x256xf32>, i32 -> vector<20x256xf32>
    %cst_124 = arith.constant 0.000000e+00 : f32
    %309 = vector.shape_cast %18 : vector<1x256xi1> to vector<1x256xi1>
    %310 = vector.broadcast %309 : vector<1x256xi1> to vector<20x256xi1>
    %311 = vector.broadcast %cst_124 : f32 to vector<20x256xf32>
    %312 = arith.select %310, %311, %308 : vector<20x256xi1>, vector<20x256xf32>
    %c255_i32_125 = arith.constant 255 : i32
    %313 = tpu.dynamic_rotate %119 by %c255_i32_125 dim 1 : vector<20x256xf32>, i32 -> vector<20x256xf32>
    %cst_126 = arith.constant 0.000000e+00 : f32
    %314 = vector.shape_cast %20 : vector<1x256xi1> to vector<1x256xi1>
    %315 = vector.broadcast %314 : vector<1x256xi1> to vector<20x256xi1>
    %316 = vector.broadcast %cst_126 : f32 to vector<20x256xf32>
    %317 = arith.select %315, %316, %313 : vector<20x256xi1>, vector<20x256xf32>
    %318 = arith.truncf %312 : vector<20x256xf32> to vector<20x256xbf16>
    %319 = arith.truncf %119 : vector<20x256xf32> to vector<20x256xbf16>
    %320 = arith.truncf %317 : vector<20x256xf32> to vector<20x256xbf16>
    %c624 = arith.constant 624 : index
    %c0_127 = arith.constant 0 : index
    %321 = vector.load %arg1[%c624, %c0_127] : memref<960x128xbf16, #tpu.memory_space<vmem>>, vector<20x20xbf16>
    %cst_128 = arith.constant dense<0.000000e+00> : vector<20x256xf32>
    %322 = tpu.matmul %321, %318, %cst_128 {dimension_numbers = #tpu.dot_dimension_numbers<[1], [0], [0], [1], [0, 0, 1, 1], [], []>} : vector<20x20xbf16>, vector<20x256xbf16>, vector<20x256xf32> -> vector<20x256xf32>
    %323 = arith.addf %307, %322 : vector<20x256xf32>
    %c656 = arith.constant 656 : index
    %c0_129 = arith.constant 0 : index
    %324 = vector.load %arg1[%c656, %c0_129] : memref<960x128xbf16, #tpu.memory_space<vmem>>, vector<20x20xbf16>
    %cst_130 = arith.constant dense<0.000000e+00> : vector<20x256xf32>
    %325 = tpu.matmul %324, %319, %cst_130 {dimension_numbers = #tpu.dot_dimension_numbers<[1], [0], [0], [1], [0, 0, 1, 1], [], []>} : vector<20x20xbf16>, vector<20x256xbf16>, vector<20x256xf32> -> vector<20x256xf32>
    %326 = arith.addf %323, %325 : vector<20x256xf32>
    %c688 = arith.constant 688 : index
    %c0_131 = arith.constant 0 : index
    %327 = vector.load %arg1[%c688, %c0_131] : memref<960x128xbf16, #tpu.memory_space<vmem>>, vector<20x20xbf16>
    %cst_132 = arith.constant dense<0.000000e+00> : vector<20x256xf32>
    %328 = tpu.matmul %327, %320, %cst_132 {dimension_numbers = #tpu.dot_dimension_numbers<[1], [0], [0], [1], [0, 0, 1, 1], [], []>} : vector<20x20xbf16>, vector<20x256xbf16>, vector<20x256xf32> -> vector<20x256xf32>
    %329 = arith.addf %326, %328 : vector<20x256xf32>
    %cst_133 = arith.constant dense<0.000000e+00> : vector<20xf32>
    %330 = vector.multi_reduction <add>, %329, %cst_133 [1] : vector<20x256xf32> to vector<20xf32>
    %331 = vector.shape_cast %330 : vector<20xf32> to vector<20x1xf32>
    %cst_134 = arith.constant 2.560000e+02 : f32
    %332 = vector.broadcast %cst_134 : f32 to vector<20x1xf32>
    %333 = arith.divf %331, %332 : vector<20x1xf32>
    %334 = arith.mulf %329, %329 : vector<20x256xf32>
    %cst_135 = arith.constant dense<0.000000e+00> : vector<20xf32>
    %335 = vector.multi_reduction <add>, %334, %cst_135 [1] : vector<20x256xf32> to vector<20xf32>
    %336 = vector.shape_cast %335 : vector<20xf32> to vector<20x1xf32>
    %cst_136 = arith.constant 2.560000e+02 : f32
    %337 = vector.broadcast %cst_136 : f32 to vector<20x1xf32>
    %338 = arith.divf %336, %337 : vector<20x1xf32>
    %339 = arith.mulf %333, %333 : vector<20x1xf32>
    %340 = arith.subf %338, %339 : vector<20x1xf32>
    %cst_137 = arith.constant 0.000000e+00 : f32
    %341 = vector.broadcast %cst_137 : f32 to vector<20x1xf32>
    %342 = arith.maximumf %340, %341 : vector<20x1xf32>
    %c224 = arith.constant 224 : index
    %c0_138 = arith.constant 0 : index
    %343 = vector.load %arg2[%c224, %c0_138] : memref<328x1xf32, #tpu.memory_space<vmem>>, vector<20x1xf32>
    %cst_139 = arith.constant 9.99999974E-6 : f32
    %344 = vector.broadcast %cst_139 : f32 to vector<20x1xf32>
    %345 = arith.addf %342, %344 : vector<20x1xf32>
    %346 = math.rsqrt %345 : vector<20x1xf32>
    %347 = arith.mulf %343, %346 : vector<20x1xf32>
    %c248 = arith.constant 248 : index
    %c0_140 = arith.constant 0 : index
    %348 = vector.load %arg2[%c248, %c0_140] : memref<328x1xf32, #tpu.memory_space<vmem>>, vector<20x1xf32>
    %349 = arith.mulf %333, %347 : vector<20x1xf32>
    %350 = arith.subf %348, %349 : vector<20x1xf32>
    %351 = vector.broadcast %347 : vector<20x1xf32> to vector<20x256xf32>
    %352 = arith.mulf %329, %351 : vector<20x256xf32>
    %353 = vector.broadcast %350 : vector<20x1xf32> to vector<20x256xf32>
    %354 = arith.addf %352, %353 : vector<20x256xf32>
    %cst_141 = arith.constant 1.000000e-01 : f32
    %355 = vector.broadcast %cst_141 : f32 to vector<20x256xf32>
    %356 = arith.mulf %355, %354 : vector<20x256xf32>
    %357 = arith.maximumf %354, %356 : vector<20x256xf32>
    %c1_i32_142 = arith.constant 1 : i32
    %358 = tpu.dynamic_rotate %357 by %c1_i32_142 dim 1 : vector<20x256xf32>, i32 -> vector<20x256xf32>
    %cst_143 = arith.constant 0.000000e+00 : f32
    %359 = vector.shape_cast %18 : vector<1x256xi1> to vector<1x256xi1>
    %360 = vector.broadcast %359 : vector<1x256xi1> to vector<20x256xi1>
    %361 = vector.broadcast %cst_143 : f32 to vector<20x256xf32>
    %362 = arith.select %360, %361, %358 : vector<20x256xi1>, vector<20x256xf32>
    %c255_i32_144 = arith.constant 255 : i32
    %363 = tpu.dynamic_rotate %357 by %c255_i32_144 dim 1 : vector<20x256xf32>, i32 -> vector<20x256xf32>
    %cst_145 = arith.constant 0.000000e+00 : f32
    %364 = vector.shape_cast %20 : vector<1x256xi1> to vector<1x256xi1>
    %365 = vector.broadcast %364 : vector<1x256xi1> to vector<20x256xi1>
    %366 = vector.broadcast %cst_145 : f32 to vector<20x256xf32>
    %367 = arith.select %365, %366, %363 : vector<20x256xi1>, vector<20x256xf32>
    %368 = arith.truncf %362 : vector<20x256xf32> to vector<20x256xbf16>
    %369 = arith.truncf %357 : vector<20x256xf32> to vector<20x256xbf16>
    %370 = arith.truncf %367 : vector<20x256xf32> to vector<20x256xbf16>
    %c720 = arith.constant 720 : index
    %c0_146 = arith.constant 0 : index
    %371 = vector.load %arg1[%c720, %c0_146] : memref<960x128xbf16, #tpu.memory_space<vmem>>, vector<16x20xbf16>
    %cst_147 = arith.constant dense<0.000000e+00> : vector<16x256xf32>
    %372 = tpu.matmul %371, %368, %cst_147 {dimension_numbers = #tpu.dot_dimension_numbers<[1], [0], [0], [1], [0, 0, 1, 1], [], []>} : vector<16x20xbf16>, vector<20x256xbf16>, vector<16x256xf32> -> vector<16x256xf32>
    %c736 = arith.constant 736 : index
    %c0_148 = arith.constant 0 : index
    %373 = vector.load %arg1[%c736, %c0_148] : memref<960x128xbf16, #tpu.memory_space<vmem>>, vector<16x20xbf16>
    %cst_149 = arith.constant dense<0.000000e+00> : vector<16x256xf32>
    %374 = tpu.matmul %373, %369, %cst_149 {dimension_numbers = #tpu.dot_dimension_numbers<[1], [0], [0], [1], [0, 0, 1, 1], [], []>} : vector<16x20xbf16>, vector<20x256xbf16>, vector<16x256xf32> -> vector<16x256xf32>
    %375 = arith.addf %372, %374 : vector<16x256xf32>
    %c752 = arith.constant 752 : index
    %c0_150 = arith.constant 0 : index
    %376 = vector.load %arg1[%c752, %c0_150] : memref<960x128xbf16, #tpu.memory_space<vmem>>, vector<16x20xbf16>
    %cst_151 = arith.constant dense<0.000000e+00> : vector<16x256xf32>
    %377 = tpu.matmul %376, %370, %cst_151 {dimension_numbers = #tpu.dot_dimension_numbers<[1], [0], [0], [1], [0, 0, 1, 1], [], []>} : vector<16x20xbf16>, vector<20x256xbf16>, vector<16x256xf32> -> vector<16x256xf32>
    %378 = arith.addf %375, %377 : vector<16x256xf32>
    %c1_i32_152 = arith.constant 1 : i32
    %379 = tpu.dynamic_rotate %70 by %c1_i32_152 dim 1 : vector<16x256xf32>, i32 -> vector<16x256xf32>
    %cst_153 = arith.constant 0.000000e+00 : f32
    %380 = vector.shape_cast %18 : vector<1x256xi1> to vector<1x256xi1>
    %381 = vector.broadcast %380 : vector<1x256xi1> to vector<16x256xi1>
    %382 = vector.broadcast %cst_153 : f32 to vector<16x256xf32>
    %383 = arith.select %381, %382, %379 : vector<16x256xi1>, vector<16x256xf32>
    %c255_i32_154 = arith.constant 255 : i32
    %384 = tpu.dynamic_rotate %70 by %c255_i32_154 dim 1 : vector<16x256xf32>, i32 -> vector<16x256xf32>
    %cst_155 = arith.constant 0.000000e+00 : f32
    %385 = vector.shape_cast %20 : vector<1x256xi1> to vector<1x256xi1>
    %386 = vector.broadcast %385 : vector<1x256xi1> to vector<16x256xi1>
    %387 = vector.broadcast %cst_155 : f32 to vector<16x256xf32>
    %388 = arith.select %386, %387, %384 : vector<16x256xi1>, vector<16x256xf32>
    %389 = arith.truncf %383 : vector<16x256xf32> to vector<16x256xbf16>
    %390 = arith.truncf %70 : vector<16x256xf32> to vector<16x256xbf16>
    %391 = arith.truncf %388 : vector<16x256xf32> to vector<16x256xbf16>
    %c768 = arith.constant 768 : index
    %c0_156 = arith.constant 0 : index
    %392 = vector.load %arg1[%c768, %c0_156] : memref<960x128xbf16, #tpu.memory_space<vmem>>, vector<16x16xbf16>
    %cst_157 = arith.constant dense<0.000000e+00> : vector<16x256xf32>
    %393 = tpu.matmul %392, %389, %cst_157 {dimension_numbers = #tpu.dot_dimension_numbers<[1], [0], [0], [1], [0, 0, 1, 1], [], []>} : vector<16x16xbf16>, vector<16x256xbf16>, vector<16x256xf32> -> vector<16x256xf32>
    %394 = arith.addf %378, %393 : vector<16x256xf32>
    %c784 = arith.constant 784 : index
    %c0_158 = arith.constant 0 : index
    %395 = vector.load %arg1[%c784, %c0_158] : memref<960x128xbf16, #tpu.memory_space<vmem>>, vector<16x16xbf16>
    %cst_159 = arith.constant dense<0.000000e+00> : vector<16x256xf32>
    %396 = tpu.matmul %395, %390, %cst_159 {dimension_numbers = #tpu.dot_dimension_numbers<[1], [0], [0], [1], [0, 0, 1, 1], [], []>} : vector<16x16xbf16>, vector<16x256xbf16>, vector<16x256xf32> -> vector<16x256xf32>
    %397 = arith.addf %394, %396 : vector<16x256xf32>
    %c800 = arith.constant 800 : index
    %c0_160 = arith.constant 0 : index
    %398 = vector.load %arg1[%c800, %c0_160] : memref<960x128xbf16, #tpu.memory_space<vmem>>, vector<16x16xbf16>
    %cst_161 = arith.constant dense<0.000000e+00> : vector<16x256xf32>
    %399 = tpu.matmul %398, %391, %cst_161 {dimension_numbers = #tpu.dot_dimension_numbers<[1], [0], [0], [1], [0, 0, 1, 1], [], []>} : vector<16x16xbf16>, vector<16x256xbf16>, vector<16x256xf32> -> vector<16x256xf32>
    %400 = arith.addf %397, %399 : vector<16x256xf32>
    %cst_162 = arith.constant dense<0.000000e+00> : vector<16xf32>
    %401 = vector.multi_reduction <add>, %400, %cst_162 [1] : vector<16x256xf32> to vector<16xf32>
    %402 = vector.shape_cast %401 : vector<16xf32> to vector<16x1xf32>
    %cst_163 = arith.constant 2.560000e+02 : f32
    %403 = vector.broadcast %cst_163 : f32 to vector<16x1xf32>
    %404 = arith.divf %402, %403 : vector<16x1xf32>
    %405 = arith.mulf %400, %400 : vector<16x256xf32>
    %cst_164 = arith.constant dense<0.000000e+00> : vector<16xf32>
    %406 = vector.multi_reduction <add>, %405, %cst_164 [1] : vector<16x256xf32> to vector<16xf32>
    %407 = vector.shape_cast %406 : vector<16xf32> to vector<16x1xf32>
    %cst_165 = arith.constant 2.560000e+02 : f32
    %408 = vector.broadcast %cst_165 : f32 to vector<16x1xf32>
    %409 = arith.divf %407, %408 : vector<16x1xf32>
    %410 = arith.mulf %404, %404 : vector<16x1xf32>
    %411 = arith.subf %409, %410 : vector<16x1xf32>
    %cst_166 = arith.constant 0.000000e+00 : f32
    %412 = vector.broadcast %cst_166 : f32 to vector<16x1xf32>
    %413 = arith.maximumf %411, %412 : vector<16x1xf32>
    %c272_167 = arith.constant 272 : index
    %c0_168 = arith.constant 0 : index
    %414 = vector.load %arg2[%c272_167, %c0_168] : memref<328x1xf32, #tpu.memory_space<vmem>>, vector<16x1xf32>
    %cst_169 = arith.constant 9.99999974E-6 : f32
    %415 = vector.broadcast %cst_169 : f32 to vector<16x1xf32>
    %416 = arith.addf %413, %415 : vector<16x1xf32>
    %417 = math.rsqrt %416 : vector<16x1xf32>
    %418 = arith.mulf %414, %417 : vector<16x1xf32>
    %c288 = arith.constant 288 : index
    %c0_170 = arith.constant 0 : index
    %419 = vector.load %arg2[%c288, %c0_170] : memref<328x1xf32, #tpu.memory_space<vmem>>, vector<16x1xf32>
    %420 = arith.mulf %404, %418 : vector<16x1xf32>
    %421 = arith.subf %419, %420 : vector<16x1xf32>
    %422 = vector.broadcast %418 : vector<16x1xf32> to vector<16x256xf32>
    %423 = arith.mulf %400, %422 : vector<16x256xf32>
    %424 = vector.broadcast %421 : vector<16x1xf32> to vector<16x256xf32>
    %425 = arith.addf %423, %424 : vector<16x256xf32>
    %cst_171 = arith.constant 1.000000e-01 : f32
    %426 = vector.broadcast %cst_171 : f32 to vector<16x256xf32>
    %427 = arith.mulf %426, %425 : vector<16x256xf32>
    %428 = arith.maximumf %425, %427 : vector<16x256xf32>
    %c1_i32_172 = arith.constant 1 : i32
    %429 = tpu.dynamic_rotate %428 by %c1_i32_172 dim 1 : vector<16x256xf32>, i32 -> vector<16x256xf32>
    %cst_173 = arith.constant 0.000000e+00 : f32
    %430 = vector.shape_cast %18 : vector<1x256xi1> to vector<1x256xi1>
    %431 = vector.broadcast %430 : vector<1x256xi1> to vector<16x256xi1>
    %432 = vector.broadcast %cst_173 : f32 to vector<16x256xf32>
    %433 = arith.select %431, %432, %429 : vector<16x256xi1>, vector<16x256xf32>
    %c255_i32_174 = arith.constant 255 : i32
    %434 = tpu.dynamic_rotate %428 by %c255_i32_174 dim 1 : vector<16x256xf32>, i32 -> vector<16x256xf32>
    %cst_175 = arith.constant 0.000000e+00 : f32
    %435 = vector.shape_cast %20 : vector<1x256xi1> to vector<1x256xi1>
    %436 = vector.broadcast %435 : vector<1x256xi1> to vector<16x256xi1>
    %437 = vector.broadcast %cst_175 : f32 to vector<16x256xf32>
    %438 = arith.select %436, %437, %434 : vector<16x256xi1>, vector<16x256xf32>
    %439 = arith.truncf %433 : vector<16x256xf32> to vector<16x256xbf16>
    %440 = arith.truncf %428 : vector<16x256xf32> to vector<16x256xbf16>
    %441 = arith.truncf %438 : vector<16x256xf32> to vector<16x256xbf16>
    %c816 = arith.constant 816 : index
    %c0_176 = arith.constant 0 : index
    %442 = vector.load %arg1[%c816, %c0_176] : memref<960x128xbf16, #tpu.memory_space<vmem>>, vector<16x16xbf16>
    %cst_177 = arith.constant dense<0.000000e+00> : vector<16x256xf32>
    %443 = tpu.matmul %442, %439, %cst_177 {dimension_numbers = #tpu.dot_dimension_numbers<[1], [0], [0], [1], [0, 0, 1, 1], [], []>} : vector<16x16xbf16>, vector<16x256xbf16>, vector<16x256xf32> -> vector<16x256xf32>
    %c832 = arith.constant 832 : index
    %c0_178 = arith.constant 0 : index
    %444 = vector.load %arg1[%c832, %c0_178] : memref<960x128xbf16, #tpu.memory_space<vmem>>, vector<16x16xbf16>
    %cst_179 = arith.constant dense<0.000000e+00> : vector<16x256xf32>
    %445 = tpu.matmul %444, %440, %cst_179 {dimension_numbers = #tpu.dot_dimension_numbers<[1], [0], [0], [1], [0, 0, 1, 1], [], []>} : vector<16x16xbf16>, vector<16x256xbf16>, vector<16x256xf32> -> vector<16x256xf32>
    %446 = arith.addf %443, %445 : vector<16x256xf32>
    %c848 = arith.constant 848 : index
    %c0_180 = arith.constant 0 : index
    %447 = vector.load %arg1[%c848, %c0_180] : memref<960x128xbf16, #tpu.memory_space<vmem>>, vector<16x16xbf16>
    %cst_181 = arith.constant dense<0.000000e+00> : vector<16x256xf32>
    %448 = tpu.matmul %447, %441, %cst_181 {dimension_numbers = #tpu.dot_dimension_numbers<[1], [0], [0], [1], [0, 0, 1, 1], [], []>} : vector<16x16xbf16>, vector<16x256xbf16>, vector<16x256xf32> -> vector<16x256xf32>
    %449 = arith.addf %446, %448 : vector<16x256xf32>
    %c304_182 = arith.constant 304 : index
    %c0_183 = arith.constant 0 : index
    %450 = vector.load %arg2[%c304_182, %c0_183] : memref<328x1xf32, #tpu.memory_space<vmem>>, vector<16x1xf32>
    %451 = vector.broadcast %450 : vector<16x1xf32> to vector<16x256xf32>
    %452 = arith.addf %449, %451 : vector<16x256xf32>
    %cst_184 = arith.constant 1.000000e-01 : f32
    %453 = vector.broadcast %cst_184 : f32 to vector<16x256xf32>
    %454 = arith.mulf %453, %452 : vector<16x256xf32>
    %455 = arith.maximumf %452, %454 : vector<16x256xf32>
    %c1_i32_185 = arith.constant 1 : i32
    %456 = tpu.dynamic_rotate %455 by %c1_i32_185 dim 1 : vector<16x256xf32>, i32 -> vector<16x256xf32>
    %cst_186 = arith.constant 0.000000e+00 : f32
    %457 = vector.shape_cast %18 : vector<1x256xi1> to vector<1x256xi1>
    %458 = vector.broadcast %457 : vector<1x256xi1> to vector<16x256xi1>
    %459 = vector.broadcast %cst_186 : f32 to vector<16x256xf32>
    %460 = arith.select %458, %459, %456 : vector<16x256xi1>, vector<16x256xf32>
    %c255_i32_187 = arith.constant 255 : i32
    %461 = tpu.dynamic_rotate %455 by %c255_i32_187 dim 1 : vector<16x256xf32>, i32 -> vector<16x256xf32>
    %cst_188 = arith.constant 0.000000e+00 : f32
    %462 = vector.shape_cast %20 : vector<1x256xi1> to vector<1x256xi1>
    %463 = vector.broadcast %462 : vector<1x256xi1> to vector<16x256xi1>
    %464 = vector.broadcast %cst_188 : f32 to vector<16x256xf32>
    %465 = arith.select %463, %464, %461 : vector<16x256xi1>, vector<16x256xf32>
    %466 = arith.truncf %460 : vector<16x256xf32> to vector<16x256xbf16>
    %467 = arith.truncf %455 : vector<16x256xf32> to vector<16x256xbf16>
    %468 = arith.truncf %465 : vector<16x256xf32> to vector<16x256xbf16>
    %c864 = arith.constant 864 : index
    %c0_189 = arith.constant 0 : index
    %469 = vector.load %arg1[%c864, %c0_189] : memref<960x128xbf16, #tpu.memory_space<vmem>>, vector<1x16xbf16>
    %cst_190 = arith.constant dense<0.000000e+00> : vector<1x256xf32>
    %470 = tpu.matmul %469, %466, %cst_190 {dimension_numbers = #tpu.dot_dimension_numbers<[1], [0], [0], [1], [0, 0, 1, 1], [], []>} : vector<1x16xbf16>, vector<16x256xbf16>, vector<1x256xf32> -> vector<1x256xf32>
    %c880 = arith.constant 880 : index
    %c0_191 = arith.constant 0 : index
    %471 = vector.load %arg1[%c880, %c0_191] : memref<960x128xbf16, #tpu.memory_space<vmem>>, vector<1x16xbf16>
    %cst_192 = arith.constant dense<0.000000e+00> : vector<1x256xf32>
    %472 = tpu.matmul %471, %467, %cst_192 {dimension_numbers = #tpu.dot_dimension_numbers<[1], [0], [0], [1], [0, 0, 1, 1], [], []>} : vector<1x16xbf16>, vector<16x256xbf16>, vector<1x256xf32> -> vector<1x256xf32>
    %473 = arith.addf %470, %472 : vector<1x256xf32>
    %c896 = arith.constant 896 : index
    %c0_193 = arith.constant 0 : index
    %474 = vector.load %arg1[%c896, %c0_193] : memref<960x128xbf16, #tpu.memory_space<vmem>>, vector<1x16xbf16>
    %cst_194 = arith.constant dense<0.000000e+00> : vector<1x256xf32>
    %475 = tpu.matmul %474, %468, %cst_194 {dimension_numbers = #tpu.dot_dimension_numbers<[1], [0], [0], [1], [0, 0, 1, 1], [], []>} : vector<1x16xbf16>, vector<16x256xbf16>, vector<1x256xf32> -> vector<1x256xf32>
    %476 = arith.addf %473, %475 : vector<1x256xf32>
    %c1_i32_195 = arith.constant 1 : i32
    %477 = tpu.dynamic_rotate %21 by %c1_i32_195 dim 1 : vector<4x256xf32>, i32 -> vector<4x256xf32>
    %cst_196 = arith.constant 0.000000e+00 : f32
    %478 = vector.shape_cast %18 : vector<1x256xi1> to vector<1x256xi1>
    %479 = vector.broadcast %478 : vector<1x256xi1> to vector<4x256xi1>
    %480 = vector.broadcast %cst_196 : f32 to vector<4x256xf32>
    %481 = arith.select %479, %480, %477 : vector<4x256xi1>, vector<4x256xf32>
    %c255_i32_197 = arith.constant 255 : i32
    %482 = tpu.dynamic_rotate %21 by %c255_i32_197 dim 1 : vector<4x256xf32>, i32 -> vector<4x256xf32>
    %cst_198 = arith.constant 0.000000e+00 : f32
    %483 = vector.shape_cast %20 : vector<1x256xi1> to vector<1x256xi1>
    %484 = vector.broadcast %483 : vector<1x256xi1> to vector<4x256xi1>
    %485 = vector.broadcast %cst_198 : f32 to vector<4x256xf32>
    %486 = arith.select %484, %485, %482 : vector<4x256xi1>, vector<4x256xf32>
    %487 = arith.truncf %481 : vector<4x256xf32> to vector<4x256xbf16>
    %488 = arith.truncf %21 : vector<4x256xf32> to vector<4x256xbf16>
    %489 = arith.truncf %486 : vector<4x256xf32> to vector<4x256xbf16>
    %c912 = arith.constant 912 : index
    %c0_199 = arith.constant 0 : index
    %490 = vector.load %arg1[%c912, %c0_199] : memref<960x128xbf16, #tpu.memory_space<vmem>>, vector<1x4xbf16>
    %cst_200 = arith.constant dense<0.000000e+00> : vector<1x256xf32>
    %491 = tpu.matmul %490, %487, %cst_200 {dimension_numbers = #tpu.dot_dimension_numbers<[1], [0], [0], [1], [0, 0, 1, 1], [], []>} : vector<1x4xbf16>, vector<4x256xbf16>, vector<1x256xf32> -> vector<1x256xf32>
    %492 = arith.addf %476, %491 : vector<1x256xf32>
    %c928 = arith.constant 928 : index
    %c0_201 = arith.constant 0 : index
    %493 = vector.load %arg1[%c928, %c0_201] : memref<960x128xbf16, #tpu.memory_space<vmem>>, vector<1x4xbf16>
    %cst_202 = arith.constant dense<0.000000e+00> : vector<1x256xf32>
    %494 = tpu.matmul %493, %488, %cst_202 {dimension_numbers = #tpu.dot_dimension_numbers<[1], [0], [0], [1], [0, 0, 1, 1], [], []>} : vector<1x4xbf16>, vector<4x256xbf16>, vector<1x256xf32> -> vector<1x256xf32>
    %495 = arith.addf %492, %494 : vector<1x256xf32>
    %c944 = arith.constant 944 : index
    %c0_203 = arith.constant 0 : index
    %496 = vector.load %arg1[%c944, %c0_203] : memref<960x128xbf16, #tpu.memory_space<vmem>>, vector<1x4xbf16>
    %cst_204 = arith.constant dense<0.000000e+00> : vector<1x256xf32>
    %497 = tpu.matmul %496, %489, %cst_204 {dimension_numbers = #tpu.dot_dimension_numbers<[1], [0], [0], [1], [0, 0, 1, 1], [], []>} : vector<1x4xbf16>, vector<4x256xbf16>, vector<1x256xf32> -> vector<1x256xf32>
    %498 = arith.addf %495, %497 : vector<1x256xf32>
    %c320 = arith.constant 320 : index
    %c0_205 = arith.constant 0 : index
    %499 = vector.load %arg2[%c320, %c0_205] : memref<328x1xf32, #tpu.memory_space<vmem>>, vector<1x1xf32>
    %500 = vector.broadcast %499 : vector<1x1xf32> to vector<1x256xf32>
    %501 = arith.addf %498, %500 : vector<1x256xf32>
    %cst_206 = arith.constant 1.000000e-01 : f32
    %502 = vector.broadcast %cst_206 : f32 to vector<1x256xf32>
    %503 = arith.mulf %502, %501 : vector<1x256xf32>
    %504 = arith.maximumf %501, %503 : vector<1x256xf32>
    %c0_207 = arith.constant 0 : index
    %c0_208 = arith.constant 0 : index
    %505 = vector.load %arg3[%c0_207, %c0_208] : memref<1x256xf32, #tpu.memory_space<vmem>>, vector<1x256xf32>
    tpu.vector_store %arg3[%c0_207, %c0_208], %504 {strides = array<i32>} : memref<1x256xf32, #tpu.memory_space<vmem>>, vector<1x256xf32>,
    return
  }
}

</mosaic_0001>

<llo_original>
// kernel: unet_forward.1
$region0: #{unet_forward.1}
  #allocation0 [shape = 'u32[]', space=smem, size = 0x4, offset = 0x4, fixed_abs, tag = 'smem constant byte address 0x4 - core index']
  #allocation1 [shape = 'u32[144,128]{1,0:T(1,128)}', space=vmem, size = 0x12000, scoped, tag = 'internal scratch']
  %s0 = inlined_call_operand.vmem [shape: f32[4,256], index: 0, kind: input, shape index: {}]
  %s1 = inlined_call_operand.hbm [shape: bf16[960,128], index: 1, kind: input, shape index: {}]
  %s2 = inlined_call_operand.vmem [shape: f32[328,1], index: 2, kind: input, shape index: {}]
  %s3 = inlined_call_operand.vmem [shape: f32[1,256], index: 3, kind: output, shape index: {}]
  %s4 = sld [smem:[#allocation0]]
  $region26: #{unet_forward.1} parent=0
    _
  %s6 = ssub.s32 1, %s4
  %s7 = scalar_select 0, %s6, %s4
  $region1: #{unet_forward.1} parent=0
    #allocation2 [shape = 'u8[245760]{0}', space=vmem, size = 0x3c000, scoped, tag = 'input window, operand 1, single buffered']
    #allocation3 [shape = 's32[1]{0}', space=sflag, size = 0x4, scoped, tag = 'scoped memory for unet_forward.1']
    %8 = vsyncpa [#allocation3], 0
    // Predicated region
    $region2: #{unet_forward.1} parent=1 // pred_check
      _
    $region3: #{unet_forward.1} parent=1 // pred_check_branch
      %10 = sbr.rel (0) target = $region5
    $region4: #{unet_forward.1} parent=1 // pred_region
      _
    $region5: #{unet_forward.1} parent=1 // pred_fallthru
      _
    // Predicated region
    $region6: #{unet_forward.1} parent=1 // pred_check
      _
    $region7: #{unet_forward.1} parent=1 // pred_check_branch
      %12 = sbr.rel (0) target = $region9
    $region8: #{unet_forward.1} parent=1 // pred_region
      %s14 = ssub.s32 7680, 7680
      %15 = vsyncadd [#allocation3], %s14
      %s16 = sshll.u32 [#allocation2], 4
      %s17 = int_to_ptr.vmem [resolvable:$true] %s16
      %22 = dma.hbm_to_vmem [thread:$0]  %s1, 7680, %s17, [#allocation3], 64, 64, 4
    $region9: #{unet_forward.1} parent=1 // pred_fallthru
      _
    // Predicated region
    $region10: #{unet_forward.1} parent=1 // pred_check
      _
    $region11: #{unet_forward.1} parent=1 // pred_check_branch
      %24 = sbr.rel (0) target = $region13
    $region12: #{unet_forward.1} parent=1 // pred_region
      _
    $region13: #{unet_forward.1} parent=1 // pred_fallthru
      _
    // Predicated region
    $region14: #{unet_forward.1} parent=1 // pred_check
      _
    $region15: #{unet_forward.1} parent=1 // pred_check_branch
      %26 = sbr.rel (0) target = $region17
    $region16: #{unet_forward.1} parent=1 // pred_region
      %27 = dma.done [#allocation3], 7680
    $region17: #{unet_forward.1} parent=1 // pred_fallthru
      _
    %v29 = vlaneseq
    %v30 = vand.u32 %v29, 127
    %v31 = vadd.s32 %v30, 128
    %vm32 = vcmp.lt.s32.totalorder %v30, 0
    %v33 = vsub.s32 0, %v30
    %v34 = vsel %vm32, %v33, %v30
    %v35 = vshrl.u32 %v34, 6
    %v36 = vand.u32 %v34, 63
    %v37 = vsub.s32 0, %v36
    %v38 = vsel %vm32, %v37, %v36
    %vm39 = vcmp.lt.s32.totalorder %v31, 0
    %v40 = vsub.s32 0, %v31
    %v41 = vsel %vm39, %v40, %v31
    %v42 = vshrl.u32 %v41, 6
    %v43 = vand.u32 %v41, 63
    %v44 = vsub.s32 0, %v43
    %v45 = vsel %vm39, %v44, %v43
    %vm46 = vcmp.ne.s32.totalorder %v38, 0
    %vm47 = vcmp.ne.s32.totalorder %v45, 0
    %vm48 = vcmp.lt.s32.totalorder %v38, 0
    %vm49 = vcmp.lt.s32.totalorder %v45, 0
    %vm50 = vmand %vm48, %vm46
    %vm51 = vmand %vm49, %vm47
    %v52 = vadd.s32 %v38, 64
    %v53 = vadd.s32 %v45, 64
    %v54 = vsel %vm50, %v52, %v38
    %v55 = vsel %vm51, %v53, %v45
    %vm56 = vcmp.eq.s32.totalorder %v54, 0
    %vm57 = vcmp.eq.s32.totalorder %v55, 0
    %vm58 = vcmp.eq.s32.totalorder %v54, 63
    %vm59 = vcmp.eq.s32.totalorder %v55, 63
    %v60 = vld [vmem:[%s0] sm:$0xff]
    %v62 = vcombine.high %v60, %v60
    %64 = vrot.lane.b32.xlu0 %v60, 1
    %v65 = vpop.permute.xlu0 %64
    %66 = vrot.lane.b32.xlu0 %v62, 1
    %v67 = vpop.permute.xlu0 %66
    %vm68 = vcmp.lt.s32.totalorder %v30, 1
    %v69 = vsel %vm68, %v65, %v67
    %v70 = vsel %vm68, %v67, %v65
    %v71 = vsel %vm56, 1, 0
    %v72 = vsel %vm57, 1, 0
    %vm73 = vcmp.eq.s32.totalorder %v71, 1
    %vm74 = vcmp.eq.s32.totalorder %v72, 1
    %v75 = vsel %vm73, 0.0, %v70
    %v76 = vsel %vm74, 0.0, %v69
    %77 = vrot.lane.b32.xlu0 %v60, 127
    %v78 = vpop.permute.xlu0 %77
    %79 = vrot.lane.b32.xlu0 %v62, 127
    %v80 = vpop.permute.xlu0 %79
    %vm81 = vcmp.lt.s32.totalorder %v30, 127
    %v82 = vsel %vm81, %v78, %v80
    %v83 = vsel %vm81, %v80, %v78
    %v84 = vsel %vm58, 1, 0
    %v85 = vsel %vm59, 1, 0
    %vm86 = vcmp.eq.s32.totalorder %v84, 1
    %vm87 = vcmp.eq.s32.totalorder %v85, 1
    %v88 = vsel %vm86, 0.0, %v82
    %v89 = vsel %vm87, 0.0, %v83
    %v90 = vpack.c.bf16 %v75, %v75
    %v91 = vpack.c.bf16 %v76, %v76
    %v92 = vpack.c.bf16 %v60, %v60
    %v93 = vpack.c.bf16 %v62, %v62
    %v94 = vpack.c.bf16 %v88, %v88
    %v95 = vpack.c.bf16 %v89, %v89
    %v96 = vld [vmem:[#allocation2] sm:$0xf]
    %v97 = vld [vmem:[#allocation2 + $0x4] sm:$0xf]
    %v98 = vld [vmem:[#allocation2 + $0x8] sm:$0xf]
    %v99 = vld [vmem:[#allocation2 + $0xc] sm:$0xf]
    %v102 = vunpack.c.l.b16 %v98
    %v103 = vunpack.c.l.b16 %v99
    %v104 = vpack.c.b16 %v103, %v102
    %vm105 = vcmask 31744
    %v107 = vsel %vm105, %v104, 0
    %vm109 = vcmask 1041408
    %v111 = vsel %vm109, %v92, 0
    %v114 = vsel %vm109, %v93, 0
    %116 = vmatprep.subr.bf16.mxu0 %v114
    %117 = vmatpush1.bf16.msra.mxu0 %v111
    %118 = vmatprep.subr.bf16.mxu0 0
    %119 = vmatpush1.bf16.msra.mxu0 0
    %120 = vmatprep.subr.bf16.mxu0 0
    %121 = vmatpush1.bf16.msra.mxu0 0
    %122 = vmatprep.subr.bf16.mxu0 0
    %123 = vmatpush1.bf16.msra.mxu0 0
    %124 = vmatprep.subr.bf16.mxu0 0
    %125 = vmatpush1.bf16.msra.mxu0 0
    %126 = vmatprep.subr.bf16.mxu0 0
    %127 = vmatpush1.bf16.msra.mxu0 0
    %128 = vmatprep.subr.bf16.mxu0 0
    %129 = vmatpush1.bf16.msra.mxu0 0
    %130 = vmatprep.subr.bf16.mxu0 0
    %131 = vmatpush1.bf16.msra.mxu0 0
    %132 = vmatprep.subr.bf16.mxu0 0
    %133 = vmatpush1.bf16.msra.mxu0 0
    %134 = vmatprep.subr.bf16.mxu0 0
    %135 = vmatpush1.bf16.msra.mxu0 0
    %136 = vmatprep.subr.bf16.mxu0 0
    %137 = vmatpush1.bf16.msra.mxu0 0
    %138 = vmatprep.subr.bf16.mxu0 0
    %139 = vmatpush1.bf16.msra.mxu0 0
    %140 = vmatprep.subr.bf16.mxu0 0
    %141 = vmatpush1.bf16.msra.mxu0 0
    %142 = vmatprep.subr.bf16.mxu0 0
    %143 = vmatpush1.bf16.msra.mxu0 0
    %144 = vmatprep.subr.bf16.mxu0 0
    %145 = vmatpush1.bf16.msra.mxu0 0
    %146 = vmatprep.subr.bf16.mxu0 0
    %147 = vmatpush1.bf16.msra.mxu0 0
    %148 = vmatprep.mubr.bf16.mxu0 0
    %149 = vmatmul.mubr.bf16.gmra.mrb[0].mxu0 %v107
    %v150 = vpop.f32.mrb[0].mxu0
    %v151 = vadd.f32 0.0, %v150
    %v152 = vpop.f32.mrb[0].mxu0
    %v153 = vadd.f32 0.0, %v152
    %v154 = vpop.f32.mrb[0].mxu0
    %v155 = vadd.f32 0.0, %v154
    %v156 = vpop.f32.mrb[0].mxu0
    %v157 = vadd.f32 0.0, %v156
    %158 = vdwg.mxu0
    %v161 = vunpack.c.l.b16 %v96
    %v162 = vunpack.c.l.b16 %v97
    %v163 = vpack.c.b16 %v162, %v161
    %v165 = vsel %vm105, %v163, 0
    %v168 = vsel %vm109, %v90, 0
    %v171 = vsel %vm109, %v91, 0
    %173 = vmatprep.subr.bf16.mxu0 %v171
    %174 = vmatpush1.bf16.msra.mxu0 %v168
    %175 = vmatprep.subr.bf16.mxu0 0
    %176 = vmatpush1.bf16.msra.mxu0 0
    %177 = vmatprep.subr.bf16.mxu0 0
    %178 = vmatpush1.bf16.msra.mxu0 0
    %179 = vmatprep.subr.bf16.mxu0 0
    %180 = vmatpush1.bf16.msra.mxu0 0
    %181 = vmatprep.subr.bf16.mxu0 0
    %182 = vmatpush1.bf16.msra.mxu0 0
    %183 = vmatprep.subr.bf16.mxu0 0
    %184 = vmatpush1.bf16.msra.mxu0 0
    %185 = vmatprep.subr.bf16.mxu0 0
    %186 = vmatpush1.bf16.msra.mxu0 0
    %187 = vmatprep.subr.bf16.mxu0 0
    %188 = vmatpush1.bf16.msra.mxu0 0
    %189 = vmatprep.subr.bf16.mxu0 0
    %190 = vmatpush1.bf16.msra.mxu0 0
    %191 = vmatprep.subr.bf16.mxu0 0
    %192 = vmatpush1.bf16.msra.mxu0 0
    %193 = vmatprep.subr.bf16.mxu0 0
    %194 = vmatpush1.bf16.msra.mxu0 0
    %195 = vmatprep.subr.bf16.mxu0 0
    %196 = vmatpush1.bf16.msra.mxu0 0
    %197 = vmatprep.subr.bf16.mxu0 0
    %198 = vmatpush1.bf16.msra.mxu0 0
    %199 = vmatprep.subr.bf16.mxu0 0
    %200 = vmatpush1.bf16.msra.mxu0 0
    %201 = vmatprep.subr.bf16.mxu0 0
    %202 = vmatpush1.bf16.msra.mxu0 0
    %203 = vmatprep.subr.bf16.mxu0 0
    %204 = vmatpush1.bf16.msra.mxu0 0
    %205 = vmatprep.mubr.bf16.mxu0 0
    %206 = vmatmul.mubr.bf16.gmra.mrb[0].mxu0 %v165
    %v207 = vpop.f32.mrb[0].mxu0
    %v208 = vadd.f32 %v151, %v207
    %v209 = vpop.f32.mrb[0].mxu0
    %v210 = vadd.f32 %v153, %v209
    %v211 = vpop.f32.mrb[0].mxu0
    %v212 = vadd.f32 %v155, %v211
    %v213 = vpop.f32.mrb[0].mxu0
    %v214 = vadd.f32 %v157, %v213
    %215 = vdwg.mxu0
    %v216 = vld [vmem:[#allocation2 + $0x10] sm:$0xf]
    %v217 = vld [vmem:[#allocation2 + $0x14] sm:$0xf]
    %v220 = vunpack.c.l.b16 %v216
    %v221 = vunpack.c.l.b16 %v217
    %v222 = vpack.c.b16 %v221, %v220
    %v224 = vsel %vm105, %v222, 0
    %v227 = vsel %vm109, %v94, 0
    %v230 = vsel %vm109, %v95, 0
    %232 = vmatprep.subr.bf16.mxu0 %v230
    %233 = vmatpush1.bf16.msra.mxu0 %v227
    %234 = vmatprep.subr.bf16.mxu0 0
    %235 = vmatpush1.bf16.msra.mxu0 0
    %236 = vmatprep.subr.bf16.mxu0 0
    %237 = vmatpush1.bf16.msra.mxu0 0
    %238 = vmatprep.subr.bf16.mxu0 0
    %239 = vmatpush1.bf16.msra.mxu0 0
    %240 = vmatprep.subr.bf16.mxu0 0
    %241 = vmatpush1.bf16.msra.mxu0 0
    %242 = vmatprep.subr.bf16.mxu0 0
    %243 = vmatpush1.bf16.msra.mxu0 0
    %244 = vmatprep.subr.bf16.mxu0 0
    %245 = vmatpush1.bf16.msra.mxu0 0
    %246 = vmatprep.subr.bf16.mxu0 0
    %247 = vmatpush1.bf16.msra.mxu0 0
    %248 = vmatprep.subr.bf16.mxu0 0
    %249 = vmatpush1.bf16.msra.mxu0 0
    %250 = vmatprep.subr.bf16.mxu0 0
    %251 = vmatpush1.bf16.msra.mxu0 0
    %252 = vmatprep.subr.bf16.mxu0 0
    %253 = vmatpush1.bf16.msra.mxu0 0
    %254 = vmatprep.subr.bf16.mxu0 0
    %255 = vmatpush1.bf16.msra.mxu0 0
    %256 = vmatprep.subr.bf16.mxu0 0
    %257 = vmatpush1.bf16.msra.mxu0 0
    %258 = vmatprep.subr.bf16.mxu0 0
    %259 = vmatpush1.bf16.msra.mxu0 0
    %260 = vmatprep.subr.bf16.mxu0 0
    %261 = vmatpush1.bf16.msra.mxu0 0
    %262 = vmatprep.subr.bf16.mxu0 0
    %263 = vmatpush1.bf16.msra.mxu0 0
    %264 = vmatprep.mubr.bf16.mxu0 0
    %265 = vmatmul.mubr.bf16.gmra.mrb[0].mxu0 %v224
    %v266 = vpop.f32.mrb[0].mxu0
    %v267 = vadd.f32 0.0, %v266
    %v268 = vpop.f32.mrb[0].mxu0
    %v269 = vadd.f32 0.0, %v268
    %v270 = vpop.f32.mrb[0].mxu0
    %v271 = vadd.f32 0.0, %v270
    %v272 = vpop.f32.mrb[0].mxu0
    %v273 = vadd.f32 0.0, %v272
    %274 = vdwg.mxu0
    %v275 = vadd.f32 %v208, %v267
    %v276 = vadd.f32 %v210, %v269
    %v277 = vadd.f32 %v212, %v271
    %v278 = vadd.f32 %v214, %v273
    %v279 = vadd.f32 %v275, %v276
    %280 = vadd.xlane.f32.xlu0 %v279
    %v281 = vpop.xlane.xlu0 %280
    %v282 = vadd.f32 %v277, %v278
    %283 = vadd.xlane.f32.xlu0 %v282
    %v284 = vpop.xlane.xlu0 %283
    %v285 = vrcp.pop 256.0
    %v286 = vmul.f32 %v281, %v285
    %v287 = vmul.f32 %v284, %v285
    %v288 = vmul.f32 %v275, %v275
    %v289 = vmul.f32 %v276, %v276
    %v290 = vmul.f32 %v277, %v277
    %v291 = vmul.f32 %v278, %v278
    %v292 = vadd.f32 %v288, %v289
    %293 = vadd.xlane.f32.xlu0 %v292
    %v294 = vpop.xlane.xlu0 %293
    %v295 = vadd.f32 %v290, %v291
    %296 = vadd.xlane.f32.xlu0 %v295
    %v297 = vpop.xlane.xlu0 %296
    %v298 = vmul.f32 %v294, %v285
    %v299 = vmul.f32 %v297, %v285
    %v300 = vmul.f32 %v286, %v286
    %v301 = vmul.f32 %v287, %v287
    %v302 = vsub.f32 %v298, %v300
    %v303 = vsub.f32 %v299, %v301
    %v304 = vmax.f32 %v302, 0.0
    %v305 = vmax.f32 %v303, 0.0
    %v306 = vld [vmem:[%s2] sm:$0xff]
    %v307 = vld [vmem:[%s2 + $0x8] sm:$0xff]
    %v308 = vadd.f32 %v304, 1e-05
    %v309 = vadd.f32 %v305, 1e-05
    %v310 = vrsqrt.pop %v308
    %v311 = vrsqrt.pop %v309
    %v312 = vmul.f32 %v306, %v310
    %v313 = vmul.f32 %v307, %v311
    %v314 = vld [vmem:[%s2 + $0x10] sm:$0xff]
    %v315 = vld [vmem:[%s2 + $0x18] sm:$0xff]
    %v316 = vmul.f32 %v286, %v312
    %v317 = vmul.f32 %v287, %v313
    %v318 = vsub.f32 %v314, %v316
    %v319 = vsub.f32 %v315, %v317
    %321 = vset.pattern.permute.xlu0 0
    %322 = vperm.xlu0 %321, %v312
    %v323 = vpop.permute.xlu0 %322
    %326 = vset.pattern.permute.xlu0 0
    %327 = vperm.xlu0 %326, %v313
    %v328 = vpop.permute.xlu0 %327
    %v330 = vmul.f32 %v275, %v323
    %v331 = vmul.f32 %v276, %v323
    %v332 = vmul.f32 %v277, %v328
    %v333 = vmul.f32 %v278, %v328
    %335 = vset.pattern.permute.xlu0 0
    %336 = vperm.xlu0 %335, %v318
    %v337 = vpop.permute.xlu0 %336
    %340 = vset.pattern.permute.xlu0 0
    %341 = vperm.xlu0 %340, %v319
    %v342 = vpop.permute.xlu0 %341
    %v344 = vadd.f32 %v330, %v337
    %v345 = vadd.f32 %v331, %v337
    %v346 = vadd.f32 %v332, %v342
    %v347 = vadd.f32 %v333, %v342
    %v348 = vmul.f32 %v344, 0.1
    %v349 = vmul.f32 %v345, 0.1
    %v350 = vmul.f32 %v346, 0.1
    %v351 = vmul.f32 %v347, 0.1
    %v352 = vmax.f32 %v344, %v348
    %v353 = vmax.f32 %v345, %v349
    %v354 = vmax.f32 %v346, %v350
    %v355 = vmax.f32 %v347, %v351
    %356 = vrot.lane.b32.xlu0 %v352, 1
    %v357 = vpop.permute.xlu0 %356
    %358 = vrot.lane.b32.xlu0 %v354, 1
    %v359 = vpop.permute.xlu0 %358
    %360 = vrot.lane.b32.xlu0 %v353, 1
    %v361 = vpop.permute.xlu0 %360
    %362 = vrot.lane.b32.xlu0 %v355, 1
    %v363 = vpop.permute.xlu0 %362
    %v364 = vsel %vm68, %v357, %v361
    %v365 = vsel %vm68, %v359, %v363
    %v366 = vsel %vm68, %v361, %v357
    %v367 = vsel %vm68, %v363, %v359
    %v368 = vsel %vm73, 0.0, %v366
    %v369 = vsel %vm74, 0.0, %v364
    %v370 = vsel %vm73, 0.0, %v367
    %v371 = vsel %vm74, 0.0, %v365
    %372 = vrot.lane.b32.xlu0 %v352, 127
    %v373 = vpop.permute.xlu0 %372
    %374 = vrot.lane.b32.xlu0 %v354, 127
    %v375 = vpop.permute.xlu0 %374
    %376 = vrot.lane.b32.xlu0 %v353, 127
    %v377 = vpop.permute.xlu0 %376
    %378 = vrot.lane.b32.xlu0 %v355, 127
    %v379 = vpop.permute.xlu0 %378
    %v380 = vsel %vm81, %v373, %v377
    %v381 = vsel %vm81, %v375, %v379
    %v382 = vsel %vm81, %v377, %v373
    %v383 = vsel %vm81, %v379, %v375
    %v384 = vsel %vm86, 0.0, %v380
    %v385 = vsel %vm87, 0.0, %v382
    %v386 = vsel %vm86, 0.0, %v381
    %v387 = vsel %vm87, 0.0, %v383
    %v388 = vpack.c.bf16 %v370, %v368
    %v389 = vpack.c.bf16 %v371, %v369
    %v390 = vpack.c.bf16 %v354, %v352
    %v391 = vpack.c.bf16 %v355, %v353
    %v392 = vpack.c.bf16 %v386, %v384
    %v393 = vpack.c.bf16 %v387, %v385
    %v394 = vld [vmem:[#allocation2 + $0x18] sm:$0xf]
    %v395 = vld [vmem:[#allocation2 + $0x1c] sm:$0xf]
    %v396 = vld [vmem:[#allocation2 + $0x20] sm:$0x3]
    %v397 = vld [vmem:[#allocation2 + $0x28] sm:$0xf]
    %v398 = vld [vmem:[#allocation2 + $0x2c] sm:$0xf]
    %v399 = vld [vmem:[#allocation2 + $0x30] sm:$0x3]
    %v403 = vunpack.c.l.b16 %v397
    %v404 = vunpack.c.l.b16 %v398
    %v405 = vunpack.c.l.b16 %v399
    %v406 = vpack.c.b16 %v404, %v403
    %v407 = vpack.c.b16 %v405, %v405
    %vm408 = vcmask 130048
    %v410 = vsel %vm408, %v406, 0
    %v413 = vsel %vm408, %v407, 0
    %415 = vmatprep.subr.bf16.mxu0 %v391
    %416 = vmatpush1.bf16.msra.mxu0 %v390
    %417 = vmatprep.subr.bf16.mxu0 0
    %418 = vmatpush1.bf16.msra.mxu0 0
    %419 = vmatprep.subr.bf16.mxu0 0
    %420 = vmatpush1.bf16.msra.mxu0 0
    %421 = vmatprep.subr.bf16.mxu0 0
    %422 = vmatpush1.bf16.msra.mxu0 0
    %423 = vmatprep.subr.bf16.mxu0 0
    %424 = vmatpush1.bf16.msra.mxu0 0
    %425 = vmatprep.subr.bf16.mxu0 0
    %426 = vmatpush1.bf16.msra.mxu0 0
    %427 = vmatprep.subr.bf16.mxu0 0
    %428 = vmatpush1.bf16.msra.mxu0 0
    %429 = vmatprep.subr.bf16.mxu0 0
    %430 = vmatpush1.bf16.msra.mxu0 0
    %431 = vmatprep.subr.bf16.mxu0 0
    %432 = vmatpush1.bf16.msra.mxu0 0
    %433 = vmatprep.subr.bf16.mxu0 0
    %434 = vmatpush1.bf16.msra.mxu0 0
    %435 = vmatprep.subr.bf16.mxu0 0
    %436 = vmatpush1.bf16.msra.mxu0 0
    %437 = vmatprep.subr.bf16.mxu0 0
    %438 = vmatpush1.bf16.msra.mxu0 0
    %439 = vmatprep.subr.bf16.mxu0 0
    %440 = vmatpush1.bf16.msra.mxu0 0
    %441 = vmatprep.subr.bf16.mxu0 0
    %442 = vmatpush1.bf16.msra.mxu0 0
    %443 = vmatprep.subr.bf16.mxu0 0
    %444 = vmatpush1.bf16.msra.mxu0 0
    %445 = vmatprep.subr.bf16.mxu0 0
    %446 = vmatpush1.bf16.msra.mxu0 0
    %447 = vmatprep.mubr.bf16.mxu0 0
    %448 = vmatmul.mubr.bf16.gmra.mrb[0].mxu0 %v410
    %v449 = vpop.f32.mrb[0].mxu0
    %v450 = vadd.f32 0.0, %v449
    %v451 = vpop.f32.mrb[0].mxu0
    %v452 = vadd.f32 0.0, %v451
    %v453 = vpop.f32.mrb[0].mxu0
    %v454 = vadd.f32 0.0, %v453
    %v455 = vpop.f32.mrb[0].mxu0
    %v456 = vadd.f32 0.0, %v455
    %457 = vmatprep.mubr.bf16.mxu0 0
    %458 = vmatmul.mubr.bf16.gmra.mrb[0].mxu0 %v413
    %v459 = vpop.f32.mrb[0].mxu0
    %v460 = vadd.f32 0.0, %v459
    %v461 = vpop.f32.mrb[0].mxu0
    %v462 = vadd.f32 0.0, %v461
    %v463 = vpop.f32.mrb[0].mxu0
    %v464 = vpop.f32.mrb[0].mxu0
    %465 = vdwg.mxu0
    %v469 = vunpack.c.l.b16 %v394
    %v470 = vunpack.c.l.b16 %v395
    %v471 = vunpack.c.l.b16 %v396
    %v472 = vpack.c.b16 %v470, %v469
    %v473 = vpack.c.b16 %v471, %v471
    %v475 = vsel %vm408, %v472, 0
    %v478 = vsel %vm408, %v473, 0
    %480 = vmatprep.subr.bf16.mxu0 %v389
    %481 = vmatpush1.bf16.msra.mxu0 %v388
    %482 = vmatprep.subr.bf16.mxu0 0
    %483 = vmatpush1.bf16.msra.mxu0 0
    %484 = vmatprep.subr.bf16.mxu0 0
    %485 = vmatpush1.bf16.msra.mxu0 0
    %486 = vmatprep.subr.bf16.mxu0 0
    %487 = vmatpush1.bf16.msra.mxu0 0
    %488 = vmatprep.subr.bf16.mxu0 0
    %489 = vmatpush1.bf16.msra.mxu0 0
    %490 = vmatprep.subr.bf16.mxu0 0
    %491 = vmatpush1.bf16.msra.mxu0 0
    %492 = vmatprep.subr.bf16.mxu0 0
    %493 = vmatpush1.bf16.msra.mxu0 0
    %494 = vmatprep.subr.bf16.mxu0 0
    %495 = vmatpush1.bf16.msra.mxu0 0
    %496 = vmatprep.subr.bf16.mxu0 0
    %497 = vmatpush1.bf16.msra.mxu0 0
    %498 = vmatprep.subr.bf16.mxu0 0
    %499 = vmatpush1.bf16.msra.mxu0 0
    %500 = vmatprep.subr.bf16.mxu0 0
    %501 = vmatpush1.bf16.msra.mxu0 0
    %502 = vmatprep.subr.bf16.mxu0 0
    %503 = vmatpush1.bf16.msra.mxu0 0
    %504 = vmatprep.subr.bf16.mxu0 0
    %505 = vmatpush1.bf16.msra.mxu0 0
    %506 = vmatprep.subr.bf16.mxu0 0
    %507 = vmatpush1.bf16.msra.mxu0 0
    %508 = vmatprep.subr.bf16.mxu0 0
    %509 = vmatpush1.bf16.msra.mxu0 0
    %510 = vmatprep.subr.bf16.mxu0 0
    %511 = vmatpush1.bf16.msra.mxu0 0
    %512 = vmatprep.mubr.bf16.mxu0 0
    %513 = vmatmul.mubr.bf16.gmra.mrb[0].mxu0 %v475
    %v514 = vpop.f32.mrb[0].mxu0
    %v515 = vadd.f32 %v450, %v514
    %v516 = vpop.f32.mrb[0].mxu0
    %v517 = vadd.f32 %v452, %v516
    %v518 = vpop.f32.mrb[0].mxu0
    %v519 = vadd.f32 %v454, %v518
    %v520 = vpop.f32.mrb[0].mxu0
    %v521 = vadd.f32 %v456, %v520
    %522 = vmatprep.mubr.bf16.mxu0 0
    %523 = vmatmul.mubr.bf16.gmra.mrb[0].mxu0 %v478
    %v524 = vpop.f32.mrb[0].mxu0
    %v525 = vadd.f32 %v460, %v524
    %v526 = vpop.f32.mrb[0].mxu0
    %v527 = vadd.f32 %v462, %v526
    %v528 = vpop.f32.mrb[0].mxu0
    %v529 = vpop.f32.mrb[0].mxu0
    %530 = vdwg.mxu0
    %v531 = vld [vmem:[#allocation2 + $0x38] sm:$0xf]
    %v532 = vld [vmem:[#allocation2 + $0x3c] sm:$0xf]
    %v533 = vld [vmem:[#allocation2 + $0x40] sm:$0x3]
    %v537 = vunpack.c.l.b16 %v531
    %v538 = vunpack.c.l.b16 %v532
    %v539 = vunpack.c.l.b16 %v533
    %v540 = vpack.c.b16 %v538, %v537
    %v541 = vpack.c.b16 %v539, %v539
    %v543 = vsel %vm408, %v540, 0
    %v546 = vsel %vm408, %v541, 0
    %548 = vmatprep.subr.bf16.mxu0 %v393
    %549 = vmatpush1.bf16.msra.mxu0 %v392
    %550 = vmatprep.subr.bf16.mxu0 0
    %551 = vmatpush1.bf16.msra.mxu0 0
    %552 = vmatprep.subr.bf16.mxu0 0
    %553 = vmatpush1.bf16.msra.mxu0 0
    %554 = vmatprep.subr.bf16.mxu0 0
    %555 = vmatpush1.bf16.msra.mxu0 0
    %556 = vmatprep.subr.bf16.mxu0 0
    %557 = vmatpush1.bf16.msra.mxu0 0
    %558 = vmatprep.subr.bf16.mxu0 0
    %559 = vmatpush1.bf16.msra.mxu0 0
    %560 = vmatprep.subr.bf16.mxu0 0
    %561 = vmatpush1.bf16.msra.mxu0 0
    %562 = vmatprep.subr.bf16.mxu0 0
    %563 = vmatpush1.bf16.msra.mxu0 0
    %564 = vmatprep.subr.bf16.mxu0 0
    %565 = vmatpush1.bf16.msra.mxu0 0
    %566 = vmatprep.subr.bf16.mxu0 0
    %567 = vmatpush1.bf16.msra.mxu0 0
    %568 = vmatprep.subr.bf16.mxu0 0
    %569 = vmatpush1.bf16.msra.mxu0 0
    %570 = vmatprep.subr.bf16.mxu0 0
    %571 = vmatpush1.bf16.msra.mxu0 0
    %572 = vmatprep.subr.bf16.mxu0 0
    %573 = vmatpush1.bf16.msra.mxu0 0
    %574 = vmatprep.subr.bf16.mxu0 0
    %575 = vmatpush1.bf16.msra.mxu0 0
    %576 = vmatprep.subr.bf16.mxu0 0
    %577 = vmatpush1.bf16.msra.mxu0 0
    %578 = vmatprep.subr.bf16.mxu0 0
    %579 = vmatpush1.bf16.msra.mxu0 0
    %580 = vmatprep.mubr.bf16.mxu0 0
    %581 = vmatmul.mubr.bf16.gmra.mrb[0].mxu0 %v543
    %v582 = vpop.f32.mrb[0].mxu0
    %v583 = vadd.f32 0.0, %v582
    %v584 = vpop.f32.mrb[0].mxu0
    %v585 = vadd.f32 0.0, %v584
    %v586 = vpop.f32.mrb[0].mxu0
    %v587 = vadd.f32 0.0, %v586
    %v588 = vpop.f32.mrb[0].mxu0
    %v589 = vadd.f32 0.0, %v588
    %590 = vmatprep.mubr.bf16.mxu0 0
    %591 = vmatmul.mubr.bf16.gmra.mrb[0].mxu0 %v546
    %v592 = vpop.f32.mrb[0].mxu0
    %v593 = vadd.f32 0.0, %v592
    %v594 = vpop.f32.mrb[0].mxu0
    %v595 = vadd.f32 0.0, %v594
    %v596 = vpop.f32.mrb[0].mxu0
    %v597 = vpop.f32.mrb[0].mxu0
    %598 = vdwg.mxu0
    %v599 = vadd.f32 %v515, %v583
    %v600 = vadd.f32 %v517, %v585
    %v601 = vadd.f32 %v519, %v587
    %v602 = vadd.f32 %v521, %v589
    %v603 = vadd.f32 %v525, %v593
    %v604 = vadd.f32 %v527, %v595
    %v605 = vadd.f32 %v599, %v600
    %606 = vadd.xlane.f32.xlu0 %v605
    %v607 = vpop.xlane.xlu0 %606
    %v608 = vadd.f32 %v601, %v602
    %609 = vadd.xlane.f32.xlu0 %v608
    %v610 = vpop.xlane.xlu0 %609
    %vm611 = vcmask 1043456
    %v612 = vsel %vm611, %v603, 0.0
    %v613 = vsel %vm611, %v604, 0.0
    %v614 = vadd.f32 %v612, %v613
    %615 = vadd.xlane.f32.xlu0 %v614
    %v616 = vpop.xlane.xlu0 %615
    %v617 = vmul.f32 %v607, %v285
    %v618 = vmul.f32 %v610, %v285
    %v619 = vmul.f32 %v616, %v285
    %v620 = vmul.f32 %v599, %v599
    %v621 = vmul.f32 %v600, %v600
    %v622 = vmul.f32 %v601, %v601
    %v623 = vmul.f32 %v602, %v602
    %v624 = vmul.f32 %v603, %v603
    %v625 = vmul.f32 %v604, %v604
    %v626 = vadd.f32 %v620, %v621
    %627 = vadd.xlane.f32.xlu0 %v626
    %v628 = vpop.xlane.xlu0 %627
    %v629 = vadd.f32 %v622, %v623
    %630 = vadd.xlane.f32.xlu0 %v629
    %v631 = vpop.xlane.xlu0 %630
    %v632 = vsel %vm611, %v624, 0.0
    %v633 = vsel %vm611, %v625, 0.0
    %v634 = vadd.f32 %v632, %v633
    %635 = vadd.xlane.f32.xlu0 %v634
    %v636 = vpop.xlane.xlu0 %635
    %v637 = vmul.f32 %v628, %v285
    %v638 = vmul.f32 %v631, %v285
    %v639 = vmul.f32 %v636, %v285
    %v640 = vmul.f32 %v617, %v617
    %v641 = vmul.f32 %v618, %v618
    %v642 = vmul.f32 %v619, %v619
    %v643 = vsub.f32 %v637, %v640
    %v644 = vsub.f32 %v638, %v641
    %v645 = vsub.f32 %v639, %v642
    %v646 = vmax.f32 %v643, 0.0
    %v647 = vmax.f32 %v644, 0.0
    %v648 = vmax.f32 %v645, 0.0
    %v649 = vld [vmem:[%s2 + $0x20] sm:$0xff]
    %v650 = vld [vmem:[%s2 + $0x28] sm:$0xff]
    %v651 = vld [vmem:[%s2 + $0x30] sm:$0xf]
    %v652 = vadd.f32 %v646, 1e-05
    %v653 = vadd.f32 %v647, 1e-05
    %v654 = vadd.f32 %v648, 1e-05
    %v655 = vrsqrt.pop %v652
    %v656 = vrsqrt.pop %v653
    %v657 = vrsqrt.pop %v654
    %v658 = vmul.f32 %v649, %v655
    %v659 = vmul.f32 %v650, %v656
    %v660 = vmul.f32 %v651, %v657
    %v661 = vld [vmem:[%s2 + $0x38] sm:$0xff]
    %v662 = vld [vmem:[%s2 + $0x40] sm:$0xff]
    %v663 = vld [vmem:[%s2 + $0x48] sm:$0xf]
    %v664 = vmul.f32 %v617, %v658
    %v665 = vmul.f32 %v618, %v659
    %v666 = vmul.f32 %v619, %v660
    %v667 = vsub.f32 %v661, %v664
    %v668 = vsub.f32 %v662, %v665
    %v669 = vsub.f32 %v663, %v666
    %671 = vset.pattern.permute.xlu0 0
    %672 = vperm.xlu0 %671, %v658
    %v673 = vpop.permute.xlu0 %672
    %676 = vset.pattern.permute.xlu0 0
    %677 = vperm.xlu0 %676, %v659
    %v678 = vpop.permute.xlu0 %677
    %681 = vset.pattern.permute.xlu0 0
    %682 = vperm.xlu0 %681, %v660
    %v683 = vpop.permute.xlu0 %682
    %v685 = vmul.f32 %v599, %v673
    %v686 = vmul.f32 %v600, %v673
    %v687 = vmul.f32 %v601, %v678
    %v688 = vmul.f32 %v602, %v678
    %v689 = vmul.f32 %v603, %v683
    %v690 = vmul.f32 %v604, %v683
    %692 = vset.pattern.permute.xlu0 0
    %693 = vperm.xlu0 %692, %v667
    %v694 = vpop.permute.xlu0 %693
    %697 = vset.pattern.permute.xlu0 0
    %698 = vperm.xlu0 %697, %v668
    %v699 = vpop.permute.xlu0 %698
    %702 = vset.pattern.permute.xlu0 0
    %703 = vperm.xlu0 %702, %v669
    %v704 = vpop.permute.xlu0 %703
    %v706 = vadd.f32 %v685, %v694
    %v707 = vadd.f32 %v686, %v694
    %v708 = vadd.f32 %v687, %v699
    %v709 = vadd.f32 %v688, %v699
    %v710 = vadd.f32 %v689, %v704
    %v711 = vadd.f32 %v690, %v704
    %v712 = vmul.f32 %v706, 0.1
    %v713 = vmul.f32 %v707, 0.1
    %v714 = vmul.f32 %v708, 0.1
    %v715 = vmul.f32 %v709, 0.1
    %v716 = vmul.f32 %v710, 0.1
    %v717 = vmul.f32 %v711, 0.1
    %v718 = vmax.f32 %v706, %v712
    %v719 = vmax.f32 %v707, %v713
    %v720 = vmax.f32 %v708, %v714
    %v721 = vmax.f32 %v709, %v715
    %v722 = vmax.f32 %v710, %v716
    %v723 = vmax.f32 %v711, %v717
    %724 = vrot.lane.b32.xlu0 %v718, 1
    %v725 = vpop.permute.xlu0 %724
    %726 = vrot.lane.b32.xlu0 %v720, 1
    %v727 = vpop.permute.xlu0 %726
    %728 = vrot.lane.b32.xlu0 %v722, 1
    %v729 = vpop.permute.xlu0 %728
    %730 = vrot.lane.b32.xlu0 %v719, 1
    %v731 = vpop.permute.xlu0 %730
    %732 = vrot.lane.b32.xlu0 %v721, 1
    %v733 = vpop.permute.xlu0 %732
    %734 = vrot.lane.b32.xlu0 %v723, 1
    %v735 = vpop.permute.xlu0 %734
    %v736 = vsel %vm68, %v725, %v731
    %v737 = vsel %vm68, %v727, %v733
    %v738 = vsel %vm68, %v729, %v735
    %v739 = vsel %vm68, %v731, %v725
    %v740 = vsel %vm68, %v733, %v727
    %v741 = vsel %vm68, %v735, %v729
    %v742 = vsel %vm73, 0.0, %v739
    %v743 = vsel %vm74, 0.0, %v736
    %v744 = vsel %vm73, 0.0, %v740
    %v745 = vsel %vm74, 0.0, %v737
    %v746 = vsel %vm73, 0.0, %v741
    %v747 = vsel %vm74, 0.0, %v738
    %748 = vrot.lane.b32.xlu0 %v718, 127
    %v749 = vpop.permute.xlu0 %748
    %750 = vrot.lane.b32.xlu0 %v720, 127
    %v751 = vpop.permute.xlu0 %750
    %752 = vrot.lane.b32.xlu0 %v722, 127
    %v753 = vpop.permute.xlu0 %752
    %754 = vrot.lane.b32.xlu0 %v719, 127
    %v755 = vpop.permute.xlu0 %754
    %756 = vrot.lane.b32.xlu0 %v721, 127
    %v757 = vpop.permute.xlu0 %756
    %758 = vrot.lane.b32.xlu0 %v723, 127
    %v759 = vpop.permute.xlu0 %758
    %v760 = vsel %vm81, %v749, %v755
    %v761 = vsel %vm81, %v751, %v757
    %v762 = vsel %vm81, %v753, %v759
    %v763 = vsel %vm81, %v755, %v749
    %v764 = vsel %vm81, %v757, %v751
    %v765 = vsel %vm81, %v759, %v753
    %v766 = vsel %vm86, 0.0, %v760
    %v767 = vsel %vm87, 0.0, %v763
    %v768 = vsel %vm86, 0.0, %v761
    %v769 = vsel %vm87, 0.0, %v764
    %v770 = vsel %vm86, 0.0, %v762
    %v771 = vsel %vm87, 0.0, %v765
    %v772 = vpack.c.bf16 %v744, %v742
    %v773 = vpack.c.bf16 %v745, %v743
    %v774 = vpack.c.bf16 %v746, %v746
    %v775 = vpack.c.bf16 %v747, %v747
    %v776 = vpack.c.bf16 %v720, %v718
    %v777 = vpack.c.bf16 %v721, %v719
    %v778 = vpack.c.bf16 %v722, %v722
    %v779 = vpack.c.bf16 %v723, %v723
    %v780 = vpack.c.bf16 %v768, %v766
    %v781 = vpack.c.bf16 %v769, %v767
    %v782 = vpack.c.bf16 %v770, %v770
    %v783 = vpack.c.bf16 %v771, %v771
    %v784 = vld [vmem:[#allocation2 + $0x48] sm:$0xf]
    %v785 = vld [vmem:[#allocation2 + $0x4c] sm:$0xf]
    %v786 = vld [vmem:[#allocation2 + $0x50] sm:$0xf]
    %v787 = vld [vmem:[#allocation2 + $0x58] sm:$0xf]
    %v788 = vld [vmem:[#allocation2 + $0x5c] sm:$0xf]
    %v789 = vld [vmem:[#allocation2 + $0x60] sm:$0xf]
    %v793 = vunpack.c.l.b16 %v787
    %v794 = vunpack.c.l.b16 %v788
    %v795 = vunpack.c.l.b16 %v789
    %v796 = vpack.c.b16 %v794, %v793
    %v797 = vpack.c.b16 %v795, %v795
    %vm798 = vcmask 162816
    %v800 = vsel %vm798, %v796, 0
    %v803 = vsel %vm798, %v797, 0
    %v806 = vsel %vm109, %v778, 0
    %v809 = vsel %vm109, %v779, 0
    %811 = vmatprep.subr.bf16.mxu0 %v777
    %812 = vmatpush1.bf16.msra.mxu0 %v776
    %813 = vmatprep.subr.bf16.mxu0 %v809
    %814 = vmatpush1.bf16.msra.mxu0 %v806
    %815 = vmatprep.subr.bf16.mxu0 0
    %816 = vmatpush1.bf16.msra.mxu0 0
    %817 = vmatprep.subr.bf16.mxu0 0
    %818 = vmatpush1.bf16.msra.mxu0 0
    %819 = vmatprep.subr.bf16.mxu0 0
    %820 = vmatpush1.bf16.msra.mxu0 0
    %821 = vmatprep.subr.bf16.mxu0 0
    %822 = vmatpush1.bf16.msra.mxu0 0
    %823 = vmatprep.subr.bf16.mxu0 0
    %824 = vmatpush1.bf16.msra.mxu0 0
    %825 = vmatprep.subr.bf16.mxu0 0
    %826 = vmatpush1.bf16.msra.mxu0 0
    %827 = vmatprep.subr.bf16.mxu0 0
    %828 = vmatpush1.bf16.msra.mxu0 0
    %829 = vmatprep.subr.bf16.mxu0 0
    %830 = vmatpush1.bf16.msra.mxu0 0
    %831 = vmatprep.subr.bf16.mxu0 0
    %832 = vmatpush1.bf16.msra.mxu0 0
    %833 = vmatprep.subr.bf16.mxu0 0
    %834 = vmatpush1.bf16.msra.mxu0 0
    %835 = vmatprep.subr.bf16.mxu0 0
    %836 = vmatpush1.bf16.msra.mxu0 0
    %837 = vmatprep.subr.bf16.mxu0 0
    %838 = vmatpush1.bf16.msra.mxu0 0
    %839 = vmatprep.subr.bf16.mxu0 0
    %840 = vmatpush1.bf16.msra.mxu0 0
    %841 = vmatprep.subr.bf16.mxu0 0
    %842 = vmatpush1.bf16.msra.mxu0 0
    %843 = vmatprep.mubr.bf16.mxu0 0
    %844 = vmatmul.mubr.bf16.gmra.mrb[0].mxu0 %v800
    %v845 = vpop.f32.mrb[0].mxu0
    %v846 = vadd.f32 0.0, %v845
    %v847 = vpop.f32.mrb[0].mxu0
    %v848 = vadd.f32 0.0, %v847
    %v849 = vpop.f32.mrb[0].mxu0
    %v850 = vadd.f32 0.0, %v849
    %v851 = vpop.f32.mrb[0].mxu0
    %v852 = vadd.f32 0.0, %v851
    %853 = vmatprep.mubr.bf16.mxu0 0
    %854 = vmatmul.mubr.bf16.gmra.mrb[0].mxu0 %v803
    %v855 = vpop.f32.mrb[0].mxu0
    %v856 = vadd.f32 0.0, %v855
    %v857 = vpop.f32.mrb[0].mxu0
    %v858 = vadd.f32 0.0, %v857
    %v859 = vpop.f32.mrb[0].mxu0
    %v860 = vpop.f32.mrb[0].mxu0
    %861 = vdwg.mxu0
    %v865 = vunpack.c.l.b16 %v784
    %v866 = vunpack.c.l.b16 %v785
    %v867 = vunpack.c.l.b16 %v786
    %v868 = vpack.c.b16 %v866, %v865
    %v869 = vpack.c.b16 %v867, %v867
    %v871 = vsel %vm798, %v868, 0
    %v874 = vsel %vm798, %v869, 0
    %v877 = vsel %vm109, %v774, 0
    %v880 = vsel %vm109, %v775, 0
    %882 = vmatprep.subr.bf16.mxu0 %v773
    %883 = vmatpush1.bf16.msra.mxu0 %v772
    %884 = vmatprep.subr.bf16.mxu0 %v880
    %885 = vmatpush1.bf16.msra.mxu0 %v877
    %886 = vmatprep.subr.bf16.mxu0 0
    %887 = vmatpush1.bf16.msra.mxu0 0
    %888 = vmatprep.subr.bf16.mxu0 0
    %889 = vmatpush1.bf16.msra.mxu0 0
    %890 = vmatprep.subr.bf16.mxu0 0
    %891 = vmatpush1.bf16.msra.mxu0 0
    %892 = vmatprep.subr.bf16.mxu0 0
    %893 = vmatpush1.bf16.msra.mxu0 0
    %894 = vmatprep.subr.bf16.mxu0 0
    %895 = vmatpush1.bf16.msra.mxu0 0
    %896 = vmatprep.subr.bf16.mxu0 0
    %897 = vmatpush1.bf16.msra.mxu0 0
    %898 = vmatprep.subr.bf16.mxu0 0
    %899 = vmatpush1.bf16.msra.mxu0 0
    %900 = vmatprep.subr.bf16.mxu0 0
    %901 = vmatpush1.bf16.msra.mxu0 0
    %902 = vmatprep.subr.bf16.mxu0 0
    %903 = vmatpush1.bf16.msra.mxu0 0
    %904 = vmatprep.subr.bf16.mxu0 0
    %905 = vmatpush1.bf16.msra.mxu0 0
    %906 = vmatprep.subr.bf16.mxu0 0
    %907 = vmatpush1.bf16.msra.mxu0 0
    %908 = vmatprep.subr.bf16.mxu0 0
    %909 = vmatpush1.bf16.msra.mxu0 0
    %910 = vmatprep.subr.bf16.mxu0 0
    %911 = vmatpush1.bf16.msra.mxu0 0
    %912 = vmatprep.subr.bf16.mxu0 0
    %913 = vmatpush1.bf16.msra.mxu0 0
    %914 = vmatprep.mubr.bf16.mxu0 0
    %915 = vmatmul.mubr.bf16.gmra.mrb[0].mxu0 %v871
    %v916 = vpop.f32.mrb[0].mxu0
    %v917 = vadd.f32 %v846, %v916
    %v918 = vpop.f32.mrb[0].mxu0
    %v919 = vadd.f32 %v848, %v918
    %v920 = vpop.f32.mrb[0].mxu0
    %v921 = vadd.f32 %v850, %v920
    %v922 = vpop.f32.mrb[0].mxu0
    %v923 = vadd.f32 %v852, %v922
    %924 = vmatprep.mubr.bf16.mxu0 0
    %925 = vmatmul.mubr.bf16.gmra.mrb[0].mxu0 %v874
    %v926 = vpop.f32.mrb[0].mxu0
    %v927 = vadd.f32 %v856, %v926
    %v928 = vpop.f32.mrb[0].mxu0
    %v929 = vadd.f32 %v858, %v928
    %v930 = vpop.f32.mrb[0].mxu0
    %v931 = vpop.f32.mrb[0].mxu0
    %932 = vdwg.mxu0
    %v933 = vld [vmem:[#allocation2 + $0x68] sm:$0xf]
    %v934 = vld [vmem:[#allocation2 + $0x6c] sm:$0xf]
    %v935 = vld [vmem:[#allocation2 + $0x70] sm:$0xf]
    %v939 = vunpack.c.l.b16 %v933
    %v940 = vunpack.c.l.b16 %v934
    %v941 = vunpack.c.l.b16 %v935
    %v942 = vpack.c.b16 %v940, %v939
    %v943 = vpack.c.b16 %v941, %v941
    %v945 = vsel %vm798, %v942, 0
    %v948 = vsel %vm798, %v943, 0
    %v951 = vsel %vm109, %v782, 0
    %v954 = vsel %vm109, %v783, 0
    %956 = vmatprep.subr.bf16.mxu0 %v781
    %957 = vmatpush1.bf16.msra.mxu0 %v780
    %958 = vmatprep.subr.bf16.mxu0 %v954
    %959 = vmatpush1.bf16.msra.mxu0 %v951
    %960 = vmatprep.subr.bf16.mxu0 0
    %961 = vmatpush1.bf16.msra.mxu0 0
    %962 = vmatprep.subr.bf16.mxu0 0
    %963 = vmatpush1.bf16.msra.mxu0 0
    %964 = vmatprep.subr.bf16.mxu0 0
    %965 = vmatpush1.bf16.msra.mxu0 0
    %966 = vmatprep.subr.bf16.mxu0 0
    %967 = vmatpush1.bf16.msra.mxu0 0
    %968 = vmatprep.subr.bf16.mxu0 0
    %969 = vmatpush1.bf16.msra.mxu0 0
    %970 = vmatprep.subr.bf16.mxu0 0
    %971 = vmatpush1.bf16.msra.mxu0 0
    %972 = vmatprep.subr.bf16.mxu0 0
    %973 = vmatpush1.bf16.msra.mxu0 0
    %974 = vmatprep.subr.bf16.mxu0 0
    %975 = vmatpush1.bf16.msra.mxu0 0
    %976 = vmatprep.subr.bf16.mxu0 0
    %977 = vmatpush1.bf16.msra.mxu0 0
    %978 = vmatprep.subr.bf16.mxu0 0
    %979 = vmatpush1.bf16.msra.mxu0 0
    %980 = vmatprep.subr.bf16.mxu0 0
    %981 = vmatpush1.bf16.msra.mxu0 0
    %982 = vmatprep.subr.bf16.mxu0 0
    %983 = vmatpush1.bf16.msra.mxu0 0
    %984 = vmatprep.subr.bf16.mxu0 0
    %985 = vmatpush1.bf16.msra.mxu0 0
    %986 = vmatprep.subr.bf16.mxu0 0
    %987 = vmatpush1.bf16.msra.mxu0 0
    %988 = vmatprep.mubr.bf16.mxu0 0
    %989 = vmatmul.mubr.bf16.gmra.mrb[0].mxu0 %v945
    %v990 = vpop.f32.mrb[0].mxu0
    %v991 = vadd.f32 0.0, %v990
    %v992 = vpop.f32.mrb[0].mxu0
    %v993 = vadd.f32 0.0, %v992
    %v994 = vpop.f32.mrb[0].mxu0
    %v995 = vadd.f32 0.0, %v994
    %v996 = vpop.f32.mrb[0].mxu0
    %v997 = vadd.f32 0.0, %v996
    %998 = vmatprep.mubr.bf16.mxu0 0
    %999 = vmatmul.mubr.bf16.gmra.mrb[0].mxu0 %v948
    %v1000 = vpop.f32.mrb[0].mxu0
    %v1001 = vadd.f32 0.0, %v1000
    %v1002 = vpop.f32.mrb[0].mxu0
    %v1003 = vadd.f32 0.0, %v1002
    %v1004 = vpop.f32.mrb[0].mxu0
    %v1005 = vpop.f32.mrb[0].mxu0
    %1006 = vdwg.mxu0
    %v1007 = vadd.f32 %v917, %v991
    %v1008 = vadd.f32 %v919, %v993
    %v1009 = vadd.f32 %v921, %v995
    %v1010 = vadd.f32 %v923, %v997
    %v1011 = vadd.f32 %v927, %v1001
    %v1012 = vadd.f32 %v929, %v1003
    %v1013 = vadd.f32 %v1007, %v1008
    %1014 = vadd.xlane.f32.xlu0 %v1013
    %v1015 = vpop.xlane.xlu0 %1014
    %v1016 = vadd.f32 %v1009, %v1010
    %1017 = vadd.xlane.f32.xlu0 %v1016
    %v1018 = vpop.xlane.xlu0 %1017
    %v1019 = vadd.f32 %v1011, %v1012
    %1020 = vadd.xlane.f32.xlu0 %v1019
    %v1021 = vpop.xlane.xlu0 %1020
    %v1022 = vmul.f32 %v1015, %v285
    %v1023 = vmul.f32 %v1018, %v285
    %v1024 = vmul.f32 %v1021, %v285
    %v1025 = vmul.f32 %v1007, %v1007
    %v1026 = vmul.f32 %v1008, %v1008
    %v1027 = vmul.f32 %v1009, %v1009
    %v1028 = vmul.f32 %v1010, %v1010
    %v1029 = vmul.f32 %v1011, %v1011
    %v1030 = vmul.f32 %v1012, %v1012
    %v1031 = vadd.f32 %v1025, %v1026
    %1032 = vadd.xlane.f32.xlu0 %v1031
    %v1033 = vpop.xlane.xlu0 %1032
    %v1034 = vadd.f32 %v1027, %v1028
    %1035 = vadd.xlane.f32.xlu0 %v1034
    %v1036 = vpop.xlane.xlu0 %1035
    %v1037 = vadd.f32 %v1029, %v1030
    %1038 = vadd.xlane.f32.xlu0 %v1037
    %v1039 = vpop.xlane.xlu0 %1038
    %v1040 = vmul.f32 %v1033, %v285
    %v1041 = vmul.f32 %v1036, %v285
    %v1042 = vmul.f32 %v1039, %v285
    %v1043 = vmul.f32 %v1022, %v1022
    %v1044 = vmul.f32 %v1023, %v1023
    %v1045 = vmul.f32 %v1024, %v1024
    %v1046 = vsub.f32 %v1040, %v1043
    %v1047 = vsub.f32 %v1041, %v1044
    %v1048 = vsub.f32 %v1042, %v1045
    %v1049 = vmax.f32 %v1046, 0.0
    %v1050 = vmax.f32 %v1047, 0.0
    %v1051 = vmax.f32 %v1048, 0.0
    %v1052 = vld [vmem:[%s2 + $0x50] sm:$0xff]
    %v1053 = vld [vmem:[%s2 + $0x58] sm:$0xff]
    %v1054 = vld [vmem:[%s2 + $0x60] sm:$0xff]
    %v1055 = vadd.f32 %v1049, 1e-05
    %v1056 = vadd.f32 %v1050, 1e-05
    %v1057 = vadd.f32 %v1051, 1e-05
    %v1058 = vrsqrt.pop %v1055
    %v1059 = vrsqrt.pop %v1056
    %v1060 = vrsqrt.pop %v1057
    %v1061 = vmul.f32 %v1052, %v1058
    %v1062 = vmul.f32 %v1053, %v1059
    %v1063 = vmul.f32 %v1054, %v1060
    %v1064 = vld [vmem:[%s2 + $0x68] sm:$0xff]
    %v1065 = vld [vmem:[%s2 + $0x70] sm:$0xff]
    %v1066 = vld [vmem:[%s2 + $0x78] sm:$0xff]
    %v1067 = vmul.f32 %v1022, %v1061
    %v1068 = vmul.f32 %v1023, %v1062
    %v1069 = vmul.f32 %v1024, %v1063
    %v1070 = vsub.f32 %v1064, %v1067
    %v1071 = vsub.f32 %v1065, %v1068
    %v1072 = vsub.f32 %v1066, %v1069
    %1074 = vset.pattern.permute.xlu0 0
    %1075 = vperm.xlu0 %1074, %v1061
    %v1076 = vpop.permute.xlu0 %1075
    %1079 = vset.pattern.permute.xlu0 0
    %1080 = vperm.xlu0 %1079, %v1062
    %v1081 = vpop.permute.xlu0 %1080
    %1084 = vset.pattern.permute.xlu0 0
    %1085 = vperm.xlu0 %1084, %v1063
    %v1086 = vpop.permute.xlu0 %1085
    %v1088 = vmul.f32 %v1007, %v1076
    %v1089 = vmul.f32 %v1008, %v1076
    %v1090 = vmul.f32 %v1009, %v1081
    %v1091 = vmul.f32 %v1010, %v1081
    %v1092 = vmul.f32 %v1011, %v1086
    %v1093 = vmul.f32 %v1012, %v1086
    %1095 = vset.pattern.permute.xlu0 0
    %1096 = vperm.xlu0 %1095, %v1070
    %v1097 = vpop.permute.xlu0 %1096
    %1100 = vset.pattern.permute.xlu0 0
    %1101 = vperm.xlu0 %1100, %v1071
    %v1102 = vpop.permute.xlu0 %1101
    %1105 = vset.pattern.permute.xlu0 0
    %1106 = vperm.xlu0 %1105, %v1072
    %v1107 = vpop.permute.xlu0 %1106
    %v1109 = vadd.f32 %v1088, %v1097
    %v1110 = vadd.f32 %v1089, %v1097
    %v1111 = vadd.f32 %v1090, %v1102
    %v1112 = vadd.f32 %v1091, %v1102
    %v1113 = vadd.f32 %v1092, %v1107
    %v1114 = vadd.f32 %v1093, %v1107
    %v1115 = vmul.f32 %v1109, 0.1
    %v1116 = vmul.f32 %v1110, 0.1
    %v1117 = vmul.f32 %v1111, 0.1
    %v1118 = vmul.f32 %v1112, 0.1
    %v1119 = vmul.f32 %v1113, 0.1
    %v1120 = vmul.f32 %v1114, 0.1
    %v1121 = vmax.f32 %v1109, %v1115
    %v1122 = vmax.f32 %v1110, %v1116
    %v1123 = vmax.f32 %v1111, %v1117
    %v1124 = vmax.f32 %v1112, %v1118
    %v1125 = vmax.f32 %v1113, %v1119
    %v1126 = vmax.f32 %v1114, %v1120
    %1127 = vrot.lane.b32.xlu0 %v1121, 1
    %v1128 = vpop.permute.xlu0 %1127
    %1129 = vrot.lane.b32.xlu0 %v1123, 1
    %v1130 = vpop.permute.xlu0 %1129
    %1131 = vrot.lane.b32.xlu0 %v1125, 1
    %v1132 = vpop.permute.xlu0 %1131
    %1133 = vrot.lane.b32.xlu0 %v1122, 1
    %v1134 = vpop.permute.xlu0 %1133
    %1135 = vrot.lane.b32.xlu0 %v1124, 1
    %v1136 = vpop.permute.xlu0 %1135
    %1137 = vrot.lane.b32.xlu0 %v1126, 1
    %v1138 = vpop.permute.xlu0 %1137
    %v1139 = vsel %vm68, %v1128, %v1134
    %v1140 = vsel %vm68, %v1130, %v1136
    %v1141 = vsel %vm68, %v1132, %v1138
    %v1142 = vsel %vm68, %v1134, %v1128
    %v1143 = vsel %vm68, %v1136, %v1130
    %v1144 = vsel %vm68, %v1138, %v1132
    %v1145 = vsel %vm73, 0.0, %v1142
    %v1146 = vsel %vm74, 0.0, %v1139
    %v1147 = vsel %vm73, 0.0, %v1143
    %v1148 = vsel %vm74, 0.0, %v1140
    %v1149 = vsel %vm73, 0.0, %v1144
    %v1150 = vsel %vm74, 0.0, %v1141
    %1151 = vrot.lane.b32.xlu0 %v1121, 127
    %v1152 = vpop.permute.xlu0 %1151
    %1153 = vrot.lane.b32.xlu0 %v1123, 127
    %v1154 = vpop.permute.xlu0 %1153
    %1155 = vrot.lane.b32.xlu0 %v1125, 127
    %v1156 = vpop.permute.xlu0 %1155
    %1157 = vrot.lane.b32.xlu0 %v1122, 127
    %v1158 = vpop.permute.xlu0 %1157
    %1159 = vrot.lane.b32.xlu0 %v1124, 127
    %v1160 = vpop.permute.xlu0 %1159
    %1161 = vrot.lane.b32.xlu0 %v1126, 127
    %v1162 = vpop.permute.xlu0 %1161
    %v1163 = vsel %vm81, %v1152, %v1158
    %v1164 = vsel %vm81, %v1154, %v1160
    %v1165 = vsel %vm81, %v1156, %v1162
    %v1166 = vsel %vm81, %v1158, %v1152
    %v1167 = vsel %vm81, %v1160, %v1154
    %v1168 = vsel %vm81, %v1162, %v1156
    %v1169 = vsel %vm86, 0.0, %v1163
    %v1170 = vsel %vm87, 0.0, %v1166
    %v1171 = vsel %vm86, 0.0, %v1164
    %v1172 = vsel %vm87, 0.0, %v1167
    %v1173 = vsel %vm86, 0.0, %v1165
    %v1174 = vsel %vm87, 0.0, %v1168
    %v1175 = vpack.c.bf16 %v1147, %v1145
    %v1176 = vpack.c.bf16 %v1148, %v1146
    %v1177 = vpack.c.bf16 %v1149, %v1149
    %v1178 = vpack.c.bf16 %v1150, %v1150
    %v1179 = vpack.c.bf16 %v1123, %v1121
    %v1180 = vpack.c.bf16 %v1124, %v1122
    %v1181 = vpack.c.bf16 %v1125, %v1125
    %v1182 = vpack.c.bf16 %v1126, %v1126
    %v1183 = vpack.c.bf16 %v1171, %v1169
    %v1184 = vpack.c.bf16 %v1172, %v1170
    %v1185 = vpack.c.bf16 %v1173, %v1173
    %v1186 = vpack.c.bf16 %v1174, %v1174
    %v1187 = vld [vmem:[#allocation2 + $0x78] sm:$0xf]
    %v1188 = vld [vmem:[#allocation2 + $0x7c] sm:$0xf]
    %v1189 = vld [vmem:[#allocation2 + $0x80] sm:$0xf]
    %v1190 = vld [vmem:[#allocation2 + $0x88] sm:$0xf]
    %v1191 = vld [vmem:[#allocation2 + $0x8c] sm:$0xf]
    %v1192 = vld [vmem:[#allocation2 + $0x90] sm:$0xf]
    %v1196 = vunpack.c.l.b16 %v1190
    %v1197 = vunpack.c.l.b16 %v1191
    %v1198 = vunpack.c.l.b16 %v1192
    %v1199 = vpack.c.b16 %v1197, %v1196
    %v1200 = vpack.c.b16 %v1198, %v1198
    %vm1201 = vcmask 195584
    %v1203 = vsel %vm1201, %v1199, 0
    %v1206 = vsel %vm1201, %v1200, 0
    %v1209 = vsel %vm611, %v1181, 0
    %v1212 = vsel %vm611, %v1182, 0
    %1214 = vmatprep.subr.bf16.mxu0 %v1180
    %1215 = vmatpush1.bf16.msra.mxu0 %v1179
    %1216 = vmatprep.subr.bf16.mxu0 %v1212
    %1217 = vmatpush1.bf16.msra.mxu0 %v1209
    %1218 = vmatprep.subr.bf16.mxu0 0
    %1219 = vmatpush1.bf16.msra.mxu0 0
    %1220 = vmatprep.subr.bf16.mxu0 0
    %1221 = vmatpush1.bf16.msra.mxu0 0
    %1222 = vmatprep.subr.bf16.mxu0 0
    %1223 = vmatpush1.bf16.msra.mxu0 0
    %1224 = vmatprep.subr.bf16.mxu0 0
    %1225 = vmatpush1.bf16.msra.mxu0 0
    %1226 = vmatprep.subr.bf16.mxu0 0
    %1227 = vmatpush1.bf16.msra.mxu0 0
    %1228 = vmatprep.subr.bf16.mxu0 0
    %1229 = vmatpush1.bf16.msra.mxu0 0
    %1230 = vmatprep.subr.bf16.mxu0 0
    %1231 = vmatpush1.bf16.msra.mxu0 0
    %1232 = vmatprep.subr.bf16.mxu0 0
    %1233 = vmatpush1.bf16.msra.mxu0 0
    %1234 = vmatprep.subr.bf16.mxu0 0
    %1235 = vmatpush1.bf16.msra.mxu0 0
    %1236 = vmatprep.subr.bf16.mxu0 0
    %1237 = vmatpush1.bf16.msra.mxu0 0
    %1238 = vmatprep.subr.bf16.mxu0 0
    %1239 = vmatpush1.bf16.msra.mxu0 0
    %1240 = vmatprep.subr.bf16.mxu0 0
    %1241 = vmatpush1.bf16.msra.mxu0 0
    %1242 = vmatprep.subr.bf16.mxu0 0
    %1243 = vmatpush1.bf16.msra.mxu0 0
    %1244 = vmatprep.subr.bf16.mxu0 0
    %1245 = vmatpush1.bf16.msra.mxu0 0
    %1246 = vmatprep.mubr.bf16.mxu0 0
    %1247 = vmatmul.mubr.bf16.gmra.mrb[0].mxu0 %v1203
    %v1248 = vpop.f32.mrb[0].mxu0
    %v1249 = vadd.f32 0.0, %v1248
    %v1250 = vpop.f32.mrb[0].mxu0
    %v1251 = vadd.f32 0.0, %v1250
    %v1252 = vpop.f32.mrb[0].mxu0
    %v1253 = vadd.f32 0.0, %v1252
    %v1254 = vpop.f32.mrb[0].mxu0
    %v1255 = vadd.f32 0.0, %v1254
    %1256 = vmatprep.mubr.bf16.mxu0 0
    %1257 = vmatmul.mubr.bf16.gmra.mrb[0].mxu0 %v1206
    %v1258 = vpop.f32.mrb[0].mxu0
    %v1259 = vadd.f32 0.0, %v1258
    %v1260 = vpop.f32.mrb[0].mxu0
    %v1261 = vadd.f32 0.0, %v1260
    %v1262 = vpop.f32.mrb[0].mxu0
    %v1263 = vpop.f32.mrb[0].mxu0
    %1264 = vdwg.mxu0
    %v1268 = vunpack.c.l.b16 %v1187
    %v1269 = vunpack.c.l.b16 %v1188
    %v1270 = vunpack.c.l.b16 %v1189
    %v1271 = vpack.c.b16 %v1269, %v1268
    %v1272 = vpack.c.b16 %v1270, %v1270
    %v1274 = vsel %vm1201, %v1271, 0
    %v1277 = vsel %vm1201, %v1272, 0
    %v1280 = vsel %vm611, %v1177, 0
    %v1283 = vsel %vm611, %v1178, 0
    %1285 = vmatprep.subr.bf16.mxu0 %v1176
    %1286 = vmatpush1.bf16.msra.mxu0 %v1175
    %1287 = vmatprep.subr.bf16.mxu0 %v1283
    %1288 = vmatpush1.bf16.msra.mxu0 %v1280
    %1289 = vmatprep.subr.bf16.mxu0 0
    %1290 = vmatpush1.bf16.msra.mxu0 0
    %1291 = vmatprep.subr.bf16.mxu0 0
    %1292 = vmatpush1.bf16.msra.mxu0 0
    %1293 = vmatprep.subr.bf16.mxu0 0
    %1294 = vmatpush1.bf16.msra.mxu0 0
    %1295 = vmatprep.subr.bf16.mxu0 0
    %1296 = vmatpush1.bf16.msra.mxu0 0
    %1297 = vmatprep.subr.bf16.mxu0 0
    %1298 = vmatpush1.bf16.msra.mxu0 0
    %1299 = vmatprep.subr.bf16.mxu0 0
    %1300 = vmatpush1.bf16.msra.mxu0 0
    %1301 = vmatprep.subr.bf16.mxu0 0
    %1302 = vmatpush1.bf16.msra.mxu0 0
    %1303 = vmatprep.subr.bf16.mxu0 0
    %1304 = vmatpush1.bf16.msra.mxu0 0
    %1305 = vmatprep.subr.bf16.mxu0 0
    %1306 = vmatpush1.bf16.msra.mxu0 0
    %1307 = vmatprep.subr.bf16.mxu0 0
    %1308 = vmatpush1.bf16.msra.mxu0 0
    %1309 = vmatprep.subr.bf16.mxu0 0
    %1310 = vmatpush1.bf16.msra.mxu0 0
    %1311 = vmatprep.subr.bf16.mxu0 0
    %1312 = vmatpush1.bf16.msra.mxu0 0
    %1313 = vmatprep.subr.bf16.mxu0 0
    %1314 = vmatpush1.bf16.msra.mxu0 0
    %1315 = vmatprep.subr.bf16.mxu0 0
    %1316 = vmatpush1.bf16.msra.mxu0 0
    %1317 = vmatprep.mubr.bf16.mxu0 0
    %1318 = vmatmul.mubr.bf16.gmra.mrb[0].mxu0 %v1274
    %v1319 = vpop.f32.mrb[0].mxu0
    %v1320 = vadd.f32 %v1249, %v1319
    %v1321 = vpop.f32.mrb[0].mxu0
    %v1322 = vadd.f32 %v1251, %v1321
    %v1323 = vpop.f32.mrb[0].mxu0
    %v1324 = vadd.f32 %v1253, %v1323
    %v1325 = vpop.f32.mrb[0].mxu0
    %v1326 = vadd.f32 %v1255, %v1325
    %1327 = vmatprep.mubr.bf16.mxu0 0
    %1328 = vmatmul.mubr.bf16.gmra.mrb[0].mxu0 %v1277
    %v1329 = vpop.f32.mrb[0].mxu0
    %v1330 = vadd.f32 %v1259, %v1329
    %v1331 = vpop.f32.mrb[0].mxu0
    %v1332 = vadd.f32 %v1261, %v1331
    %v1333 = vpop.f32.mrb[0].mxu0
    %v1334 = vpop.f32.mrb[0].mxu0
    %1335 = vdwg.mxu0
    %v1336 = vld [vmem:[#allocation2 + $0x98] sm:$0xf]
    %v1337 = vld [vmem:[#allocation2 + $0x9c] sm:$0xf]
    %v1338 = vld [vmem:[#allocation2 + $0xa0] sm:$0xf]
    %v1342 = vunpack.c.l.b16 %v1336
    %v1343 = vunpack.c.l.b16 %v1337
    %v1344 = vunpack.c.l.b16 %v1338
    %v1345 = vpack.c.b16 %v1343, %v1342
    %v1346 = vpack.c.b16 %v1344, %v1344
    %v1348 = vsel %vm1201, %v1345, 0
    %v1351 = vsel %vm1201, %v1346, 0
    %v1354 = vsel %vm611, %v1185, 0
    %v1357 = vsel %vm611, %v1186, 0
    %1359 = vmatprep.subr.bf16.mxu0 %v1184
    %1360 = vmatpush1.bf16.msra.mxu0 %v1183
    %1361 = vmatprep.subr.bf16.mxu0 %v1357
    %1362 = vmatpush1.bf16.msra.mxu0 %v1354
    %1363 = vmatprep.subr.bf16.mxu0 0
    %1364 = vmatpush1.bf16.msra.mxu0 0
    %1365 = vmatprep.subr.bf16.mxu0 0
    %1366 = vmatpush1.bf16.msra.mxu0 0
    %1367 = vmatprep.subr.bf16.mxu0 0
    %1368 = vmatpush1.bf16.msra.mxu0 0
    %1369 = vmatprep.subr.bf16.mxu0 0
    %1370 = vmatpush1.bf16.msra.mxu0 0
    %1371 = vmatprep.subr.bf16.mxu0 0
    %1372 = vmatpush1.bf16.msra.mxu0 0
    %1373 = vmatprep.subr.bf16.mxu0 0
    %1374 = vmatpush1.bf16.msra.mxu0 0
    %1375 = vmatprep.subr.bf16.mxu0 0
    %1376 = vmatpush1.bf16.msra.mxu0 0
    %1377 = vmatprep.subr.bf16.mxu0 0
    %1378 = vmatpush1.bf16.msra.mxu0 0
    %1379 = vmatprep.subr.bf16.mxu0 0
    %1380 = vmatpush1.bf16.msra.mxu0 0
    %1381 = vmatprep.subr.bf16.mxu0 0
    %1382 = vmatpush1.bf16.msra.mxu0 0
    %1383 = vmatprep.subr.bf16.mxu0 0
    %1384 = vmatpush1.bf16.msra.mxu0 0
    %1385 = vmatprep.subr.bf16.mxu0 0
    %1386 = vmatpush1.bf16.msra.mxu0 0
    %1387 = vmatprep.subr.bf16.mxu0 0
    %1388 = vmatpush1.bf16.msra.mxu0 0
    %1389 = vmatprep.subr.bf16.mxu0 0
    %1390 = vmatpush1.bf16.msra.mxu0 0
    %1391 = vmatprep.mubr.bf16.mxu0 0
    %1392 = vmatmul.mubr.bf16.gmra.mrb[0].mxu0 %v1348
    %v1393 = vpop.f32.mrb[0].mxu0
    %v1394 = vadd.f32 0.0, %v1393
    %v1395 = vpop.f32.mrb[0].mxu0
    %v1396 = vadd.f32 0.0, %v1395
    %v1397 = vpop.f32.mrb[0].mxu0
    %v1398 = vadd.f32 0.0, %v1397
    %v1399 = vpop.f32.mrb[0].mxu0
    %v1400 = vadd.f32 0.0, %v1399
    %1401 = vmatprep.mubr.bf16.mxu0 0
    %1402 = vmatmul.mubr.bf16.gmra.mrb[0].mxu0 %v1351
    %v1403 = vpop.f32.mrb[0].mxu0
    %v1404 = vadd.f32 0.0, %v1403
    %v1405 = vpop.f32.mrb[0].mxu0
    %v1406 = vadd.f32 0.0, %v1405
    %v1407 = vpop.f32.mrb[0].mxu0
    %v1408 = vpop.f32.mrb[0].mxu0
    %1409 = vdwg.mxu0
    %v1410 = vadd.f32 %v1320, %v1394
    %v1411 = vadd.f32 %v1322, %v1396
    %v1412 = vadd.f32 %v1324, %v1398
    %v1413 = vadd.f32 %v1326, %v1400
    %v1414 = vadd.f32 %v1330, %v1404
    %v1415 = vadd.f32 %v1332, %v1406
    %v1416 = vadd.f32 %v1410, %v1411
    %1417 = vadd.xlane.f32.xlu0 %v1416
    %v1418 = vpop.xlane.xlu0 %1417
    %v1419 = vadd.f32 %v1412, %v1413
    %1420 = vadd.xlane.f32.xlu0 %v1419
    %v1421 = vpop.xlane.xlu0 %1420
    %v1422 = vadd.f32 %v1414, %v1415
    %1423 = vadd.xlane.f32.xlu0 %v1422
    %v1424 = vpop.xlane.xlu0 %1423
    %v1425 = vmul.f32 %v1418, %v285
    %v1426 = vmul.f32 %v1421, %v285
    %v1427 = vmul.f32 %v1424, %v285
    %v1428 = vmul.f32 %v1410, %v1410
    %v1429 = vmul.f32 %v1411, %v1411
    %v1430 = vmul.f32 %v1412, %v1412
    %v1431 = vmul.f32 %v1413, %v1413
    %v1432 = vmul.f32 %v1414, %v1414
    %v1433 = vmul.f32 %v1415, %v1415
    %v1434 = vadd.f32 %v1428, %v1429
    %1435 = vadd.xlane.f32.xlu0 %v1434
    %v1436 = vpop.xlane.xlu0 %1435
    %v1437 = vadd.f32 %v1430, %v1431
    %1438 = vadd.xlane.f32.xlu0 %v1437
    %v1439 = vpop.xlane.xlu0 %1438
    %v1440 = vadd.f32 %v1432, %v1433
    %1441 = vadd.xlane.f32.xlu0 %v1440
    %v1442 = vpop.xlane.xlu0 %1441
    %v1443 = vmul.f32 %v1436, %v285
    %v1444 = vmul.f32 %v1439, %v285
    %v1445 = vmul.f32 %v1442, %v285
    %v1446 = vmul.f32 %v1425, %v1425
    %v1447 = vmul.f32 %v1426, %v1426
    %v1448 = vmul.f32 %v1427, %v1427
    %v1449 = vsub.f32 %v1443, %v1446
    %v1450 = vsub.f32 %v1444, %v1447
    %v1451 = vsub.f32 %v1445, %v1448
    %v1452 = vmax.f32 %v1449, 0.0
    %v1453 = vmax.f32 %v1450, 0.0
    %v1454 = vmax.f32 %v1451, 0.0
    %v1455 = vld [vmem:[%s2 + $0x80] sm:$0xff]
    %v1456 = vld [vmem:[%s2 + $0x88] sm:$0xff]
    %v1457 = vld [vmem:[%s2 + $0x90] sm:$0xff]
    %v1458 = vadd.f32 %v1452, 1e-05
    %v1459 = vadd.f32 %v1453, 1e-05
    %v1460 = vadd.f32 %v1454, 1e-05
    %v1461 = vrsqrt.pop %v1458
    %v1462 = vrsqrt.pop %v1459
    %v1463 = vrsqrt.pop %v1460
    %v1464 = vmul.f32 %v1455, %v1461
    %v1465 = vmul.f32 %v1456, %v1462
    %v1466 = vmul.f32 %v1457, %v1463
    %v1467 = vld [vmem:[%s2 + $0x98] sm:$0xff]
    %v1468 = vld [vmem:[%s2 + $0xa0] sm:$0xff]
    %v1469 = vld [vmem:[%s2 + $0xa8] sm:$0xff]
    %v1470 = vmul.f32 %v1425, %v1464
    %v1471 = vmul.f32 %v1426, %v1465
    %v1472 = vmul.f32 %v1427, %v1466
    %v1473 = vsub.f32 %v1467, %v1470
    %v1474 = vsub.f32 %v1468, %v1471
    %v1475 = vsub.f32 %v1469, %v1472
    %1477 = vset.pattern.permute.xlu0 0
    %1478 = vperm.xlu0 %1477, %v1464
    %v1479 = vpop.permute.xlu0 %1478
    %1482 = vset.pattern.permute.xlu0 0
    %1483 = vperm.xlu0 %1482, %v1465
    %v1484 = vpop.permute.xlu0 %1483
    %1487 = vset.pattern.permute.xlu0 0
    %1488 = vperm.xlu0 %1487, %v1466
    %v1489 = vpop.permute.xlu0 %1488
    %v1491 = vmul.f32 %v1410, %v1479
    %v1492 = vmul.f32 %v1411, %v1479
    %v1493 = vmul.f32 %v1412, %v1484
    %v1494 = vmul.f32 %v1413, %v1484
    %v1495 = vmul.f32 %v1414, %v1489
    %v1496 = vmul.f32 %v1415, %v1489
    %1498 = vset.pattern.permute.xlu0 0
    %1499 = vperm.xlu0 %1498, %v1473
    %v1500 = vpop.permute.xlu0 %1499
    %1503 = vset.pattern.permute.xlu0 0
    %1504 = vperm.xlu0 %1503, %v1474
    %v1505 = vpop.permute.xlu0 %1504
    %1508 = vset.pattern.permute.xlu0 0
    %1509 = vperm.xlu0 %1508, %v1475
    %v1510 = vpop.permute.xlu0 %1509
    %v1512 = vadd.f32 %v1491, %v1500
    %v1513 = vadd.f32 %v1492, %v1500
    %v1514 = vadd.f32 %v1493, %v1505
    %v1515 = vadd.f32 %v1494, %v1505
    %v1516 = vadd.f32 %v1495, %v1510
    %v1517 = vadd.f32 %v1496, %v1510
    %v1518 = vtanh.pop %v1512
    %v1519 = vtanh.pop %v1513
    %v1520 = vtanh.pop %v1514
    %v1521 = vtanh.pop %v1515
    %v1522 = vtanh.pop %v1516
    %v1523 = vtanh.pop %v1517
    %1524 = vrot.lane.b32.xlu0 %v1518, 1
    %v1525 = vpop.permute.xlu0 %1524
    %1526 = vrot.lane.b32.xlu0 %v1520, 1
    %v1527 = vpop.permute.xlu0 %1526
    %1528 = vrot.lane.b32.xlu0 %v1522, 1
    %v1529 = vpop.permute.xlu0 %1528
    %1530 = vrot.lane.b32.xlu0 %v1519, 1
    %v1531 = vpop.permute.xlu0 %1530
    %1532 = vrot.lane.b32.xlu0 %v1521, 1
    %v1533 = vpop.permute.xlu0 %1532
    %1534 = vrot.lane.b32.xlu0 %v1523, 1
    %v1535 = vpop.permute.xlu0 %1534
    %v1536 = vsel %vm68, %v1525, %v1531
    %v1537 = vsel %vm68, %v1527, %v1533
    %v1538 = vsel %vm68, %v1529, %v1535
    %v1539 = vsel %vm68, %v1531, %v1525
    %v1540 = vsel %vm68, %v1533, %v1527
    %v1541 = vsel %vm68, %v1535, %v1529
    %v1542 = vsel %vm73, 0.0, %v1539
    %v1543 = vsel %vm74, 0.0, %v1536
    %v1544 = vsel %vm73, 0.0, %v1540
    %v1545 = vsel %vm74, 0.0, %v1537
    %v1546 = vsel %vm73, 0.0, %v1541
    %v1547 = vsel %vm74, 0.0, %v1538
    %1548 = vrot.lane.b32.xlu0 %v1518, 127
    %v1549 = vpop.permute.xlu0 %1548
    %1550 = vrot.lane.b32.xlu0 %v1520, 127
    %v1551 = vpop.permute.xlu0 %1550
    %1552 = vrot.lane.b32.xlu0 %v1522, 127
    %v1553 = vpop.permute.xlu0 %1552
    %1554 = vrot.lane.b32.xlu0 %v1519, 127
    %v1555 = vpop.permute.xlu0 %1554
    %1556 = vrot.lane.b32.xlu0 %v1521, 127
    %v1557 = vpop.permute.xlu0 %1556
    %1558 = vrot.lane.b32.xlu0 %v1523, 127
    %v1559 = vpop.permute.xlu0 %1558
    %v1560 = vsel %vm81, %v1549, %v1555
    %v1561 = vsel %vm81, %v1551, %v1557
    %v1562 = vsel %vm81, %v1553, %v1559
    %v1563 = vsel %vm81, %v1555, %v1549
    %v1564 = vsel %vm81, %v1557, %v1551
    %v1565 = vsel %vm81, %v1559, %v1553
    %v1566 = vsel %vm86, 0.0, %v1560
    %v1567 = vsel %vm87, 0.0, %v1563
    %v1568 = vsel %vm86, 0.0, %v1561
    %v1569 = vsel %vm87, 0.0, %v1564
    %v1570 = vsel %vm86, 0.0, %v1562
    %v1571 = vsel %vm87, 0.0, %v1565
    %v1572 = vpack.c.bf16 %v1544, %v1542
    %v1573 = vpack.c.bf16 %v1545, %v1543
    %v1574 = vpack.c.bf16 %v1546, %v1546
    %v1575 = vpack.c.bf16 %v1547, %v1547
    %v1576 = vpack.c.bf16 %v1520, %v1518
    %v1577 = vpack.c.bf16 %v1521, %v1519
    %v1578 = vpack.c.bf16 %v1522, %v1522
    %v1579 = vpack.c.bf16 %v1523, %v1523
    %v1580 = vpack.c.bf16 %v1568, %v1566
    %v1581 = vpack.c.bf16 %v1569, %v1567
    %v1582 = vpack.c.bf16 %v1570, %v1570
    %v1583 = vpack.c.bf16 %v1571, %v1571
    %v1584 = vld [vmem:[#allocation2 + $0xa8] sm:$0xf]
    %v1585 = vld [vmem:[#allocation2 + $0xac] sm:$0xf]
    %v1586 = vld [vmem:[#allocation2 + $0xb0] sm:$0xf]
    %v1587 = vld [vmem:[#allocation2 + $0xb8] sm:$0xf]
    %v1588 = vld [vmem:[#allocation2 + $0xbc] sm:$0xf]
    %v1589 = vld [vmem:[#allocation2 + $0xc0] sm:$0xf]
    %v1593 = vunpack.c.l.b16 %v1587
    %v1594 = vunpack.c.l.b16 %v1588
    %v1595 = vunpack.c.l.b16 %v1589
    %v1596 = vpack.c.b16 %v1594, %v1593
    %v1597 = vpack.c.b16 %v1595, %v1595
    %v1599 = vsel %vm1201, %v1596, 0
    %v1602 = vsel %vm1201, %v1597, 0
    %v1605 = vsel %vm611, %v1578, 0
    %v1608 = vsel %vm611, %v1579, 0
    %1610 = vmatprep.subr.bf16.mxu0 %v1577
    %1611 = vmatpush1.bf16.msra.mxu0 %v1576
    %1612 = vmatprep.subr.bf16.mxu0 %v1608
    %1613 = vmatpush1.bf16.msra.mxu0 %v1605
    %1614 = vmatprep.subr.bf16.mxu0 0
    %1615 = vmatpush1.bf16.msra.mxu0 0
    %1616 = vmatprep.subr.bf16.mxu0 0
    %1617 = vmatpush1.bf16.msra.mxu0 0
    %1618 = vmatprep.subr.bf16.mxu0 0
    %1619 = vmatpush1.bf16.msra.mxu0 0
    %1620 = vmatprep.subr.bf16.mxu0 0
    %1621 = vmatpush1.bf16.msra.mxu0 0
    %1622 = vmatprep.subr.bf16.mxu0 0
    %1623 = vmatpush1.bf16.msra.mxu0 0
    %1624 = vmatprep.subr.bf16.mxu0 0
    %1625 = vmatpush1.bf16.msra.mxu0 0
    %1626 = vmatprep.subr.bf16.mxu0 0
    %1627 = vmatpush1.bf16.msra.mxu0 0
    %1628 = vmatprep.subr.bf16.mxu0 0
    %1629 = vmatpush1.bf16.msra.mxu0 0
    %1630 = vmatprep.subr.bf16.mxu0 0
    %1631 = vmatpush1.bf16.msra.mxu0 0
    %1632 = vmatprep.subr.bf16.mxu0 0
    %1633 = vmatpush1.bf16.msra.mxu0 0
    %1634 = vmatprep.subr.bf16.mxu0 0
    %1635 = vmatpush1.bf16.msra.mxu0 0
    %1636 = vmatprep.subr.bf16.mxu0 0
    %1637 = vmatpush1.bf16.msra.mxu0 0
    %1638 = vmatprep.subr.bf16.mxu0 0
    %1639 = vmatpush1.bf16.msra.mxu0 0
    %1640 = vmatprep.subr.bf16.mxu0 0
    %1641 = vmatpush1.bf16.msra.mxu0 0
    %1642 = vmatprep.mubr.bf16.mxu0 0
    %1643 = vmatmul.mubr.bf16.gmra.mrb[0].mxu0 %v1599
    %v1644 = vpop.f32.mrb[0].mxu0
    %v1645 = vadd.f32 0.0, %v1644
    %v1646 = vpop.f32.mrb[0].mxu0
    %v1647 = vadd.f32 0.0, %v1646
    %v1648 = vpop.f32.mrb[0].mxu0
    %v1649 = vadd.f32 0.0, %v1648
    %v1650 = vpop.f32.mrb[0].mxu0
    %v1651 = vadd.f32 0.0, %v1650
    %1652 = vmatprep.mubr.bf16.mxu0 0
    %1653 = vmatmul.mubr.bf16.gmra.mrb[0].mxu0 %v1602
    %v1654 = vpop.f32.mrb[0].mxu0
    %v1655 = vadd.f32 0.0, %v1654
    %v1656 = vpop.f32.mrb[0].mxu0
    %v1657 = vadd.f32 0.0, %v1656
    %v1658 = vpop.f32.mrb[0].mxu0
    %v1659 = vpop.f32.mrb[0].mxu0
    %1660 = vdwg.mxu0
    %v1664 = vunpack.c.l.b16 %v1584
    %v1665 = vunpack.c.l.b16 %v1585
    %v1666 = vunpack.c.l.b16 %v1586
    %v1667 = vpack.c.b16 %v1665, %v1664
    %v1668 = vpack.c.b16 %v1666, %v1666
    %v1670 = vsel %vm1201, %v1667, 0
    %v1673 = vsel %vm1201, %v1668, 0
    %v1676 = vsel %vm611, %v1574, 0
    %v1679 = vsel %vm611, %v1575, 0
    %1681 = vmatprep.subr.bf16.mxu0 %v1573
    %1682 = vmatpush1.bf16.msra.mxu0 %v1572
    %1683 = vmatprep.subr.bf16.mxu0 %v1679
    %1684 = vmatpush1.bf16.msra.mxu0 %v1676
    %1685 = vmatprep.subr.bf16.mxu0 0
    %1686 = vmatpush1.bf16.msra.mxu0 0
    %1687 = vmatprep.subr.bf16.mxu0 0
    %1688 = vmatpush1.bf16.msra.mxu0 0
    %1689 = vmatprep.subr.bf16.mxu0 0
    %1690 = vmatpush1.bf16.msra.mxu0 0
    %1691 = vmatprep.subr.bf16.mxu0 0
    %1692 = vmatpush1.bf16.msra.mxu0 0
    %1693 = vmatprep.subr.bf16.mxu0 0
    %1694 = vmatpush1.bf16.msra.mxu0 0
    %1695 = vmatprep.subr.bf16.mxu0 0
    %1696 = vmatpush1.bf16.msra.mxu0 0
    %1697 = vmatprep.subr.bf16.mxu0 0
    %1698 = vmatpush1.bf16.msra.mxu0 0
    %1699 = vmatprep.subr.bf16.mxu0 0
    %1700 = vmatpush1.bf16.msra.mxu0 0
    %1701 = vmatprep.subr.bf16.mxu0 0
    %1702 = vmatpush1.bf16.msra.mxu0 0
    %1703 = vmatprep.subr.bf16.mxu0 0
    %1704 = vmatpush1.bf16.msra.mxu0 0
    %1705 = vmatprep.subr.bf16.mxu0 0
    %1706 = vmatpush1.bf16.msra.mxu0 0
    %1707 = vmatprep.subr.bf16.mxu0 0
    %1708 = vmatpush1.bf16.msra.mxu0 0
    %1709 = vmatprep.subr.bf16.mxu0 0
    %1710 = vmatpush1.bf16.msra.mxu0 0
    %1711 = vmatprep.subr.bf16.mxu0 0
    %1712 = vmatpush1.bf16.msra.mxu0 0
    %1713 = vmatprep.mubr.bf16.mxu0 0
    %1714 = vmatmul.mubr.bf16.gmra.mrb[0].mxu0 %v1670
    %v1715 = vpop.f32.mrb[0].mxu0
    %v1716 = vadd.f32 %v1645, %v1715
    %v1717 = vpop.f32.mrb[0].mxu0
    %v1718 = vadd.f32 %v1647, %v1717
    %v1719 = vpop.f32.mrb[0].mxu0
    %v1720 = vadd.f32 %v1649, %v1719
    %v1721 = vpop.f32.mrb[0].mxu0
    %v1722 = vadd.f32 %v1651, %v1721
    %1723 = vmatprep.mubr.bf16.mxu0 0
    %1724 = vmatmul.mubr.bf16.gmra.mrb[0].mxu0 %v1673
    %v1725 = vpop.f32.mrb[0].mxu0
    %v1726 = vadd.f32 %v1655, %v1725
    %v1727 = vpop.f32.mrb[0].mxu0
    %v1728 = vadd.f32 %v1657, %v1727
    %v1729 = vpop.f32.mrb[0].mxu0
    %v1730 = vpop.f32.mrb[0].mxu0
    %1731 = vdwg.mxu0
    %v1732 = vld [vmem:[#allocation2 + $0xc8] sm:$0xf]
    %v1733 = vld [vmem:[#allocation2 + $0xcc] sm:$0xf]
    %v1734 = vld [vmem:[#allocation2 + $0xd0] sm:$0xf]
    %v1738 = vunpack.c.l.b16 %v1732
    %v1739 = vunpack.c.l.b16 %v1733
    %v1740 = vunpack.c.l.b16 %v1734
    %v1741 = vpack.c.b16 %v1739, %v1738
    %v1742 = vpack.c.b16 %v1740, %v1740
    %v1744 = vsel %vm1201, %v1741, 0
    %v1747 = vsel %vm1201, %v1742, 0
    %v1750 = vsel %vm611, %v1582, 0
    %v1753 = vsel %vm611, %v1583, 0
    %1755 = vmatprep.subr.bf16.mxu0 %v1581
    %1756 = vmatpush1.bf16.msra.mxu0 %v1580
    %1757 = vmatprep.subr.bf16.mxu0 %v1753
    %1758 = vmatpush1.bf16.msra.mxu0 %v1750
    %1759 = vmatprep.subr.bf16.mxu0 0
    %1760 = vmatpush1.bf16.msra.mxu0 0
    %1761 = vmatprep.subr.bf16.mxu0 0
    %1762 = vmatpush1.bf16.msra.mxu0 0
    %1763 = vmatprep.subr.bf16.mxu0 0
    %1764 = vmatpush1.bf16.msra.mxu0 0
    %1765 = vmatprep.subr.bf16.mxu0 0
    %1766 = vmatpush1.bf16.msra.mxu0 0
    %1767 = vmatprep.subr.bf16.mxu0 0
    %1768 = vmatpush1.bf16.msra.mxu0 0
    %1769 = vmatprep.subr.bf16.mxu0 0
    %1770 = vmatpush1.bf16.msra.mxu0 0
    %1771 = vmatprep.subr.bf16.mxu0 0
    %1772 = vmatpush1.bf16.msra.mxu0 0
    %1773 = vmatprep.subr.bf16.mxu0 0
    %1774 = vmatpush1.bf16.msra.mxu0 0
    %1775 = vmatprep.subr.bf16.mxu0 0
    %1776 = vmatpush1.bf16.msra.mxu0 0
    %1777 = vmatprep.subr.bf16.mxu0 0
    %1778 = vmatpush1.bf16.msra.mxu0 0
    %1779 = vmatprep.subr.bf16.mxu0 0
    %1780 = vmatpush1.bf16.msra.mxu0 0
    %1781 = vmatprep.subr.bf16.mxu0 0
    %1782 = vmatpush1.bf16.msra.mxu0 0
    %1783 = vmatprep.subr.bf16.mxu0 0
    %1784 = vmatpush1.bf16.msra.mxu0 0
    %1785 = vmatprep.subr.bf16.mxu0 0
    %1786 = vmatpush1.bf16.msra.mxu0 0
    %1787 = vmatprep.mubr.bf16.mxu0 0
    %1788 = vmatmul.mubr.bf16.gmra.mrb[0].mxu0 %v1744
    %v1789 = vpop.f32.mrb[0].mxu0
    %v1790 = vadd.f32 0.0, %v1789
    %v1791 = vpop.f32.mrb[0].mxu0
    %v1792 = vadd.f32 0.0, %v1791
    %v1793 = vpop.f32.mrb[0].mxu0
    %v1794 = vadd.f32 0.0, %v1793
    %v1795 = vpop.f32.mrb[0].mxu0
    %v1796 = vadd.f32 0.0, %v1795
    %1797 = vmatprep.mubr.bf16.mxu0 0
    %1798 = vmatmul.mubr.bf16.gmra.mrb[0].mxu0 %v1747
    %v1799 = vpop.f32.mrb[0].mxu0
    %v1800 = vadd.f32 0.0, %v1799
    %v1801 = vpop.f32.mrb[0].mxu0
    %v1802 = vadd.f32 0.0, %v1801
    %v1803 = vpop.f32.mrb[0].mxu0
    %v1804 = vpop.f32.mrb[0].mxu0
    %1805 = vdwg.mxu0
    %v1806 = vadd.f32 %v1716, %v1790
    %v1807 = vadd.f32 %v1718, %v1792
    %v1808 = vadd.f32 %v1720, %v1794
    %v1809 = vadd.f32 %v1722, %v1796
    %v1810 = vadd.f32 %v1726, %v1800
    %v1811 = vadd.f32 %v1728, %v1802
    %v1812 = vld [vmem:[#allocation2 + $0xd8] sm:$0xf]
    %v1813 = vld [vmem:[#allocation2 + $0xdc] sm:$0xf]
    %v1814 = vld [vmem:[#allocation2 + $0xe0] sm:$0xf]
    %v1818 = vunpack.c.l.b16 %v1812
    %v1819 = vunpack.c.l.b16 %v1813
    %v1820 = vunpack.c.l.b16 %v1814
    %v1821 = vpack.c.b16 %v1819, %v1818
    %v1822 = vpack.c.b16 %v1820, %v1820
    %v1824 = vsel %vm1201, %v1821, 0
    %v1827 = vsel %vm1201, %v1822, 0
    %1829 = vmatprep.subr.bf16.mxu0 %v1176
    %1830 = vmatpush1.bf16.msra.mxu0 %v1175
    %1831 = vmatprep.subr.bf16.mxu0 %v1283
    %1832 = vmatpush1.bf16.msra.mxu0 %v1280
    %1833 = vmatprep.subr.bf16.mxu0 0
    %1834 = vmatpush1.bf16.msra.mxu0 0
    %1835 = vmatprep.subr.bf16.mxu0 0
    %1836 = vmatpush1.bf16.msra.mxu0 0
    %1837 = vmatprep.subr.bf16.mxu0 0
    %1838 = vmatpush1.bf16.msra.mxu0 0
    %1839 = vmatprep.subr.bf16.mxu0 0
    %1840 = vmatpush1.bf16.msra.mxu0 0
    %1841 = vmatprep.subr.bf16.mxu0 0
    %1842 = vmatpush1.bf16.msra.mxu0 0
    %1843 = vmatprep.subr.bf16.mxu0 0
    %1844 = vmatpush1.bf16.msra.mxu0 0
    %1845 = vmatprep.subr.bf16.mxu0 0
    %1846 = vmatpush1.bf16.msra.mxu0 0
    %1847 = vmatprep.subr.bf16.mxu0 0
    %1848 = vmatpush1.bf16.msra.mxu0 0
    %1849 = vmatprep.subr.bf16.mxu0 0
    %1850 = vmatpush1.bf16.msra.mxu0 0
    %1851 = vmatprep.subr.bf16.mxu0 0
    %1852 = vmatpush1.bf16.msra.mxu0 0
    %1853 = vmatprep.subr.bf16.mxu0 0
    %1854 = vmatpush1.bf16.msra.mxu0 0
    %1855 = vmatprep.subr.bf16.mxu0 0
    %1856 = vmatpush1.bf16.msra.mxu0 0
    %1857 = vmatprep.subr.bf16.mxu0 0
    %1858 = vmatpush1.bf16.msra.mxu0 0
    %1859 = vmatprep.subr.bf16.mxu0 0
    %1860 = vmatpush1.bf16.msra.mxu0 0
    %1861 = vmatprep.mubr.bf16.mxu0 0
    %1862 = vmatmul.mubr.bf16.gmra.mrb[0].mxu0 %v1824
    %v1863 = vpop.f32.mrb[0].mxu0
    %v1864 = vadd.f32 0.0, %v1863
    %v1865 = vpop.f32.mrb[0].mxu0
    %v1866 = vadd.f32 0.0, %v1865
    %v1867 = vpop.f32.mrb[0].mxu0
    %v1868 = vadd.f32 0.0, %v1867
    %v1869 = vpop.f32.mrb[0].mxu0
    %v1870 = vadd.f32 0.0, %v1869
    %1871 = vmatprep.mubr.bf16.mxu0 0
    %1872 = vmatmul.mubr.bf16.gmra.mrb[0].mxu0 %v1827
    %v1873 = vpop.f32.mrb[0].mxu0
    %v1874 = vadd.f32 0.0, %v1873
    %v1875 = vpop.f32.mrb[0].mxu0
    %v1876 = vadd.f32 0.0, %v1875
    %v1877 = vpop.f32.mrb[0].mxu0
    %v1878 = vpop.f32.mrb[0].mxu0
    %1879 = vdwg.mxu0
    %v1880 = vadd.f32 %v1806, %v1864
    %v1881 = vadd.f32 %v1807, %v1866
    %v1882 = vadd.f32 %v1808, %v1868
    %v1883 = vadd.f32 %v1809, %v1870
    %v1884 = vadd.f32 %v1810, %v1874
    %v1885 = vadd.f32 %v1811, %v1876
    %v1886 = vld [vmem:[#allocation2 + $0xe8] sm:$0xf]
    %v1887 = vld [vmem:[#allocation2 + $0xec] sm:$0xf]
    %v1888 = vld [vmem:[#allocation2 + $0xf0] sm:$0xf]
    %v1892 = vunpack.c.l.b16 %v1886
    %v1893 = vunpack.c.l.b16 %v1887
    %v1894 = vunpack.c.l.b16 %v1888
    %v1895 = vpack.c.b16 %v1893, %v1892
    %v1896 = vpack.c.b16 %v1894, %v1894
    %v1898 = vsel %vm1201, %v1895, 0
    %v1901 = vsel %vm1201, %v1896, 0
    %1903 = vmatprep.subr.bf16.mxu0 %v1180
    %1904 = vmatpush1.bf16.msra.mxu0 %v1179
    %1905 = vmatprep.subr.bf16.mxu0 %v1212
    %1906 = vmatpush1.bf16.msra.mxu0 %v1209
    %1907 = vmatprep.subr.bf16.mxu0 0
    %1908 = vmatpush1.bf16.msra.mxu0 0
    %1909 = vmatprep.subr.bf16.mxu0 0
    %1910 = vmatpush1.bf16.msra.mxu0 0
    %1911 = vmatprep.subr.bf16.mxu0 0
    %1912 = vmatpush1.bf16.msra.mxu0 0
    %1913 = vmatprep.subr.bf16.mxu0 0
    %1914 = vmatpush1.bf16.msra.mxu0 0
    %1915 = vmatprep.subr.bf16.mxu0 0
    %1916 = vmatpush1.bf16.msra.mxu0 0
    %1917 = vmatprep.subr.bf16.mxu0 0
    %1918 = vmatpush1.bf16.msra.mxu0 0
    %1919 = vmatprep.subr.bf16.mxu0 0
    %1920 = vmatpush1.bf16.msra.mxu0 0
    %1921 = vmatprep.subr.bf16.mxu0 0
    %1922 = vmatpush1.bf16.msra.mxu0 0
    %1923 = vmatprep.subr.bf16.mxu0 0
    %1924 = vmatpush1.bf16.msra.mxu0 0
    %1925 = vmatprep.subr.bf16.mxu0 0
    %1926 = vmatpush1.bf16.msra.mxu0 0
    %1927 = vmatprep.subr.bf16.mxu0 0
    %1928 = vmatpush1.bf16.msra.mxu0 0
    %1929 = vmatprep.subr.bf16.mxu0 0
    %1930 = vmatpush1.bf16.msra.mxu0 0
    %1931 = vmatprep.subr.bf16.mxu0 0
    %1932 = vmatpush1.bf16.msra.mxu0 0
    %1933 = vmatprep.subr.bf16.mxu0 0
    %1934 = vmatpush1.bf16.msra.mxu0 0
    %1935 = vmatprep.mubr.bf16.mxu0 0
    %1936 = vmatmul.mubr.bf16.gmra.mrb[0].mxu0 %v1898
    %v1937 = vpop.f32.mrb[0].mxu0
    %v1938 = vadd.f32 0.0, %v1937
    %v1939 = vpop.f32.mrb[0].mxu0
    %v1940 = vadd.f32 0.0, %v1939
    %v1941 = vpop.f32.mrb[0].mxu0
    %v1942 = vadd.f32 0.0, %v1941
    %v1943 = vpop.f32.mrb[0].mxu0
    %v1944 = vadd.f32 0.0, %v1943
    %1945 = vmatprep.mubr.bf16.mxu0 0
    %1946 = vmatmul.mubr.bf16.gmra.mrb[0].mxu0 %v1901
    %v1947 = vpop.f32.mrb[0].mxu0
    %v1948 = vadd.f32 0.0, %v1947
    %v1949 = vpop.f32.mrb[0].mxu0
    %v1950 = vadd.f32 0.0, %v1949
    %v1951 = vpop.f32.mrb[0].mxu0
    %v1952 = vpop.f32.mrb[0].mxu0
    %1953 = vdwg.mxu0
    %v1954 = vadd.f32 %v1880, %v1938
    %v1955 = vadd.f32 %v1881, %v1940
    %v1956 = vadd.f32 %v1882, %v1942
    %v1957 = vadd.f32 %v1883, %v1944
    %v1958 = vadd.f32 %v1884, %v1948
    %v1959 = vadd.f32 %v1885, %v1950
    %v1960 = vld [vmem:[#allocation2 + $0xf8] sm:$0xf]
    %v1961 = vld [vmem:[#allocation2 + $0xfc] sm:$0xf]
    %v1962 = vld [vmem:[#allocation2 + $0x100] sm:$0xf]
    %v1966 = vunpack.c.l.b16 %v1960
    %v1967 = vunpack.c.l.b16 %v1961
    %v1968 = vunpack.c.l.b16 %v1962
    %v1969 = vpack.c.b16 %v1967, %v1966
    %v1970 = vpack.c.b16 %v1968, %v1968
    %v1972 = vsel %vm1201, %v1969, 0
    %v1975 = vsel %vm1201, %v1970, 0
    %1977 = vmatprep.subr.bf16.mxu0 %v1184
    %1978 = vmatpush1.bf16.msra.mxu0 %v1183
    %1979 = vmatprep.subr.bf16.mxu0 %v1357
    %1980 = vmatpush1.bf16.msra.mxu0 %v1354
    %1981 = vmatprep.subr.bf16.mxu0 0
    %1982 = vmatpush1.bf16.msra.mxu0 0
    %1983 = vmatprep.subr.bf16.mxu0 0
    %1984 = vmatpush1.bf16.msra.mxu0 0
    %1985 = vmatprep.subr.bf16.mxu0 0
    %1986 = vmatpush1.bf16.msra.mxu0 0
    %1987 = vmatprep.subr.bf16.mxu0 0
    %1988 = vmatpush1.bf16.msra.mxu0 0
    %1989 = vmatprep.subr.bf16.mxu0 0
    %1990 = vmatpush1.bf16.msra.mxu0 0
    %1991 = vmatprep.subr.bf16.mxu0 0
    %1992 = vmatpush1.bf16.msra.mxu0 0
    %1993 = vmatprep.subr.bf16.mxu0 0
    %1994 = vmatpush1.bf16.msra.mxu0 0
    %1995 = vmatprep.subr.bf16.mxu0 0
    %1996 = vmatpush1.bf16.msra.mxu0 0
    %1997 = vmatprep.subr.bf16.mxu0 0
    %1998 = vmatpush1.bf16.msra.mxu0 0
    %1999 = vmatprep.subr.bf16.mxu0 0
    %2000 = vmatpush1.bf16.msra.mxu0 0
    %2001 = vmatprep.subr.bf16.mxu0 0
    %2002 = vmatpush1.bf16.msra.mxu0 0
    %2003 = vmatprep.subr.bf16.mxu0 0
    %2004 = vmatpush1.bf16.msra.mxu0 0
    %2005 = vmatprep.subr.bf16.mxu0 0
    %2006 = vmatpush1.bf16.msra.mxu0 0
    %2007 = vmatprep.subr.bf16.mxu0 0
    %2008 = vmatpush1.bf16.msra.mxu0 0
    %2009 = vmatprep.mubr.bf16.mxu0 0
    %2010 = vmatmul.mubr.bf16.gmra.mrb[0].mxu0 %v1972
    %v2011 = vpop.f32.mrb[0].mxu0
    %v2012 = vadd.f32 0.0, %v2011
    %v2013 = vpop.f32.mrb[0].mxu0
    %v2014 = vadd.f32 0.0, %v2013
    %v2015 = vpop.f32.mrb[0].mxu0
    %v2016 = vadd.f32 0.0, %v2015
    %v2017 = vpop.f32.mrb[0].mxu0
    %v2018 = vadd.f32 0.0, %v2017
    %2019 = vmatprep.mubr.bf16.mxu0 0
    %2020 = vmatmul.mubr.bf16.gmra.mrb[0].mxu0 %v1975
    %v2021 = vpop.f32.mrb[0].mxu0
    %v2022 = vadd.f32 0.0, %v2021
    %v2023 = vpop.f32.mrb[0].mxu0
    %v2024 = vadd.f32 0.0, %v2023
    %v2025 = vpop.f32.mrb[0].mxu0
    %v2026 = vpop.f32.mrb[0].mxu0
    %2027 = vdwg.mxu0
    %v2028 = vadd.f32 %v1954, %v2012
    %v2029 = vadd.f32 %v1955, %v2014
    %v2030 = vadd.f32 %v1956, %v2016
    %v2031 = vadd.f32 %v1957, %v2018
    %v2032 = vadd.f32 %v1958, %v2022
    %v2033 = vadd.f32 %v1959, %v2024
    %v2034 = vadd.f32 %v2028, %v2029
    %2035 = vadd.xlane.f32.xlu0 %v2034
    %v2036 = vpop.xlane.xlu0 %2035
    %v2037 = vadd.f32 %v2030, %v2031
    %2038 = vadd.xlane.f32.xlu0 %v2037
    %v2039 = vpop.xlane.xlu0 %2038
    %v2040 = vadd.f32 %v2032, %v2033
    %2041 = vadd.xlane.f32.xlu0 %v2040
    %v2042 = vpop.xlane.xlu0 %2041
    %v2043 = vmul.f32 %v2036, %v285
    %v2044 = vmul.f32 %v2039, %v285
    %v2045 = vmul.f32 %v2042, %v285
    %v2046 = vmul.f32 %v2028, %v2028
    %v2047 = vmul.f32 %v2029, %v2029
    %v2048 = vmul.f32 %v2030, %v2030
    %v2049 = vmul.f32 %v2031, %v2031
    %v2050 = vmul.f32 %v2032, %v2032
    %v2051 = vmul.f32 %v2033, %v2033
    %v2052 = vadd.f32 %v2046, %v2047
    %2053 = vadd.xlane.f32.xlu0 %v2052
    %v2054 = vpop.xlane.xlu0 %2053
    %v2055 = vadd.f32 %v2048, %v2049
    %2056 = vadd.xlane.f32.xlu0 %v2055
    %v2057 = vpop.xlane.xlu0 %2056
    %v2058 = vadd.f32 %v2050, %v2051
    %2059 = vadd.xlane.f32.xlu0 %v2058
    %v2060 = vpop.xlane.xlu0 %2059
    %v2061 = vmul.f32 %v2054, %v285
    %v2062 = vmul.f32 %v2057, %v285
    %v2063 = vmul.f32 %v2060, %v285
    %v2064 = vmul.f32 %v2043, %v2043
    %v2065 = vmul.f32 %v2044, %v2044
    %v2066 = vmul.f32 %v2045, %v2045
    %v2067 = vsub.f32 %v2061, %v2064
    %v2068 = vsub.f32 %v2062, %v2065
    %v2069 = vsub.f32 %v2063, %v2066
    %v2070 = vmax.f32 %v2067, 0.0
    %v2071 = vmax.f32 %v2068, 0.0
    %v2072 = vmax.f32 %v2069, 0.0
    %v2073 = vld [vmem:[%s2 + $0xb0] sm:$0xff]
    %v2074 = vld [vmem:[%s2 + $0xb8] sm:$0xff]
    %v2075 = vld [vmem:[%s2 + $0xc0] sm:$0xff]
    %v2076 = vadd.f32 %v2070, 1e-05
    %v2077 = vadd.f32 %v2071, 1e-05
    %v2078 = vadd.f32 %v2072, 1e-05
    %v2079 = vrsqrt.pop %v2076
    %v2080 = vrsqrt.pop %v2077
    %v2081 = vrsqrt.pop %v2078
    %v2082 = vmul.f32 %v2073, %v2079
    %v2083 = vmul.f32 %v2074, %v2080
    %v2084 = vmul.f32 %v2075, %v2081
    %v2085 = vld [vmem:[%s2 + $0xc8] sm:$0xff]
    %v2086 = vld [vmem:[%s2 + $0xd0] sm:$0xff]
    %v2087 = vld [vmem:[%s2 + $0xd8] sm:$0xff]
    %v2088 = vmul.f32 %v2043, %v2082
    %v2089 = vmul.f32 %v2044, %v2083
    %v2090 = vmul.f32 %v2045, %v2084
    %v2091 = vsub.f32 %v2085, %v2088
    %v2092 = vsub.f32 %v2086, %v2089
    %v2093 = vsub.f32 %v2087, %v2090
    %2095 = vset.pattern.permute.xlu0 0
    %2096 = vperm.xlu0 %2095, %v2082
    %v2097 = vpop.permute.xlu0 %2096
    %2100 = vset.pattern.permute.xlu0 0
    %2101 = vperm.xlu0 %2100, %v2083
    %v2102 = vpop.permute.xlu0 %2101
    %2105 = vset.pattern.permute.xlu0 0
    %2106 = vperm.xlu0 %2105, %v2084
    %v2107 = vpop.permute.xlu0 %2106
    %v2109 = vmul.f32 %v2028, %v2097
    %v2110 = vmul.f32 %v2029, %v2097
    %v2111 = vmul.f32 %v2030, %v2102
    %v2112 = vmul.f32 %v2031, %v2102
    %v2113 = vmul.f32 %v2032, %v2107
    %v2114 = vmul.f32 %v2033, %v2107
    %2116 = vset.pattern.permute.xlu0 0
    %2117 = vperm.xlu0 %2116, %v2091
    %v2118 = vpop.permute.xlu0 %2117
    %2121 = vset.pattern.permute.xlu0 0
    %2122 = vperm.xlu0 %2121, %v2092
    %v2123 = vpop.permute.xlu0 %2122
    %2126 = vset.pattern.permute.xlu0 0
    %2127 = vperm.xlu0 %2126, %v2093
    %v2128 = vpop.permute.xlu0 %2127
    %v2130 = vadd.f32 %v2109, %v2118
    %v2131 = vadd.f32 %v2110, %v2118
    %v2132 = vadd.f32 %v2111, %v2123
    %v2133 = vadd.f32 %v2112, %v2123
    %v2134 = vadd.f32 %v2113, %v2128
    %v2135 = vadd.f32 %v2114, %v2128
    %v2136 = vmul.f32 %v2130, 0.1
    %v2137 = vmul.f32 %v2131, 0.1
    %v2138 = vmul.f32 %v2132, 0.1
    %v2139 = vmul.f32 %v2133, 0.1
    %v2140 = vmul.f32 %v2134, 0.1
    %v2141 = vmul.f32 %v2135, 0.1
    %v2142 = vmax.f32 %v2130, %v2136
    %v2143 = vmax.f32 %v2131, %v2137
    %v2144 = vmax.f32 %v2132, %v2138
    %v2145 = vmax.f32 %v2133, %v2139
    %v2146 = vmax.f32 %v2134, %v2140
    %v2147 = vmax.f32 %v2135, %v2141
    %2148 = vrot.lane.b32.xlu0 %v2142, 1
    %v2149 = vpop.permute.xlu0 %2148
    %2150 = vrot.lane.b32.xlu0 %v2144, 1
    %v2151 = vpop.permute.xlu0 %2150
    %2152 = vrot.lane.b32.xlu0 %v2146, 1
    %v2153 = vpop.permute.xlu0 %2152
    %2154 = vrot.lane.b32.xlu0 %v2143, 1
    %v2155 = vpop.permute.xlu0 %2154
    %2156 = vrot.lane.b32.xlu0 %v2145, 1
    %v2157 = vpop.permute.xlu0 %2156
    %2158 = vrot.lane.b32.xlu0 %v2147, 1
    %v2159 = vpop.permute.xlu0 %2158
    %v2160 = vsel %vm68, %v2149, %v2155
    %v2161 = vsel %vm68, %v2151, %v2157
    %v2162 = vsel %vm68, %v2153, %v2159
    %v2163 = vsel %vm68, %v2155, %v2149
    %v2164 = vsel %vm68, %v2157, %v2151
    %v2165 = vsel %vm68, %v2159, %v2153
    %v2166 = vsel %vm73, 0.0, %v2163
    %v2167 = vsel %vm74, 0.0, %v2160
    %v2168 = vsel %vm73, 0.0, %v2164
    %v2169 = vsel %vm74, 0.0, %v2161
    %v2170 = vsel %vm73, 0.0, %v2165
    %v2171 = vsel %vm74, 0.0, %v2162
    %2172 = vrot.lane.b32.xlu0 %v2142, 127
    %v2173 = vpop.permute.xlu0 %2172
    %2174 = vrot.lane.b32.xlu0 %v2144, 127
    %v2175 = vpop.permute.xlu0 %2174
    %2176 = vrot.lane.b32.xlu0 %v2146, 127
    %v2177 = vpop.permute.xlu0 %2176
    %2178 = vrot.lane.b32.xlu0 %v2143, 127
    %v2179 = vpop.permute.xlu0 %2178
    %2180 = vrot.lane.b32.xlu0 %v2145, 127
    %v2181 = vpop.permute.xlu0 %2180
    %2182 = vrot.lane.b32.xlu0 %v2147, 127
    %v2183 = vpop.permute.xlu0 %2182
    %v2184 = vsel %vm81, %v2173, %v2179
    %v2185 = vsel %vm81, %v2175, %v2181
    %v2186 = vsel %vm81, %v2177, %v2183
    %v2187 = vsel %vm81, %v2179, %v2173
    %v2188 = vsel %vm81, %v2181, %v2175
    %v2189 = vsel %vm81, %v2183, %v2177
    %v2190 = vsel %vm86, 0.0, %v2184
    %v2191 = vsel %vm87, 0.0, %v2187
    %v2192 = vsel %vm86, 0.0, %v2185
    %v2193 = vsel %vm87, 0.0, %v2188
    %v2194 = vsel %vm86, 0.0, %v2186
    %v2195 = vsel %vm87, 0.0, %v2189
    %v2196 = vpack.c.bf16 %v2168, %v2166
    %v2197 = vpack.c.bf16 %v2169, %v2167
    %v2198 = vpack.c.bf16 %v2170, %v2170
    %v2199 = vpack.c.bf16 %v2171, %v2171
    %v2200 = vpack.c.bf16 %v2144, %v2142
    %v2201 = vpack.c.bf16 %v2145, %v2143
    %v2202 = vpack.c.bf16 %v2146, %v2146
    %v2203 = vpack.c.bf16 %v2147, %v2147
    %v2204 = vpack.c.bf16 %v2192, %v2190
    %v2205 = vpack.c.bf16 %v2193, %v2191
    %v2206 = vpack.c.bf16 %v2194, %v2194
    %v2207 = vpack.c.bf16 %v2195, %v2195
    %v2208 = vld [vmem:[#allocation2 + $0x108] sm:$0xf]
    %v2209 = vld [vmem:[#allocation2 + $0x10c] sm:$0xf]
    %v2210 = vld [vmem:[#allocation2 + $0x110] sm:$0x3]
    %v2211 = vld [vmem:[#allocation2 + $0x118] sm:$0xf]
    %v2212 = vld [vmem:[#allocation2 + $0x11c] sm:$0xf]
    %v2213 = vld [vmem:[#allocation2 + $0x120] sm:$0x3]
    %v2217 = vunpack.c.l.b16 %v2211
    %v2218 = vunpack.c.l.b16 %v2212
    %v2219 = vunpack.c.l.b16 %v2213
    %v2220 = vpack.c.b16 %v2218, %v2217
    %v2221 = vpack.c.b16 %v2219, %v2219
    %v2223 = vsel %vm1201, %v2220, 0
    %v2226 = vsel %vm1201, %v2221, 0
    %v2229 = vsel %vm611, %v2202, 0
    %v2232 = vsel %vm611, %v2203, 0
    %2234 = vmatprep.subr.bf16.mxu0 %v2201
    %2235 = vmatpush1.bf16.msra.mxu0 %v2200
    %2236 = vmatprep.subr.bf16.mxu0 %v2232
    %2237 = vmatpush1.bf16.msra.mxu0 %v2229
    %2238 = vmatprep.subr.bf16.mxu0 0
    %2239 = vmatpush1.bf16.msra.mxu0 0
    %2240 = vmatprep.subr.bf16.mxu0 0
    %2241 = vmatpush1.bf16.msra.mxu0 0
    %2242 = vmatprep.subr.bf16.mxu0 0
    %2243 = vmatpush1.bf16.msra.mxu0 0
    %2244 = vmatprep.subr.bf16.mxu0 0
    %2245 = vmatpush1.bf16.msra.mxu0 0
    %2246 = vmatprep.subr.bf16.mxu0 0
    %2247 = vmatpush1.bf16.msra.mxu0 0
    %2248 = vmatprep.subr.bf16.mxu0 0
    %2249 = vmatpush1.bf16.msra.mxu0 0
    %2250 = vmatprep.subr.bf16.mxu0 0
    %2251 = vmatpush1.bf16.msra.mxu0 0
    %2252 = vmatprep.subr.bf16.mxu0 0
    %2253 = vmatpush1.bf16.msra.mxu0 0
    %2254 = vmatprep.subr.bf16.mxu0 0
    %2255 = vmatpush1.bf16.msra.mxu0 0
    %2256 = vmatprep.subr.bf16.mxu0 0
    %2257 = vmatpush1.bf16.msra.mxu0 0
    %2258 = vmatprep.subr.bf16.mxu0 0
    %2259 = vmatpush1.bf16.msra.mxu0 0
    %2260 = vmatprep.subr.bf16.mxu0 0
    %2261 = vmatpush1.bf16.msra.mxu0 0
    %2262 = vmatprep.subr.bf16.mxu0 0
    %2263 = vmatpush1.bf16.msra.mxu0 0
    %2264 = vmatprep.subr.bf16.mxu0 0
    %2265 = vmatpush1.bf16.msra.mxu0 0
    %2266 = vmatprep.mubr.bf16.mxu0 0
    %2267 = vmatmul.mubr.bf16.gmra.mrb[0].mxu0 %v2223
    %v2268 = vpop.f32.mrb[0].mxu0
    %v2269 = vadd.f32 0.0, %v2268
    %v2270 = vpop.f32.mrb[0].mxu0
    %v2271 = vadd.f32 0.0, %v2270
    %v2272 = vpop.f32.mrb[0].mxu0
    %v2273 = vadd.f32 0.0, %v2272
    %v2274 = vpop.f32.mrb[0].mxu0
    %v2275 = vadd.f32 0.0, %v2274
    %2276 = vmatprep.mubr.bf16.mxu0 0
    %2277 = vmatmul.mubr.bf16.gmra.mrb[0].mxu0 %v2226
    %v2278 = vpop.f32.mrb[0].mxu0
    %v2279 = vadd.f32 0.0, %v2278
    %v2280 = vpop.f32.mrb[0].mxu0
    %v2281 = vadd.f32 0.0, %v2280
    %v2282 = vpop.f32.mrb[0].mxu0
    %v2283 = vpop.f32.mrb[0].mxu0
    %2284 = vdwg.mxu0
    %v2288 = vunpack.c.l.b16 %v2208
    %v2289 = vunpack.c.l.b16 %v2209
    %v2290 = vunpack.c.l.b16 %v2210
    %v2291 = vpack.c.b16 %v2289, %v2288
    %v2292 = vpack.c.b16 %v2290, %v2290
    %v2294 = vsel %vm1201, %v2291, 0
    %v2297 = vsel %vm1201, %v2292, 0
    %v2300 = vsel %vm611, %v2198, 0
    %v2303 = vsel %vm611, %v2199, 0
    %2305 = vmatprep.subr.bf16.mxu0 %v2197
    %2306 = vmatpush1.bf16.msra.mxu0 %v2196
    %2307 = vmatprep.subr.bf16.mxu0 %v2303
    %2308 = vmatpush1.bf16.msra.mxu0 %v2300
    %2309 = vmatprep.subr.bf16.mxu0 0
    %2310 = vmatpush1.bf16.msra.mxu0 0
    %2311 = vmatprep.subr.bf16.mxu0 0
    %2312 = vmatpush1.bf16.msra.mxu0 0
    %2313 = vmatprep.subr.bf16.mxu0 0
    %2314 = vmatpush1.bf16.msra.mxu0 0
    %2315 = vmatprep.subr.bf16.mxu0 0
    %2316 = vmatpush1.bf16.msra.mxu0 0
    %2317 = vmatprep.subr.bf16.mxu0 0
    %2318 = vmatpush1.bf16.msra.mxu0 0
    %2319 = vmatprep.subr.bf16.mxu0 0
    %2320 = vmatpush1.bf16.msra.mxu0 0
    %2321 = vmatprep.subr.bf16.mxu0 0
    %2322 = vmatpush1.bf16.msra.mxu0 0
    %2323 = vmatprep.subr.bf16.mxu0 0
    %2324 = vmatpush1.bf16.msra.mxu0 0
    %2325 = vmatprep.subr.bf16.mxu0 0
    %2326 = vmatpush1.bf16.msra.mxu0 0
    %2327 = vmatprep.subr.bf16.mxu0 0
    %2328 = vmatpush1.bf16.msra.mxu0 0
    %2329 = vmatprep.subr.bf16.mxu0 0
    %2330 = vmatpush1.bf16.msra.mxu0 0
    %2331 = vmatprep.subr.bf16.mxu0 0
    %2332 = vmatpush1.bf16.msra.mxu0 0
    %2333 = vmatprep.subr.bf16.mxu0 0
    %2334 = vmatpush1.bf16.msra.mxu0 0
    %2335 = vmatprep.subr.bf16.mxu0 0
    %2336 = vmatpush1.bf16.msra.mxu0 0
    %2337 = vmatprep.mubr.bf16.mxu0 0
    %2338 = vmatmul.mubr.bf16.gmra.mrb[0].mxu0 %v2294
    %v2339 = vpop.f32.mrb[0].mxu0
    %v2340 = vadd.f32 %v2269, %v2339
    %v2341 = vpop.f32.mrb[0].mxu0
    %v2342 = vadd.f32 %v2271, %v2341
    %v2343 = vpop.f32.mrb[0].mxu0
    %v2344 = vadd.f32 %v2273, %v2343
    %v2345 = vpop.f32.mrb[0].mxu0
    %v2346 = vadd.f32 %v2275, %v2345
    %2347 = vmatprep.mubr.bf16.mxu0 0
    %2348 = vmatmul.mubr.bf16.gmra.mrb[0].mxu0 %v2297
    %v2349 = vpop.f32.mrb[0].mxu0
    %v2350 = vadd.f32 %v2279, %v2349
    %v2351 = vpop.f32.mrb[0].mxu0
    %v2352 = vadd.f32 %v2281, %v2351
    %v2353 = vpop.f32.mrb[0].mxu0
    %v2354 = vpop.f32.mrb[0].mxu0
    %2355 = vdwg.mxu0
    %v2356 = vld [vmem:[#allocation2 + $0x128] sm:$0xf]
    %v2357 = vld [vmem:[#allocation2 + $0x12c] sm:$0xf]
    %v2358 = vld [vmem:[#allocation2 + $0x130] sm:$0x3]
    %v2362 = vunpack.c.l.b16 %v2356
    %v2363 = vunpack.c.l.b16 %v2357
    %v2364 = vunpack.c.l.b16 %v2358
    %v2365 = vpack.c.b16 %v2363, %v2362
    %v2366 = vpack.c.b16 %v2364, %v2364
    %v2368 = vsel %vm1201, %v2365, 0
    %v2371 = vsel %vm1201, %v2366, 0
    %v2374 = vsel %vm611, %v2206, 0
    %v2377 = vsel %vm611, %v2207, 0
    %2379 = vmatprep.subr.bf16.mxu0 %v2205
    %2380 = vmatpush1.bf16.msra.mxu0 %v2204
    %2381 = vmatprep.subr.bf16.mxu0 %v2377
    %2382 = vmatpush1.bf16.msra.mxu0 %v2374
    %2383 = vmatprep.subr.bf16.mxu0 0
    %2384 = vmatpush1.bf16.msra.mxu0 0
    %2385 = vmatprep.subr.bf16.mxu0 0
    %2386 = vmatpush1.bf16.msra.mxu0 0
    %2387 = vmatprep.subr.bf16.mxu0 0
    %2388 = vmatpush1.bf16.msra.mxu0 0
    %2389 = vmatprep.subr.bf16.mxu0 0
    %2390 = vmatpush1.bf16.msra.mxu0 0
    %2391 = vmatprep.subr.bf16.mxu0 0
    %2392 = vmatpush1.bf16.msra.mxu0 0
    %2393 = vmatprep.subr.bf16.mxu0 0
    %2394 = vmatpush1.bf16.msra.mxu0 0
    %2395 = vmatprep.subr.bf16.mxu0 0
    %2396 = vmatpush1.bf16.msra.mxu0 0
    %2397 = vmatprep.subr.bf16.mxu0 0
    %2398 = vmatpush1.bf16.msra.mxu0 0
    %2399 = vmatprep.subr.bf16.mxu0 0
    %2400 = vmatpush1.bf16.msra.mxu0 0
    %2401 = vmatprep.subr.bf16.mxu0 0
    %2402 = vmatpush1.bf16.msra.mxu0 0
    %2403 = vmatprep.subr.bf16.mxu0 0
    %2404 = vmatpush1.bf16.msra.mxu0 0
    %2405 = vmatprep.subr.bf16.mxu0 0
    %2406 = vmatpush1.bf16.msra.mxu0 0
    %2407 = vmatprep.subr.bf16.mxu0 0
    %2408 = vmatpush1.bf16.msra.mxu0 0
    %2409 = vmatprep.subr.bf16.mxu0 0
    %2410 = vmatpush1.bf16.msra.mxu0 0
    %2411 = vmatprep.mubr.bf16.mxu0 0
    %2412 = vmatmul.mubr.bf16.gmra.mrb[0].mxu0 %v2368
    %v2413 = vpop.f32.mrb[0].mxu0
    %v2414 = vadd.f32 0.0, %v2413
    %v2415 = vpop.f32.mrb[0].mxu0
    %v2416 = vadd.f32 0.0, %v2415
    %v2417 = vpop.f32.mrb[0].mxu0
    %v2418 = vadd.f32 0.0, %v2417
    %v2419 = vpop.f32.mrb[0].mxu0
    %v2420 = vadd.f32 0.0, %v2419
    %2421 = vmatprep.mubr.bf16.mxu0 0
    %2422 = vmatmul.mubr.bf16.gmra.mrb[0].mxu0 %v2371
    %v2423 = vpop.f32.mrb[0].mxu0
    %v2424 = vadd.f32 0.0, %v2423
    %v2425 = vpop.f32.mrb[0].mxu0
    %v2426 = vadd.f32 0.0, %v2425
    %v2427 = vpop.f32.mrb[0].mxu0
    %v2428 = vpop.f32.mrb[0].mxu0
    %2429 = vdwg.mxu0
    %v2430 = vadd.f32 %v2340, %v2414
    %v2431 = vadd.f32 %v2342, %v2416
    %v2432 = vadd.f32 %v2344, %v2418
    %v2433 = vadd.f32 %v2346, %v2420
    %v2434 = vadd.f32 %v2350, %v2424
    %v2435 = vadd.f32 %v2352, %v2426
    %v2436 = vld [vmem:[#allocation2 + $0x138] sm:$0xf]
    %v2437 = vld [vmem:[#allocation2 + $0x13c] sm:$0xf]
    %v2438 = vld [vmem:[#allocation2 + $0x140] sm:$0x3]
    %v2442 = vunpack.c.l.b16 %v2436
    %v2443 = vunpack.c.l.b16 %v2437
    %v2444 = vunpack.c.l.b16 %v2438
    %v2445 = vpack.c.b16 %v2443, %v2442
    %v2446 = vpack.c.b16 %v2444, %v2444
    %v2448 = vsel %vm798, %v2445, 0
    %v2451 = vsel %vm798, %v2446, 0
    %2453 = vmatprep.subr.bf16.mxu0 %v773
    %2454 = vmatpush1.bf16.msra.mxu0 %v772
    %2455 = vmatprep.subr.bf16.mxu0 %v880
    %2456 = vmatpush1.bf16.msra.mxu0 %v877
    %2457 = vmatprep.subr.bf16.mxu0 0
    %2458 = vmatpush1.bf16.msra.mxu0 0
    %2459 = vmatprep.subr.bf16.mxu0 0
    %2460 = vmatpush1.bf16.msra.mxu0 0
    %2461 = vmatprep.subr.bf16.mxu0 0
    %2462 = vmatpush1.bf16.msra.mxu0 0
    %2463 = vmatprep.subr.bf16.mxu0 0
    %2464 = vmatpush1.bf16.msra.mxu0 0
    %2465 = vmatprep.subr.bf16.mxu0 0
    %2466 = vmatpush1.bf16.msra.mxu0 0
    %2467 = vmatprep.subr.bf16.mxu0 0
    %2468 = vmatpush1.bf16.msra.mxu0 0
    %2469 = vmatprep.subr.bf16.mxu0 0
    %2470 = vmatpush1.bf16.msra.mxu0 0
    %2471 = vmatprep.subr.bf16.mxu0 0
    %2472 = vmatpush1.bf16.msra.mxu0 0
    %2473 = vmatprep.subr.bf16.mxu0 0
    %2474 = vmatpush1.bf16.msra.mxu0 0
    %2475 = vmatprep.subr.bf16.mxu0 0
    %2476 = vmatpush1.bf16.msra.mxu0 0
    %2477 = vmatprep.subr.bf16.mxu0 0
    %2478 = vmatpush1.bf16.msra.mxu0 0
    %2479 = vmatprep.subr.bf16.mxu0 0
    %2480 = vmatpush1.bf16.msra.mxu0 0
    %2481 = vmatprep.subr.bf16.mxu0 0
    %2482 = vmatpush1.bf16.msra.mxu0 0
    %2483 = vmatprep.subr.bf16.mxu0 0
    %2484 = vmatpush1.bf16.msra.mxu0 0
    %2485 = vmatprep.mubr.bf16.mxu0 0
    %2486 = vmatmul.mubr.bf16.gmra.mrb[0].mxu0 %v2448
    %v2487 = vpop.f32.mrb[0].mxu0
    %v2488 = vadd.f32 0.0, %v2487
    %v2489 = vpop.f32.mrb[0].mxu0
    %v2490 = vadd.f32 0.0, %v2489
    %v2491 = vpop.f32.mrb[0].mxu0
    %v2492 = vadd.f32 0.0, %v2491
    %v2493 = vpop.f32.mrb[0].mxu0
    %v2494 = vadd.f32 0.0, %v2493
    %2495 = vmatprep.mubr.bf16.mxu0 0
    %2496 = vmatmul.mubr.bf16.gmra.mrb[0].mxu0 %v2451
    %v2497 = vpop.f32.mrb[0].mxu0
    %v2498 = vadd.f32 0.0, %v2497
    %v2499 = vpop.f32.mrb[0].mxu0
    %v2500 = vadd.f32 0.0, %v2499
    %v2501 = vpop.f32.mrb[0].mxu0
    %v2502 = vpop.f32.mrb[0].mxu0
    %2503 = vdwg.mxu0
    %v2504 = vadd.f32 %v2430, %v2488
    %v2505 = vadd.f32 %v2431, %v2490
    %v2506 = vadd.f32 %v2432, %v2492
    %v2507 = vadd.f32 %v2433, %v2494
    %v2508 = vadd.f32 %v2434, %v2498
    %v2509 = vadd.f32 %v2435, %v2500
    %v2510 = vld [vmem:[#allocation2 + $0x148] sm:$0xf]
    %v2511 = vld [vmem:[#allocation2 + $0x14c] sm:$0xf]
    %v2512 = vld [vmem:[#allocation2 + $0x150] sm:$0x3]
    %v2516 = vunpack.c.l.b16 %v2510
    %v2517 = vunpack.c.l.b16 %v2511
    %v2518 = vunpack.c.l.b16 %v2512
    %v2519 = vpack.c.b16 %v2517, %v2516
    %v2520 = vpack.c.b16 %v2518, %v2518
    %v2522 = vsel %vm798, %v2519, 0
    %v2525 = vsel %vm798, %v2520, 0
    %2527 = vmatprep.subr.bf16.mxu0 %v777
    %2528 = vmatpush1.bf16.msra.mxu0 %v776
    %2529 = vmatprep.subr.bf16.mxu0 %v809
    %2530 = vmatpush1.bf16.msra.mxu0 %v806
    %2531 = vmatprep.subr.bf16.mxu0 0
    %2532 = vmatpush1.bf16.msra.mxu0 0
    %2533 = vmatprep.subr.bf16.mxu0 0
    %2534 = vmatpush1.bf16.msra.mxu0 0
    %2535 = vmatprep.subr.bf16.mxu0 0
    %2536 = vmatpush1.bf16.msra.mxu0 0
    %2537 = vmatprep.subr.bf16.mxu0 0
    %2538 = vmatpush1.bf16.msra.mxu0 0
    %2539 = vmatprep.subr.bf16.mxu0 0
    %2540 = vmatpush1.bf16.msra.mxu0 0
    %2541 = vmatprep.subr.bf16.mxu0 0
    %2542 = vmatpush1.bf16.msra.mxu0 0
    %2543 = vmatprep.subr.bf16.mxu0 0
    %2544 = vmatpush1.bf16.msra.mxu0 0
    %2545 = vmatprep.subr.bf16.mxu0 0
    %2546 = vmatpush1.bf16.msra.mxu0 0
    %2547 = vmatprep.subr.bf16.mxu0 0
    %2548 = vmatpush1.bf16.msra.mxu0 0
    %2549 = vmatprep.subr.bf16.mxu0 0
    %2550 = vmatpush1.bf16.msra.mxu0 0
    %2551 = vmatprep.subr.bf16.mxu0 0
    %2552 = vmatpush1.bf16.msra.mxu0 0
    %2553 = vmatprep.subr.bf16.mxu0 0
    %2554 = vmatpush1.bf16.msra.mxu0 0
    %2555 = vmatprep.subr.bf16.mxu0 0
    %2556 = vmatpush1.bf16.msra.mxu0 0
    %2557 = vmatprep.subr.bf16.mxu0 0
    %2558 = vmatpush1.bf16.msra.mxu0 0
    %2559 = vmatprep.mubr.bf16.mxu0 0
    %2560 = vmatmul.mubr.bf16.gmra.mrb[0].mxu0 %v2522
    %v2561 = vpop.f32.mrb[0].mxu0
    %v2562 = vadd.f32 0.0, %v2561
    %v2563 = vpop.f32.mrb[0].mxu0
    %v2564 = vadd.f32 0.0, %v2563
    %v2565 = vpop.f32.mrb[0].mxu0
    %v2566 = vadd.f32 0.0, %v2565
    %v2567 = vpop.f32.mrb[0].mxu0
    %v2568 = vadd.f32 0.0, %v2567
    %2569 = vmatprep.mubr.bf16.mxu0 0
    %2570 = vmatmul.mubr.bf16.gmra.mrb[0].mxu0 %v2525
    %v2571 = vpop.f32.mrb[0].mxu0
    %v2572 = vadd.f32 0.0, %v2571
    %v2573 = vpop.f32.mrb[0].mxu0
    %v2574 = vadd.f32 0.0, %v2573
    %v2575 = vpop.f32.mrb[0].mxu0
    %v2576 = vpop.f32.mrb[0].mxu0
    %2577 = vdwg.mxu0
    %v2578 = vadd.f32 %v2504, %v2562
    %v2579 = vadd.f32 %v2505, %v2564
    %v2580 = vadd.f32 %v2506, %v2566
    %v2581 = vadd.f32 %v2507, %v2568
    %v2582 = vadd.f32 %v2508, %v2572
    %v2583 = vadd.f32 %v2509, %v2574
    %v2584 = vld [vmem:[#allocation2 + $0x158] sm:$0xf]
    %v2585 = vld [vmem:[#allocation2 + $0x15c] sm:$0xf]
    %v2586 = vld [vmem:[#allocation2 + $0x160] sm:$0x3]
    %v2590 = vunpack.c.l.b16 %v2584
    %v2591 = vunpack.c.l.b16 %v2585
    %v2592 = vunpack.c.l.b16 %v2586
    %v2593 = vpack.c.b16 %v2591, %v2590
    %v2594 = vpack.c.b16 %v2592, %v2592
    %v2596 = vsel %vm798, %v2593, 0
    %v2599 = vsel %vm798, %v2594, 0
    %2601 = vmatprep.subr.bf16.mxu0 %v781
    %2602 = vmatpush1.bf16.msra.mxu0 %v780
    %2603 = vmatprep.subr.bf16.mxu0 %v954
    %2604 = vmatpush1.bf16.msra.mxu0 %v951
    %2605 = vmatprep.subr.bf16.mxu0 0
    %2606 = vmatpush1.bf16.msra.mxu0 0
    %2607 = vmatprep.subr.bf16.mxu0 0
    %2608 = vmatpush1.bf16.msra.mxu0 0
    %2609 = vmatprep.subr.bf16.mxu0 0
    %2610 = vmatpush1.bf16.msra.mxu0 0
    %2611 = vmatprep.subr.bf16.mxu0 0
    %2612 = vmatpush1.bf16.msra.mxu0 0
    %2613 = vmatprep.subr.bf16.mxu0 0
    %2614 = vmatpush1.bf16.msra.mxu0 0
    %2615 = vmatprep.subr.bf16.mxu0 0
    %2616 = vmatpush1.bf16.msra.mxu0 0
    %2617 = vmatprep.subr.bf16.mxu0 0
    %2618 = vmatpush1.bf16.msra.mxu0 0
    %2619 = vmatprep.subr.bf16.mxu0 0
    %2620 = vmatpush1.bf16.msra.mxu0 0
    %2621 = vmatprep.subr.bf16.mxu0 0
    %2622 = vmatpush1.bf16.msra.mxu0 0
    %2623 = vmatprep.subr.bf16.mxu0 0
    %2624 = vmatpush1.bf16.msra.mxu0 0
    %2625 = vmatprep.subr.bf16.mxu0 0
    %2626 = vmatpush1.bf16.msra.mxu0 0
    %2627 = vmatprep.subr.bf16.mxu0 0
    %2628 = vmatpush1.bf16.msra.mxu0 0
    %2629 = vmatprep.subr.bf16.mxu0 0
    %2630 = vmatpush1.bf16.msra.mxu0 0
    %2631 = vmatprep.subr.bf16.mxu0 0
    %2632 = vmatpush1.bf16.msra.mxu0 0
    %2633 = vmatprep.mubr.bf16.mxu0 0
    %2634 = vmatmul.mubr.bf16.gmra.mrb[0].mxu0 %v2596
    %v2635 = vpop.f32.mrb[0].mxu0
    %v2636 = vadd.f32 0.0, %v2635
    %v2637 = vpop.f32.mrb[0].mxu0
    %v2638 = vadd.f32 0.0, %v2637
    %v2639 = vpop.f32.mrb[0].mxu0
    %v2640 = vadd.f32 0.0, %v2639
    %v2641 = vpop.f32.mrb[0].mxu0
    %v2642 = vadd.f32 0.0, %v2641
    %2643 = vmatprep.mubr.bf16.mxu0 0
    %2644 = vmatmul.mubr.bf16.gmra.mrb[0].mxu0 %v2599
    %v2645 = vpop.f32.mrb[0].mxu0
    %v2646 = vadd.f32 0.0, %v2645
    %v2647 = vpop.f32.mrb[0].mxu0
    %v2648 = vadd.f32 0.0, %v2647
    %v2649 = vpop.f32.mrb[0].mxu0
    %v2650 = vpop.f32.mrb[0].mxu0
    %2651 = vdwg.mxu0
    %v2652 = vadd.f32 %v2578, %v2636
    %v2653 = vadd.f32 %v2579, %v2638
    %v2654 = vadd.f32 %v2580, %v2640
    %v2655 = vadd.f32 %v2581, %v2642
    %v2656 = vadd.f32 %v2582, %v2646
    %v2657 = vadd.f32 %v2583, %v2648
    %v2658 = vadd.f32 %v2652, %v2653
    %2659 = vadd.xlane.f32.xlu0 %v2658
    %v2660 = vpop.xlane.xlu0 %2659
    %v2661 = vadd.f32 %v2654, %v2655
    %2662 = vadd.xlane.f32.xlu0 %v2661
    %v2663 = vpop.xlane.xlu0 %2662
    %v2664 = vsel %vm611, %v2656, 0.0
    %v2665 = vsel %vm611, %v2657, 0.0
    %v2666 = vadd.f32 %v2664, %v2665
    %2667 = vadd.xlane.f32.xlu0 %v2666
    %v2668 = vpop.xlane.xlu0 %2667
    %v2669 = vmul.f32 %v2660, %v285
    %v2670 = vmul.f32 %v2663, %v285
    %v2671 = vmul.f32 %v2668, %v285
    %v2672 = vmul.f32 %v2652, %v2652
    %v2673 = vmul.f32 %v2653, %v2653
    %v2674 = vmul.f32 %v2654, %v2654
    %v2675 = vmul.f32 %v2655, %v2655
    %v2676 = vmul.f32 %v2656, %v2656
    %v2677 = vmul.f32 %v2657, %v2657
    %v2678 = vadd.f32 %v2672, %v2673
    %2679 = vadd.xlane.f32.xlu0 %v2678
    %v2680 = vpop.xlane.xlu0 %2679
    %v2681 = vadd.f32 %v2674, %v2675
    %2682 = vadd.xlane.f32.xlu0 %v2681
    %v2683 = vpop.xlane.xlu0 %2682
    %v2684 = vsel %vm611, %v2676, 0.0
    %v2685 = vsel %vm611, %v2677, 0.0
    %v2686 = vadd.f32 %v2684, %v2685
    %2687 = vadd.xlane.f32.xlu0 %v2686
    %v2688 = vpop.xlane.xlu0 %2687
    %v2689 = vmul.f32 %v2680, %v285
    %v2690 = vmul.f32 %v2683, %v285
    %v2691 = vmul.f32 %v2688, %v285
    %v2692 = vmul.f32 %v2669, %v2669
    %v2693 = vmul.f32 %v2670, %v2670
    %v2694 = vmul.f32 %v2671, %v2671
    %v2695 = vsub.f32 %v2689, %v2692
    %v2696 = vsub.f32 %v2690, %v2693
    %v2697 = vsub.f32 %v2691, %v2694
    %v2698 = vmax.f32 %v2695, 0.0
    %v2699 = vmax.f32 %v2696, 0.0
    %v2700 = vmax.f32 %v2697, 0.0
    %v2701 = vld [vmem:[%s2 + $0xe0] sm:$0xff]
    %v2702 = vld [vmem:[%s2 + $0xe8] sm:$0xff]
    %v2703 = vld [vmem:[%s2 + $0xf0] sm:$0xf]
    %v2704 = vadd.f32 %v2698, 1e-05
    %v2705 = vadd.f32 %v2699, 1e-05
    %v2706 = vadd.f32 %v2700, 1e-05
    %v2707 = vrsqrt.pop %v2704
    %v2708 = vrsqrt.pop %v2705
    %v2709 = vrsqrt.pop %v2706
    %v2710 = vmul.f32 %v2701, %v2707
    %v2711 = vmul.f32 %v2702, %v2708
    %v2712 = vmul.f32 %v2703, %v2709
    %v2713 = vld [vmem:[%s2 + $0xf8] sm:$0xff]
    %v2714 = vld [vmem:[%s2 + $0x100] sm:$0xff]
    %v2715 = vld [vmem:[%s2 + $0x108] sm:$0xf]
    %v2716 = vmul.f32 %v2669, %v2710
    %v2717 = vmul.f32 %v2670, %v2711
    %v2718 = vmul.f32 %v2671, %v2712
    %v2719 = vsub.f32 %v2713, %v2716
    %v2720 = vsub.f32 %v2714, %v2717
    %v2721 = vsub.f32 %v2715, %v2718
    %2723 = vset.pattern.permute.xlu0 0
    %2724 = vperm.xlu0 %2723, %v2710
    %v2725 = vpop.permute.xlu0 %2724
    %2728 = vset.pattern.permute.xlu0 0
    %2729 = vperm.xlu0 %2728, %v2711
    %v2730 = vpop.permute.xlu0 %2729
    %2733 = vset.pattern.permute.xlu0 0
    %2734 = vperm.xlu0 %2733, %v2712
    %v2735 = vpop.permute.xlu0 %2734
    %v2737 = vmul.f32 %v2652, %v2725
    %v2738 = vmul.f32 %v2653, %v2725
    %v2739 = vmul.f32 %v2654, %v2730
    %v2740 = vmul.f32 %v2655, %v2730
    %v2741 = vmul.f32 %v2656, %v2735
    %v2742 = vmul.f32 %v2657, %v2735
    %2744 = vset.pattern.permute.xlu0 0
    %2745 = vperm.xlu0 %2744, %v2719
    %v2746 = vpop.permute.xlu0 %2745
    %2749 = vset.pattern.permute.xlu0 0
    %2750 = vperm.xlu0 %2749, %v2720
    %v2751 = vpop.permute.xlu0 %2750
    %2754 = vset.pattern.permute.xlu0 0
    %2755 = vperm.xlu0 %2754, %v2721
    %v2756 = vpop.permute.xlu0 %2755
    %v2758 = vadd.f32 %v2737, %v2746
    %v2759 = vadd.f32 %v2738, %v2746
    %v2760 = vadd.f32 %v2739, %v2751
    %v2761 = vadd.f32 %v2740, %v2751
    %v2762 = vadd.f32 %v2741, %v2756
    %v2763 = vadd.f32 %v2742, %v2756
    %v2764 = vmul.f32 %v2758, 0.1
    %v2765 = vmul.f32 %v2759, 0.1
    %v2766 = vmul.f32 %v2760, 0.1
    %v2767 = vmul.f32 %v2761, 0.1
    %v2768 = vmul.f32 %v2762, 0.1
    %v2769 = vmul.f32 %v2763, 0.1
    %v2770 = vmax.f32 %v2758, %v2764
    %v2771 = vmax.f32 %v2759, %v2765
    %v2772 = vmax.f32 %v2760, %v2766
    %v2773 = vmax.f32 %v2761, %v2767
    %v2774 = vmax.f32 %v2762, %v2768
    %v2775 = vmax.f32 %v2763, %v2769
    %2776 = vrot.lane.b32.xlu0 %v2770, 1
    %v2777 = vpop.permute.xlu0 %2776
    %2778 = vrot.lane.b32.xlu0 %v2772, 1
    %v2779 = vpop.permute.xlu0 %2778
    %2780 = vrot.lane.b32.xlu0 %v2774, 1
    %v2781 = vpop.permute.xlu0 %2780
    %2782 = vrot.lane.b32.xlu0 %v2771, 1
    %v2783 = vpop.permute.xlu0 %2782
    %2784 = vrot.lane.b32.xlu0 %v2773, 1
    %v2785 = vpop.permute.xlu0 %2784
    %2786 = vrot.lane.b32.xlu0 %v2775, 1
    %v2787 = vpop.permute.xlu0 %2786
    %v2788 = vsel %vm68, %v2777, %v2783
    %v2789 = vsel %vm68, %v2779, %v2785
    %v2790 = vsel %vm68, %v2781, %v2787
    %v2791 = vsel %vm68, %v2783, %v2777
    %v2792 = vsel %vm68, %v2785, %v2779
    %v2793 = vsel %vm68, %v2787, %v2781
    %v2794 = vsel %vm73, 0.0, %v2791
    %v2795 = vsel %vm74, 0.0, %v2788
    %v2796 = vsel %vm73, 0.0, %v2792
    %v2797 = vsel %vm74, 0.0, %v2789
    %v2798 = vsel %vm73, 0.0, %v2793
    %v2799 = vsel %vm74, 0.0, %v2790
    %2800 = vrot.lane.b32.xlu0 %v2770, 127
    %v2801 = vpop.permute.xlu0 %2800
    %2802 = vrot.lane.b32.xlu0 %v2772, 127
    %v2803 = vpop.permute.xlu0 %2802
    %2804 = vrot.lane.b32.xlu0 %v2774, 127
    %v2805 = vpop.permute.xlu0 %2804
    %2806 = vrot.lane.b32.xlu0 %v2771, 127
    %v2807 = vpop.permute.xlu0 %2806
    %2808 = vrot.lane.b32.xlu0 %v2773, 127
    %v2809 = vpop.permute.xlu0 %2808
    %2810 = vrot.lane.b32.xlu0 %v2775, 127
    %v2811 = vpop.permute.xlu0 %2810
    %v2812 = vsel %vm81, %v2801, %v2807
    %v2813 = vsel %vm81, %v2803, %v2809
    %v2814 = vsel %vm81, %v2805, %v2811
    %v2815 = vsel %vm81, %v2807, %v2801
    %v2816 = vsel %vm81, %v2809, %v2803
    %v2817 = vsel %vm81, %v2811, %v2805
    %v2818 = vsel %vm86, 0.0, %v2812
    %v2819 = vsel %vm87, 0.0, %v2815
    %v2820 = vsel %vm86, 0.0, %v2813
    %v2821 = vsel %vm87, 0.0, %v2816
    %v2822 = vsel %vm86, 0.0, %v2814
    %v2823 = vsel %vm87, 0.0, %v2817
    %v2824 = vpack.c.bf16 %v2796, %v2794
    %v2825 = vpack.c.bf16 %v2797, %v2795
    %v2826 = vpack.c.bf16 %v2798, %v2798
    %v2827 = vpack.c.bf16 %v2799, %v2799
    %v2828 = vpack.c.bf16 %v2772, %v2770
    %v2829 = vpack.c.bf16 %v2773, %v2771
    %v2830 = vpack.c.bf16 %v2774, %v2774
    %v2831 = vpack.c.bf16 %v2775, %v2775
    %v2832 = vpack.c.bf16 %v2820, %v2818
    %v2833 = vpack.c.bf16 %v2821, %v2819
    %v2834 = vpack.c.bf16 %v2822, %v2822
    %v2835 = vpack.c.bf16 %v2823, %v2823
    %v2836 = vld [vmem:[#allocation2 + $0x168] sm:$0xf]
    %v2837 = vld [vmem:[#allocation2 + $0x16c] sm:$0xf]
    %v2838 = vld [vmem:[#allocation2 + $0x170] sm:$0xf]
    %v2839 = vld [vmem:[#allocation2 + $0x174] sm:$0xf]
    %v2842 = vunpack.c.l.b16 %v2838
    %v2843 = vunpack.c.l.b16 %v2839
    %v2844 = vpack.c.b16 %v2843, %v2842
    %v2846 = vsel %vm798, %v2844, 0
    %v2849 = vsel %vm109, %v2830, 0
    %v2852 = vsel %vm109, %v2831, 0
    %2854 = vmatprep.subr.bf16.mxu0 %v2829
    %2855 = vmatpush1.bf16.msra.mxu0 %v2828
    %2856 = vmatprep.subr.bf16.mxu0 %v2852
    %2857 = vmatpush1.bf16.msra.mxu0 %v2849
    %2858 = vmatprep.subr.bf16.mxu0 0
    %2859 = vmatpush1.bf16.msra.mxu0 0
    %2860 = vmatprep.subr.bf16.mxu0 0
    %2861 = vmatpush1.bf16.msra.mxu0 0
    %2862 = vmatprep.subr.bf16.mxu0 0
    %2863 = vmatpush1.bf16.msra.mxu0 0
    %2864 = vmatprep.subr.bf16.mxu0 0
    %2865 = vmatpush1.bf16.msra.mxu0 0
    %2866 = vmatprep.subr.bf16.mxu0 0
    %2867 = vmatpush1.bf16.msra.mxu0 0
    %2868 = vmatprep.subr.bf16.mxu0 0
    %2869 = vmatpush1.bf16.msra.mxu0 0
    %2870 = vmatprep.subr.bf16.mxu0 0
    %2871 = vmatpush1.bf16.msra.mxu0 0
    %2872 = vmatprep.subr.bf16.mxu0 0
    %2873 = vmatpush1.bf16.msra.mxu0 0
    %2874 = vmatprep.subr.bf16.mxu0 0
    %2875 = vmatpush1.bf16.msra.mxu0 0
    %2876 = vmatprep.subr.bf16.mxu0 0
    %2877 = vmatpush1.bf16.msra.mxu0 0
    %2878 = vmatprep.subr.bf16.mxu0 0
    %2879 = vmatpush1.bf16.msra.mxu0 0
    %2880 = vmatprep.subr.bf16.mxu0 0
    %2881 = vmatpush1.bf16.msra.mxu0 0
    %2882 = vmatprep.subr.bf16.mxu0 0
    %2883 = vmatpush1.bf16.msra.mxu0 0
    %2884 = vmatprep.subr.bf16.mxu0 0
    %2885 = vmatpush1.bf16.msra.mxu0 0
    %2886 = vmatprep.mubr.bf16.mxu0 0
    %2887 = vmatmul.mubr.bf16.gmra.mrb[0].mxu0 %v2846
    %v2888 = vpop.f32.mrb[0].mxu0
    %v2889 = vadd.f32 0.0, %v2888
    %v2890 = vpop.f32.mrb[0].mxu0
    %v2891 = vadd.f32 0.0, %v2890
    %v2892 = vpop.f32.mrb[0].mxu0
    %v2893 = vadd.f32 0.0, %v2892
    %v2894 = vpop.f32.mrb[0].mxu0
    %v2895 = vadd.f32 0.0, %v2894
    %2896 = vdwg.mxu0
    %v2899 = vunpack.c.l.b16 %v2836
    %v2900 = vunpack.c.l.b16 %v2837
    %v2901 = vpack.c.b16 %v2900, %v2899
    %v2903 = vsel %vm798, %v2901, 0
    %v2906 = vsel %vm109, %v2826, 0
    %v2909 = vsel %vm109, %v2827, 0
    %2911 = vmatprep.subr.bf16.mxu0 %v2825
    %2912 = vmatpush1.bf16.msra.mxu0 %v2824
    %2913 = vmatprep.subr.bf16.mxu0 %v2909
    %2914 = vmatpush1.bf16.msra.mxu0 %v2906
    %2915 = vmatprep.subr.bf16.mxu0 0
    %2916 = vmatpush1.bf16.msra.mxu0 0
    %2917 = vmatprep.subr.bf16.mxu0 0
    %2918 = vmatpush1.bf16.msra.mxu0 0
    %2919 = vmatprep.subr.bf16.mxu0 0
    %2920 = vmatpush1.bf16.msra.mxu0 0
    %2921 = vmatprep.subr.bf16.mxu0 0
    %2922 = vmatpush1.bf16.msra.mxu0 0
    %2923 = vmatprep.subr.bf16.mxu0 0
    %2924 = vmatpush1.bf16.msra.mxu0 0
    %2925 = vmatprep.subr.bf16.mxu0 0
    %2926 = vmatpush1.bf16.msra.mxu0 0
    %2927 = vmatprep.subr.bf16.mxu0 0
    %2928 = vmatpush1.bf16.msra.mxu0 0
    %2929 = vmatprep.subr.bf16.mxu0 0
    %2930 = vmatpush1.bf16.msra.mxu0 0
    %2931 = vmatprep.subr.bf16.mxu0 0
    %2932 = vmatpush1.bf16.msra.mxu0 0
    %2933 = vmatprep.subr.bf16.mxu0 0
    %2934 = vmatpush1.bf16.msra.mxu0 0
    %2935 = vmatprep.subr.bf16.mxu0 0
    %2936 = vmatpush1.bf16.msra.mxu0 0
    %2937 = vmatprep.subr.bf16.mxu0 0
    %2938 = vmatpush1.bf16.msra.mxu0 0
    %2939 = vmatprep.subr.bf16.mxu0 0
    %2940 = vmatpush1.bf16.msra.mxu0 0
    %2941 = vmatprep.subr.bf16.mxu0 0
    %2942 = vmatpush1.bf16.msra.mxu0 0
    %2943 = vmatprep.mubr.bf16.mxu0 0
    %2944 = vmatmul.mubr.bf16.gmra.mrb[0].mxu0 %v2903
    %v2945 = vpop.f32.mrb[0].mxu0
    %v2946 = vadd.f32 %v2889, %v2945
    %v2947 = vpop.f32.mrb[0].mxu0
    %v2948 = vadd.f32 %v2891, %v2947
    %v2949 = vpop.f32.mrb[0].mxu0
    %v2950 = vadd.f32 %v2893, %v2949
    %v2951 = vpop.f32.mrb[0].mxu0
    %v2952 = vadd.f32 %v2895, %v2951
    %2953 = vdwg.mxu0
    %v2954 = vld [vmem:[#allocation2 + $0x178] sm:$0xf]
    %v2955 = vld [vmem:[#allocation2 + $0x17c] sm:$0xf]
    %v2958 = vunpack.c.l.b16 %v2954
    %v2959 = vunpack.c.l.b16 %v2955
    %v2960 = vpack.c.b16 %v2959, %v2958
    %v2962 = vsel %vm798, %v2960, 0
    %v2965 = vsel %vm109, %v2834, 0
    %v2968 = vsel %vm109, %v2835, 0
    %2970 = vmatprep.subr.bf16.mxu0 %v2833
    %2971 = vmatpush1.bf16.msra.mxu0 %v2832
    %2972 = vmatprep.subr.bf16.mxu0 %v2968
    %2973 = vmatpush1.bf16.msra.mxu0 %v2965
    %2974 = vmatprep.subr.bf16.mxu0 0
    %2975 = vmatpush1.bf16.msra.mxu0 0
    %2976 = vmatprep.subr.bf16.mxu0 0
    %2977 = vmatpush1.bf16.msra.mxu0 0
    %2978 = vmatprep.subr.bf16.mxu0 0
    %2979 = vmatpush1.bf16.msra.mxu0 0
    %2980 = vmatprep.subr.bf16.mxu0 0
    %2981 = vmatpush1.bf16.msra.mxu0 0
    %2982 = vmatprep.subr.bf16.mxu0 0
    %2983 = vmatpush1.bf16.msra.mxu0 0
    %2984 = vmatprep.subr.bf16.mxu0 0
    %2985 = vmatpush1.bf16.msra.mxu0 0
    %2986 = vmatprep.subr.bf16.mxu0 0
    %2987 = vmatpush1.bf16.msra.mxu0 0
    %2988 = vmatprep.subr.bf16.mxu0 0
    %2989 = vmatpush1.bf16.msra.mxu0 0
    %2990 = vmatprep.subr.bf16.mxu0 0
    %2991 = vmatpush1.bf16.msra.mxu0 0
    %2992 = vmatprep.subr.bf16.mxu0 0
    %2993 = vmatpush1.bf16.msra.mxu0 0
    %2994 = vmatprep.subr.bf16.mxu0 0
    %2995 = vmatpush1.bf16.msra.mxu0 0
    %2996 = vmatprep.subr.bf16.mxu0 0
    %2997 = vmatpush1.bf16.msra.mxu0 0
    %2998 = vmatprep.subr.bf16.mxu0 0
    %2999 = vmatpush1.bf16.msra.mxu0 0
    %3000 = vmatprep.subr.bf16.mxu0 0
    %3001 = vmatpush1.bf16.msra.mxu0 0
    %3002 = vmatprep.mubr.bf16.mxu0 0
    %3003 = vmatmul.mubr.bf16.gmra.mrb[0].mxu0 %v2962
    %v3004 = vpop.f32.mrb[0].mxu0
    %v3005 = vadd.f32 0.0, %v3004
    %v3006 = vpop.f32.mrb[0].mxu0
    %v3007 = vadd.f32 0.0, %v3006
    %v3008 = vpop.f32.mrb[0].mxu0
    %v3009 = vadd.f32 0.0, %v3008
    %v3010 = vpop.f32.mrb[0].mxu0
    %v3011 = vadd.f32 0.0, %v3010
    %3012 = vdwg.mxu0
    %v3013 = vadd.f32 %v2946, %v3005
    %v3014 = vadd.f32 %v2948, %v3007
    %v3015 = vadd.f32 %v2950, %v3009
    %v3016 = vadd.f32 %v2952, %v3011
    %v3017 = vld [vmem:[#allocation2 + $0x180] sm:$0xf]
    %v3018 = vld [vmem:[#allocation2 + $0x184] sm:$0xf]
    %v3021 = vunpack.c.l.b16 %v3017
    %v3022 = vunpack.c.l.b16 %v3018
    %v3023 = vpack.c.b16 %v3022, %v3021
    %v3025 = vsel %vm408, %v3023, 0
    %3027 = vmatprep.subr.bf16.mxu0 %v389
    %3028 = vmatpush1.bf16.msra.mxu0 %v388
    %3029 = vmatprep.subr.bf16.mxu0 0
    %3030 = vmatpush1.bf16.msra.mxu0 0
    %3031 = vmatprep.subr.bf16.mxu0 0
    %3032 = vmatpush1.bf16.msra.mxu0 0
    %3033 = vmatprep.subr.bf16.mxu0 0
    %3034 = vmatpush1.bf16.msra.mxu0 0
    %3035 = vmatprep.subr.bf16.mxu0 0
    %3036 = vmatpush1.bf16.msra.mxu0 0
    %3037 = vmatprep.subr.bf16.mxu0 0
    %3038 = vmatpush1.bf16.msra.mxu0 0
    %3039 = vmatprep.subr.bf16.mxu0 0
    %3040 = vmatpush1.bf16.msra.mxu0 0
    %3041 = vmatprep.subr.bf16.mxu0 0
    %3042 = vmatpush1.bf16.msra.mxu0 0
    %3043 = vmatprep.subr.bf16.mxu0 0
    %3044 = vmatpush1.bf16.msra.mxu0 0
    %3045 = vmatprep.subr.bf16.mxu0 0
    %3046 = vmatpush1.bf16.msra.mxu0 0
    %3047 = vmatprep.subr.bf16.mxu0 0
    %3048 = vmatpush1.bf16.msra.mxu0 0
    %3049 = vmatprep.subr.bf16.mxu0 0
    %3050 = vmatpush1.bf16.msra.mxu0 0
    %3051 = vmatprep.subr.bf16.mxu0 0
    %3052 = vmatpush1.bf16.msra.mxu0 0
    %3053 = vmatprep.subr.bf16.mxu0 0
    %3054 = vmatpush1.bf16.msra.mxu0 0
    %3055 = vmatprep.subr.bf16.mxu0 0
    %3056 = vmatpush1.bf16.msra.mxu0 0
    %3057 = vmatprep.subr.bf16.mxu0 0
    %3058 = vmatpush1.bf16.msra.mxu0 0
    %3059 = vmatprep.mubr.bf16.mxu0 0
    %3060 = vmatmul.mubr.bf16.gmra.mrb[0].mxu0 %v3025
    %v3061 = vpop.f32.mrb[0].mxu0
    %v3062 = vadd.f32 0.0, %v3061
    %v3063 = vpop.f32.mrb[0].mxu0
    %v3064 = vadd.f32 0.0, %v3063
    %v3065 = vpop.f32.mrb[0].mxu0
    %v3066 = vadd.f32 0.0, %v3065
    %v3067 = vpop.f32.mrb[0].mxu0
    %v3068 = vadd.f32 0.0, %v3067
    %3069 = vdwg.mxu0
    %v3070 = vadd.f32 %v3013, %v3062
    %v3071 = vadd.f32 %v3014, %v3064
    %v3072 = vadd.f32 %v3015, %v3066
    %v3073 = vadd.f32 %v3016, %v3068
    %v3074 = vld [vmem:[#allocation2 + $0x188] sm:$0xf]
    %v3075 = vld [vmem:[#allocation2 + $0x18c] sm:$0xf]
    %v3078 = vunpack.c.l.b16 %v3074
    %v3079 = vunpack.c.l.b16 %v3075
    %v3080 = vpack.c.b16 %v3079, %v3078
    %v3082 = vsel %vm408, %v3080, 0
    %3084 = vmatprep.subr.bf16.mxu0 %v391
    %3085 = vmatpush1.bf16.msra.mxu0 %v390
    %3086 = vmatprep.subr.bf16.mxu0 0
    %3087 = vmatpush1.bf16.msra.mxu0 0
    %3088 = vmatprep.subr.bf16.mxu0 0
    %3089 = vmatpush1.bf16.msra.mxu0 0
    %3090 = vmatprep.subr.bf16.mxu0 0
    %3091 = vmatpush1.bf16.msra.mxu0 0
    %3092 = vmatprep.subr.bf16.mxu0 0
    %3093 = vmatpush1.bf16.msra.mxu0 0
    %3094 = vmatprep.subr.bf16.mxu0 0
    %3095 = vmatpush1.bf16.msra.mxu0 0
    %3096 = vmatprep.subr.bf16.mxu0 0
    %3097 = vmatpush1.bf16.msra.mxu0 0
    %3098 = vmatprep.subr.bf16.mxu0 0
    %3099 = vmatpush1.bf16.msra.mxu0 0
    %3100 = vmatprep.subr.bf16.mxu0 0
    %3101 = vmatpush1.bf16.msra.mxu0 0
    %3102 = vmatprep.subr.bf16.mxu0 0
    %3103 = vmatpush1.bf16.msra.mxu0 0
    %3104 = vmatprep.subr.bf16.mxu0 0
    %3105 = vmatpush1.bf16.msra.mxu0 0
    %3106 = vmatprep.subr.bf16.mxu0 0
    %3107 = vmatpush1.bf16.msra.mxu0 0
    %3108 = vmatprep.subr.bf16.mxu0 0
    %3109 = vmatpush1.bf16.msra.mxu0 0
    %3110 = vmatprep.subr.bf16.mxu0 0
    %3111 = vmatpush1.bf16.msra.mxu0 0
    %3112 = vmatprep.subr.bf16.mxu0 0
    %3113 = vmatpush1.bf16.msra.mxu0 0
    %3114 = vmatprep.subr.bf16.mxu0 0
    %3115 = vmatpush1.bf16.msra.mxu0 0
    %3116 = vmatprep.mubr.bf16.mxu0 0
    %3117 = vmatmul.mubr.bf16.gmra.mrb[0].mxu0 %v3082
    %v3118 = vpop.f32.mrb[0].mxu0
    %v3119 = vadd.f32 0.0, %v3118
    %v3120 = vpop.f32.mrb[0].mxu0
    %v3121 = vadd.f32 0.0, %v3120
    %v3122 = vpop.f32.mrb[0].mxu0
    %v3123 = vadd.f32 0.0, %v3122
    %v3124 = vpop.f32.mrb[0].mxu0
    %v3125 = vadd.f32 0.0, %v3124
    %3126 = vdwg.mxu0
    %v3127 = vadd.f32 %v3070, %v3119
    %v3128 = vadd.f32 %v3071, %v3121
    %v3129 = vadd.f32 %v3072, %v3123
    %v3130 = vadd.f32 %v3073, %v3125
    %v3131 = vld [vmem:[#allocation2 + $0x190] sm:$0xf]
    %v3132 = vld [vmem:[#allocation2 + $0x194] sm:$0xf]
    %v3135 = vunpack.c.l.b16 %v3131
    %v3136 = vunpack.c.l.b16 %v3132
    %v3137 = vpack.c.b16 %v3136, %v3135
    %v3139 = vsel %vm408, %v3137, 0
    %3141 = vmatprep.subr.bf16.mxu0 %v393
    %3142 = vmatpush1.bf16.msra.mxu0 %v392
    %3143 = vmatprep.subr.bf16.mxu0 0
    %3144 = vmatpush1.bf16.msra.mxu0 0
    %3145 = vmatprep.subr.bf16.mxu0 0
    %3146 = vmatpush1.bf16.msra.mxu0 0
    %3147 = vmatprep.subr.bf16.mxu0 0
    %3148 = vmatpush1.bf16.msra.mxu0 0
    %3149 = vmatprep.subr.bf16.mxu0 0
    %3150 = vmatpush1.bf16.msra.mxu0 0
    %3151 = vmatprep.subr.bf16.mxu0 0
    %3152 = vmatpush1.bf16.msra.mxu0 0
    %3153 = vmatprep.subr.bf16.mxu0 0
    %3154 = vmatpush1.bf16.msra.mxu0 0
    %3155 = vmatprep.subr.bf16.mxu0 0
    %3156 = vmatpush1.bf16.msra.mxu0 0
    %3157 = vmatprep.subr.bf16.mxu0 0
    %3158 = vmatpush1.bf16.msra.mxu0 0
    %3159 = vmatprep.subr.bf16.mxu0 0
    %3160 = vmatpush1.bf16.msra.mxu0 0
    %3161 = vmatprep.subr.bf16.mxu0 0
    %3162 = vmatpush1.bf16.msra.mxu0 0
    %3163 = vmatprep.subr.bf16.mxu0 0
    %3164 = vmatpush1.bf16.msra.mxu0 0
    %3165 = vmatprep.subr.bf16.mxu0 0
    %3166 = vmatpush1.bf16.msra.mxu0 0
    %3167 = vmatprep.subr.bf16.mxu0 0
    %3168 = vmatpush1.bf16.msra.mxu0 0
    %3169 = vmatprep.subr.bf16.mxu0 0
    %3170 = vmatpush1.bf16.msra.mxu0 0
    %3171 = vmatprep.subr.bf16.mxu0 0
    %3172 = vmatpush1.bf16.msra.mxu0 0
    %3173 = vmatprep.mubr.bf16.mxu0 0
    %3174 = vmatmul.mubr.bf16.gmra.mrb[0].mxu0 %v3139
    %v3175 = vpop.f32.mrb[0].mxu0
    %v3176 = vadd.f32 0.0, %v3175
    %v3177 = vpop.f32.mrb[0].mxu0
    %v3178 = vadd.f32 0.0, %v3177
    %v3179 = vpop.f32.mrb[0].mxu0
    %v3180 = vadd.f32 0.0, %v3179
    %v3181 = vpop.f32.mrb[0].mxu0
    %v3182 = vadd.f32 0.0, %v3181
    %3183 = vdwg.mxu0
    %v3184 = vadd.f32 %v3127, %v3176
    %v3185 = vadd.f32 %v3128, %v3178
    %v3186 = vadd.f32 %v3129, %v3180
    %v3187 = vadd.f32 %v3130, %v3182
    %v3188 = vadd.f32 %v3184, %v3185
    %3189 = vadd.xlane.f32.xlu0 %v3188
    %v3190 = vpop.xlane.xlu0 %3189
    %v3191 = vadd.f32 %v3186, %v3187
    %3192 = vadd.xlane.f32.xlu0 %v3191
    %v3193 = vpop.xlane.xlu0 %3192
    %v3194 = vmul.f32 %v3190, %v285
    %v3195 = vmul.f32 %v3193, %v285
    %v3196 = vmul.f32 %v3184, %v3184
    %v3197 = vmul.f32 %v3185, %v3185
    %v3198 = vmul.f32 %v3186, %v3186
    %v3199 = vmul.f32 %v3187, %v3187
    %v3200 = vadd.f32 %v3196, %v3197
    %3201 = vadd.xlane.f32.xlu0 %v3200
    %v3202 = vpop.xlane.xlu0 %3201
    %v3203 = vadd.f32 %v3198, %v3199
    %3204 = vadd.xlane.f32.xlu0 %v3203
    %v3205 = vpop.xlane.xlu0 %3204
    %v3206 = vmul.f32 %v3202, %v285
    %v3207 = vmul.f32 %v3205, %v285
    %v3208 = vmul.f32 %v3194, %v3194
    %v3209 = vmul.f32 %v3195, %v3195
    %v3210 = vsub.f32 %v3206, %v3208
    %v3211 = vsub.f32 %v3207, %v3209
    %v3212 = vmax.f32 %v3210, 0.0
    %v3213 = vmax.f32 %v3211, 0.0
    %v3214 = vld [vmem:[%s2 + $0x110] sm:$0xff]
    %v3215 = vld [vmem:[%s2 + $0x118] sm:$0xff]
    %v3216 = vadd.f32 %v3212, 1e-05
    %v3217 = vadd.f32 %v3213, 1e-05
    %v3218 = vrsqrt.pop %v3216
    %v3219 = vrsqrt.pop %v3217
    %v3220 = vmul.f32 %v3214, %v3218
    %v3221 = vmul.f32 %v3215, %v3219
    %v3222 = vld [vmem:[%s2 + $0x120] sm:$0xff]
    %v3223 = vld [vmem:[%s2 + $0x128] sm:$0xff]
    %v3224 = vmul.f32 %v3194, %v3220
    %v3225 = vmul.f32 %v3195, %v3221
    %v3226 = vsub.f32 %v3222, %v3224
    %v3227 = vsub.f32 %v3223, %v3225
    %3229 = vset.pattern.permute.xlu0 0
    %3230 = vperm.xlu0 %3229, %v3220
    %v3231 = vpop.permute.xlu0 %3230
    %3234 = vset.pattern.permute.xlu0 0
    %3235 = vperm.xlu0 %3234, %v3221
    %v3236 = vpop.permute.xlu0 %3235
    %v3238 = vmul.f32 %v3184, %v3231
    %v3239 = vmul.f32 %v3185, %v3231
    %v3240 = vmul.f32 %v3186, %v3236
    %v3241 = vmul.f32 %v3187, %v3236
    %3243 = vset.pattern.permute.xlu0 0
    %3244 = vperm.xlu0 %3243, %v3226
    %v3245 = vpop.permute.xlu0 %3244
    %3248 = vset.pattern.permute.xlu0 0
    %3249 = vperm.xlu0 %3248, %v3227
    %v3250 = vpop.permute.xlu0 %3249
    %v3252 = vadd.f32 %v3238, %v3245
    %v3253 = vadd.f32 %v3239, %v3245
    %v3254 = vadd.f32 %v3240, %v3250
    %v3255 = vadd.f32 %v3241, %v3250
    %v3256 = vmul.f32 %v3252, 0.1
    %v3257 = vmul.f32 %v3253, 0.1
    %v3258 = vmul.f32 %v3254, 0.1
    %v3259 = vmul.f32 %v3255, 0.1
    %v3260 = vmax.f32 %v3252, %v3256
    %v3261 = vmax.f32 %v3253, %v3257
    %v3262 = vmax.f32 %v3254, %v3258
    %v3263 = vmax.f32 %v3255, %v3259
    %3264 = vrot.lane.b32.xlu0 %v3260, 1
    %v3265 = vpop.permute.xlu0 %3264
    %3266 = vrot.lane.b32.xlu0 %v3262, 1
    %v3267 = vpop.permute.xlu0 %3266
    %3268 = vrot.lane.b32.xlu0 %v3261, 1
    %v3269 = vpop.permute.xlu0 %3268
    %3270 = vrot.lane.b32.xlu0 %v3263, 1
    %v3271 = vpop.permute.xlu0 %3270
    %v3272 = vsel %vm68, %v3265, %v3269
    %v3273 = vsel %vm68, %v3267, %v3271
    %v3274 = vsel %vm68, %v3269, %v3265
    %v3275 = vsel %vm68, %v3271, %v3267
    %v3276 = vsel %vm73, 0.0, %v3274
    %v3277 = vsel %vm74, 0.0, %v3272
    %v3278 = vsel %vm73, 0.0, %v3275
    %v3279 = vsel %vm74, 0.0, %v3273
    %3280 = vrot.lane.b32.xlu0 %v3260, 127
    %v3281 = vpop.permute.xlu0 %3280
    %3282 = vrot.lane.b32.xlu0 %v3262, 127
    %v3283 = vpop.permute.xlu0 %3282
    %3284 = vrot.lane.b32.xlu0 %v3261, 127
    %v3285 = vpop.permute.xlu0 %3284
    %3286 = vrot.lane.b32.xlu0 %v3263, 127
    %v3287 = vpop.permute.xlu0 %3286
    %v3288 = vsel %vm81, %v3281, %v3285
    %v3289 = vsel %vm81, %v3283, %v3287
    %v3290 = vsel %vm81, %v3285, %v3281
    %v3291 = vsel %vm81, %v3287, %v3283
    %v3292 = vsel %vm86, 0.0, %v3288
    %v3293 = vsel %vm87, 0.0, %v3290
    %v3294 = vsel %vm86, 0.0, %v3289
    %v3295 = vsel %vm87, 0.0, %v3291
    %v3296 = vpack.c.bf16 %v3278, %v3276
    %v3297 = vpack.c.bf16 %v3279, %v3277
    %v3298 = vpack.c.bf16 %v3262, %v3260
    %v3299 = vpack.c.bf16 %v3263, %v3261
    %v3300 = vpack.c.bf16 %v3294, %v3292
    %v3301 = vpack.c.bf16 %v3295, %v3293
    %v3302 = vld [vmem:[#allocation2 + $0x198] sm:$0xf]
    %v3303 = vld [vmem:[#allocation2 + $0x19c] sm:$0xf]
    %v3304 = vld [vmem:[#allocation2 + $0x1a0] sm:$0xf]
    %v3305 = vld [vmem:[#allocation2 + $0x1a4] sm:$0xf]
    %v3308 = vunpack.c.l.b16 %v3304
    %v3309 = vunpack.c.l.b16 %v3305
    %v3310 = vpack.c.b16 %v3309, %v3308
    %v3312 = vsel %vm408, %v3310, 0
    %3314 = vmatprep.subr.bf16.mxu0 %v3299
    %3315 = vmatpush1.bf16.msra.mxu0 %v3298
    %3316 = vmatprep.subr.bf16.mxu0 0
    %3317 = vmatpush1.bf16.msra.mxu0 0
    %3318 = vmatprep.subr.bf16.mxu0 0
    %3319 = vmatpush1.bf16.msra.mxu0 0
    %3320 = vmatprep.subr.bf16.mxu0 0
    %3321 = vmatpush1.bf16.msra.mxu0 0
    %3322 = vmatprep.subr.bf16.mxu0 0
    %3323 = vmatpush1.bf16.msra.mxu0 0
    %3324 = vmatprep.subr.bf16.mxu0 0
    %3325 = vmatpush1.bf16.msra.mxu0 0
    %3326 = vmatprep.subr.bf16.mxu0 0
    %3327 = vmatpush1.bf16.msra.mxu0 0
    %3328 = vmatprep.subr.bf16.mxu0 0
    %3329 = vmatpush1.bf16.msra.mxu0 0
    %3330 = vmatprep.subr.bf16.mxu0 0
    %3331 = vmatpush1.bf16.msra.mxu0 0
    %3332 = vmatprep.subr.bf16.mxu0 0
    %3333 = vmatpush1.bf16.msra.mxu0 0
    %3334 = vmatprep.subr.bf16.mxu0 0
    %3335 = vmatpush1.bf16.msra.mxu0 0
    %3336 = vmatprep.subr.bf16.mxu0 0
    %3337 = vmatpush1.bf16.msra.mxu0 0
    %3338 = vmatprep.subr.bf16.mxu0 0
    %3339 = vmatpush1.bf16.msra.mxu0 0
    %3340 = vmatprep.subr.bf16.mxu0 0
    %3341 = vmatpush1.bf16.msra.mxu0 0
    %3342 = vmatprep.subr.bf16.mxu0 0
    %3343 = vmatpush1.bf16.msra.mxu0 0
    %3344 = vmatprep.subr.bf16.mxu0 0
    %3345 = vmatpush1.bf16.msra.mxu0 0
    %3346 = vmatprep.mubr.bf16.mxu0 0
    %3347 = vmatmul.mubr.bf16.gmra.mrb[0].mxu0 %v3312
    %v3348 = vpop.f32.mrb[0].mxu0
    %v3349 = vadd.f32 0.0, %v3348
    %v3350 = vpop.f32.mrb[0].mxu0
    %v3351 = vadd.f32 0.0, %v3350
    %v3352 = vpop.f32.mrb[0].mxu0
    %v3353 = vadd.f32 0.0, %v3352
    %v3354 = vpop.f32.mrb[0].mxu0
    %v3355 = vadd.f32 0.0, %v3354
    %3356 = vdwg.mxu0
    %v3359 = vunpack.c.l.b16 %v3302
    %v3360 = vunpack.c.l.b16 %v3303
    %v3361 = vpack.c.b16 %v3360, %v3359
    %v3363 = vsel %vm408, %v3361, 0
    %3365 = vmatprep.subr.bf16.mxu0 %v3297
    %3366 = vmatpush1.bf16.msra.mxu0 %v3296
    %3367 = vmatprep.subr.bf16.mxu0 0
    %3368 = vmatpush1.bf16.msra.mxu0 0
    %3369 = vmatprep.subr.bf16.mxu0 0
    %3370 = vmatpush1.bf16.msra.mxu0 0
    %3371 = vmatprep.subr.bf16.mxu0 0
    %3372 = vmatpush1.bf16.msra.mxu0 0
    %3373 = vmatprep.subr.bf16.mxu0 0
    %3374 = vmatpush1.bf16.msra.mxu0 0
    %3375 = vmatprep.subr.bf16.mxu0 0
    %3376 = vmatpush1.bf16.msra.mxu0 0
    %3377 = vmatprep.subr.bf16.mxu0 0
    %3378 = vmatpush1.bf16.msra.mxu0 0
    %3379 = vmatprep.subr.bf16.mxu0 0
    %3380 = vmatpush1.bf16.msra.mxu0 0
    %3381 = vmatprep.subr.bf16.mxu0 0
    %3382 = vmatpush1.bf16.msra.mxu0 0
    %3383 = vmatprep.subr.bf16.mxu0 0
    %3384 = vmatpush1.bf16.msra.mxu0 0
    %3385 = vmatprep.subr.bf16.mxu0 0
    %3386 = vmatpush1.bf16.msra.mxu0 0
    %3387 = vmatprep.subr.bf16.mxu0 0
    %3388 = vmatpush1.bf16.msra.mxu0 0
    %3389 = vmatprep.subr.bf16.mxu0 0
    %3390 = vmatpush1.bf16.msra.mxu0 0
    %3391 = vmatprep.subr.bf16.mxu0 0
    %3392 = vmatpush1.bf16.msra.mxu0 0
    %3393 = vmatprep.subr.bf16.mxu0 0
    %3394 = vmatpush1.bf16.msra.mxu0 0
    %3395 = vmatprep.subr.bf16.mxu0 0
    %3396 = vmatpush1.bf16.msra.mxu0 0
    %3397 = vmatprep.mubr.bf16.mxu0 0
    %3398 = vmatmul.mubr.bf16.gmra.mrb[0].mxu0 %v3363
    %v3399 = vpop.f32.mrb[0].mxu0
    %v3400 = vadd.f32 %v3349, %v3399
    %v3401 = vpop.f32.mrb[0].mxu0
    %v3402 = vadd.f32 %v3351, %v3401
    %v3403 = vpop.f32.mrb[0].mxu0
    %v3404 = vadd.f32 %v3353, %v3403
    %v3405 = vpop.f32.mrb[0].mxu0
    %v3406 = vadd.f32 %v3355, %v3405
    %3407 = vdwg.mxu0
    %v3408 = vld [vmem:[#allocation2 + $0x1a8] sm:$0xf]
    %v3409 = vld [vmem:[#allocation2 + $0x1ac] sm:$0xf]
    %v3412 = vunpack.c.l.b16 %v3408
    %v3413 = vunpack.c.l.b16 %v3409
    %v3414 = vpack.c.b16 %v3413, %v3412
    %v3416 = vsel %vm408, %v3414, 0
    %3418 = vmatprep.subr.bf16.mxu0 %v3301
    %3419 = vmatpush1.bf16.msra.mxu0 %v3300
    %3420 = vmatprep.subr.bf16.mxu0 0
    %3421 = vmatpush1.bf16.msra.mxu0 0
    %3422 = vmatprep.subr.bf16.mxu0 0
    %3423 = vmatpush1.bf16.msra.mxu0 0
    %3424 = vmatprep.subr.bf16.mxu0 0
    %3425 = vmatpush1.bf16.msra.mxu0 0
    %3426 = vmatprep.subr.bf16.mxu0 0
    %3427 = vmatpush1.bf16.msra.mxu0 0
    %3428 = vmatprep.subr.bf16.mxu0 0
    %3429 = vmatpush1.bf16.msra.mxu0 0
    %3430 = vmatprep.subr.bf16.mxu0 0
    %3431 = vmatpush1.bf16.msra.mxu0 0
    %3432 = vmatprep.subr.bf16.mxu0 0
    %3433 = vmatpush1.bf16.msra.mxu0 0
    %3434 = vmatprep.subr.bf16.mxu0 0
    %3435 = vmatpush1.bf16.msra.mxu0 0
    %3436 = vmatprep.subr.bf16.mxu0 0
    %3437 = vmatpush1.bf16.msra.mxu0 0
    %3438 = vmatprep.subr.bf16.mxu0 0
    %3439 = vmatpush1.bf16.msra.mxu0 0
    %3440 = vmatprep.subr.bf16.mxu0 0
    %3441 = vmatpush1.bf16.msra.mxu0 0
    %3442 = vmatprep.subr.bf16.mxu0 0
    %3443 = vmatpush1.bf16.msra.mxu0 0
    %3444 = vmatprep.subr.bf16.mxu0 0
    %3445 = vmatpush1.bf16.msra.mxu0 0
    %3446 = vmatprep.subr.bf16.mxu0 0
    %3447 = vmatpush1.bf16.msra.mxu0 0
    %3448 = vmatprep.subr.bf16.mxu0 0
    %3449 = vmatpush1.bf16.msra.mxu0 0
    %3450 = vmatprep.mubr.bf16.mxu0 0
    %3451 = vmatmul.mubr.bf16.gmra.mrb[0].mxu0 %v3416
    %v3452 = vpop.f32.mrb[0].mxu0
    %v3453 = vadd.f32 0.0, %v3452
    %v3454 = vpop.f32.mrb[0].mxu0
    %v3455 = vadd.f32 0.0, %v3454
    %v3456 = vpop.f32.mrb[0].mxu0
    %v3457 = vadd.f32 0.0, %v3456
    %v3458 = vpop.f32.mrb[0].mxu0
    %v3459 = vadd.f32 0.0, %v3458
    %3460 = vdwg.mxu0
    %v3461 = vadd.f32 %v3400, %v3453
    %v3462 = vadd.f32 %v3402, %v3455
    %v3463 = vadd.f32 %v3404, %v3457
    %v3464 = vadd.f32 %v3406, %v3459
    %v3465 = vld [vmem:[%s2 + $0x130] sm:$0xff]
    %v3466 = vld [vmem:[%s2 + $0x138] sm:$0xff]
    %3468 = vset.pattern.permute.xlu0 0
    %3469 = vperm.xlu0 %3468, %v3465
    %v3470 = vpop.permute.xlu0 %3469
    %3473 = vset.pattern.permute.xlu0 0
    %3474 = vperm.xlu0 %3473, %v3466
    %v3475 = vpop.permute.xlu0 %3474
    %v3477 = vadd.f32 %v3461, %v3470
    %v3478 = vadd.f32 %v3462, %v3470
    %v3479 = vadd.f32 %v3463, %v3475
    %v3480 = vadd.f32 %v3464, %v3475
    %v3481 = vmul.f32 %v3477, 0.1
    %v3482 = vmul.f32 %v3478, 0.1
    %v3483 = vmul.f32 %v3479, 0.1
    %v3484 = vmul.f32 %v3480, 0.1
    %v3485 = vmax.f32 %v3477, %v3481
    %v3486 = vmax.f32 %v3478, %v3482
    %v3487 = vmax.f32 %v3479, %v3483
    %v3488 = vmax.f32 %v3480, %v3484
    %3489 = vrot.lane.b32.xlu0 %v3485, 1
    %v3490 = vpop.permute.xlu0 %3489
    %3491 = vrot.lane.b32.xlu0 %v3487, 1
    %v3492 = vpop.permute.xlu0 %3491
    %3493 = vrot.lane.b32.xlu0 %v3486, 1
    %v3494 = vpop.permute.xlu0 %3493
    %3495 = vrot.lane.b32.xlu0 %v3488, 1
    %v3496 = vpop.permute.xlu0 %3495
    %v3497 = vsel %vm68, %v3490, %v3494
    %v3498 = vsel %vm68, %v3492, %v3496
    %v3499 = vsel %vm68, %v3494, %v3490
    %v3500 = vsel %vm68, %v3496, %v3492
    %v3501 = vsel %vm73, 0.0, %v3499
    %v3502 = vsel %vm74, 0.0, %v3497
    %v3503 = vsel %vm73, 0.0, %v3500
    %v3504 = vsel %vm74, 0.0, %v3498
    %3505 = vrot.lane.b32.xlu0 %v3485, 127
    %v3506 = vpop.permute.xlu0 %3505
    %3507 = vrot.lane.b32.xlu0 %v3487, 127
    %v3508 = vpop.permute.xlu0 %3507
    %3509 = vrot.lane.b32.xlu0 %v3486, 127
    %v3510 = vpop.permute.xlu0 %3509
    %3511 = vrot.lane.b32.xlu0 %v3488, 127
    %v3512 = vpop.permute.xlu0 %3511
    %v3513 = vsel %vm81, %v3506, %v3510
    %v3514 = vsel %vm81, %v3508, %v3512
    %v3515 = vsel %vm81, %v3510, %v3506
    %v3516 = vsel %vm81, %v3512, %v3508
    %v3517 = vsel %vm86, 0.0, %v3513
    %v3518 = vsel %vm87, 0.0, %v3515
    %v3519 = vsel %vm86, 0.0, %v3514
    %v3520 = vsel %vm87, 0.0, %v3516
    %v3521 = vpack.c.bf16 %v3503, %v3501
    %v3522 = vpack.c.bf16 %v3504, %v3502
    %v3523 = vpack.c.bf16 %v3487, %v3485
    %v3524 = vpack.c.bf16 %v3488, %v3486
    %v3525 = vpack.c.bf16 %v3519, %v3517
    %v3526 = vpack.c.bf16 %v3520, %v3518
    %v3527 = vld [vmem:[#allocation2 + $0x1b0] sm:$0x1]
    %v3528 = vld [vmem:[#allocation2 + $0x1b8] sm:$0x1]
    %v3530 = vsel %vm408, %v3528, 0
    %3532 = vmatprep.subr.bf16.mxu0 %v3524
    %3533 = vmatpush1.bf16.msra.mxu0 %v3523
    %3534 = vmatprep.subr.bf16.mxu0 0
    %3535 = vmatpush1.bf16.msra.mxu0 0
    %3536 = vmatprep.subr.bf16.mxu0 0
    %3537 = vmatpush1.bf16.msra.mxu0 0
    %3538 = vmatprep.subr.bf16.mxu0 0
    %3539 = vmatpush1.bf16.msra.mxu0 0
    %3540 = vmatprep.subr.bf16.mxu0 0
    %3541 = vmatpush1.bf16.msra.mxu0 0
    %3542 = vmatprep.subr.bf16.mxu0 0
    %3543 = vmatpush1.bf16.msra.mxu0 0
    %3544 = vmatprep.subr.bf16.mxu0 0
    %3545 = vmatpush1.bf16.msra.mxu0 0
    %3546 = vmatprep.subr.bf16.mxu0 0
    %3547 = vmatpush1.bf16.msra.mxu0 0
    %3548 = vmatprep.subr.bf16.mxu0 0
    %3549 = vmatpush1.bf16.msra.mxu0 0
    %3550 = vmatprep.subr.bf16.mxu0 0
    %3551 = vmatpush1.bf16.msra.mxu0 0
    %3552 = vmatprep.subr.bf16.mxu0 0
    %3553 = vmatpush1.bf16.msra.mxu0 0
    %3554 = vmatprep.subr.bf16.mxu0 0
    %3555 = vmatpush1.bf16.msra.mxu0 0
    %3556 = vmatprep.subr.bf16.mxu0 0
    %3557 = vmatpush1.bf16.msra.mxu0 0
    %3558 = vmatprep.subr.bf16.mxu0 0
    %3559 = vmatpush1.bf16.msra.mxu0 0
    %3560 = vmatprep.subr.bf16.mxu0 0
    %3561 = vmatpush1.bf16.msra.mxu0 0
    %3562 = vmatprep.subr.bf16.mxu0 0
    %3563 = vmatpush1.bf16.msra.mxu0 0
    %3564 = vmatprep.mubr.bf16.mxu0 0
    %3565 = vmatmul.mubr.bf16.gmra.mrb[0].mxu0 %v3530
    %v3566 = vpop.f32.mrb[0].mxu0
    %v3567 = vadd.f32 0.0, %v3566
    %v3568 = vpop.f32.mrb[0].mxu0
    %v3569 = vadd.f32 0.0, %v3568
    %v3570 = vpop.f32.mrb[0].mxu0
    %v3571 = vpop.f32.mrb[0].mxu0
    %3572 = vdwg.mxu0
    %v3574 = vsel %vm408, %v3527, 0
    %3576 = vmatprep.subr.bf16.mxu0 %v3522
    %3577 = vmatpush1.bf16.msra.mxu0 %v3521
    %3578 = vmatprep.subr.bf16.mxu0 0
    %3579 = vmatpush1.bf16.msra.mxu0 0
    %3580 = vmatprep.subr.bf16.mxu0 0
    %3581 = vmatpush1.bf16.msra.mxu0 0
    %3582 = vmatprep.subr.bf16.mxu0 0
    %3583 = vmatpush1.bf16.msra.mxu0 0
    %3584 = vmatprep.subr.bf16.mxu0 0
    %3585 = vmatpush1.bf16.msra.mxu0 0
    %3586 = vmatprep.subr.bf16.mxu0 0
    %3587 = vmatpush1.bf16.msra.mxu0 0
    %3588 = vmatprep.subr.bf16.mxu0 0
    %3589 = vmatpush1.bf16.msra.mxu0 0
    %3590 = vmatprep.subr.bf16.mxu0 0
    %3591 = vmatpush1.bf16.msra.mxu0 0
    %3592 = vmatprep.subr.bf16.mxu0 0
    %3593 = vmatpush1.bf16.msra.mxu0 0
    %3594 = vmatprep.subr.bf16.mxu0 0
    %3595 = vmatpush1.bf16.msra.mxu0 0
    %3596 = vmatprep.subr.bf16.mxu0 0
    %3597 = vmatpush1.bf16.msra.mxu0 0
    %3598 = vmatprep.subr.bf16.mxu0 0
    %3599 = vmatpush1.bf16.msra.mxu0 0
    %3600 = vmatprep.subr.bf16.mxu0 0
    %3601 = vmatpush1.bf16.msra.mxu0 0
    %3602 = vmatprep.subr.bf16.mxu0 0
    %3603 = vmatpush1.bf16.msra.mxu0 0
    %3604 = vmatprep.subr.bf16.mxu0 0
    %3605 = vmatpush1.bf16.msra.mxu0 0
    %3606 = vmatprep.subr.bf16.mxu0 0
    %3607 = vmatpush1.bf16.msra.mxu0 0
    %3608 = vmatprep.mubr.bf16.mxu0 0
    %3609 = vmatmul.mubr.bf16.gmra.mrb[0].mxu0 %v3574
    %v3610 = vpop.f32.mrb[0].mxu0
    %v3611 = vadd.f32 %v3567, %v3610
    %v3612 = vpop.f32.mrb[0].mxu0
    %v3613 = vadd.f32 %v3569, %v3612
    %v3614 = vpop.f32.mrb[0].mxu0
    %v3615 = vpop.f32.mrb[0].mxu0
    %3616 = vdwg.mxu0
    %v3617 = vld [vmem:[#allocation2 + $0x1c0] sm:$0x1]
    %v3619 = vsel %vm408, %v3617, 0
    %3621 = vmatprep.subr.bf16.mxu0 %v3526
    %3622 = vmatpush1.bf16.msra.mxu0 %v3525
    %3623 = vmatprep.subr.bf16.mxu0 0
    %3624 = vmatpush1.bf16.msra.mxu0 0
    %3625 = vmatprep.subr.bf16.mxu0 0
    %3626 = vmatpush1.bf16.msra.mxu0 0
    %3627 = vmatprep.subr.bf16.mxu0 0
    %3628 = vmatpush1.bf16.msra.mxu0 0
    %3629 = vmatprep.subr.bf16.mxu0 0
    %3630 = vmatpush1.bf16.msra.mxu0 0
    %3631 = vmatprep.subr.bf16.mxu0 0
    %3632 = vmatpush1.bf16.msra.mxu0 0
    %3633 = vmatprep.subr.bf16.mxu0 0
    %3634 = vmatpush1.bf16.msra.mxu0 0
    %3635 = vmatprep.subr.bf16.mxu0 0
    %3636 = vmatpush1.bf16.msra.mxu0 0
    %3637 = vmatprep.subr.bf16.mxu0 0
    %3638 = vmatpush1.bf16.msra.mxu0 0
    %3639 = vmatprep.subr.bf16.mxu0 0
    %3640 = vmatpush1.bf16.msra.mxu0 0
    %3641 = vmatprep.subr.bf16.mxu0 0
    %3642 = vmatpush1.bf16.msra.mxu0 0
    %3643 = vmatprep.subr.bf16.mxu0 0
    %3644 = vmatpush1.bf16.msra.mxu0 0
    %3645 = vmatprep.subr.bf16.mxu0 0
    %3646 = vmatpush1.bf16.msra.mxu0 0
    %3647 = vmatprep.subr.bf16.mxu0 0
    %3648 = vmatpush1.bf16.msra.mxu0 0
    %3649 = vmatprep.subr.bf16.mxu0 0
    %3650 = vmatpush1.bf16.msra.mxu0 0
    %3651 = vmatprep.subr.bf16.mxu0 0
    %3652 = vmatpush1.bf16.msra.mxu0 0
    %3653 = vmatprep.mubr.bf16.mxu0 0
    %3654 = vmatmul.mubr.bf16.gmra.mrb[0].mxu0 %v3619
    %v3655 = vpop.f32.mrb[0].mxu0
    %v3656 = vadd.f32 0.0, %v3655
    %v3657 = vpop.f32.mrb[0].mxu0
    %v3658 = vadd.f32 0.0, %v3657
    %v3659 = vpop.f32.mrb[0].mxu0
    %v3660 = vpop.f32.mrb[0].mxu0
    %3661 = vdwg.mxu0
    %v3662 = vadd.f32 %v3611, %v3656
    %v3663 = vadd.f32 %v3613, %v3658
    %v3664 = vld [vmem:[#allocation2 + $0x1c8] sm:$0x1]
    %v3666 = vsel %vm105, %v3664, 0
    %3668 = vmatprep.subr.bf16.mxu0 %v171
    %3669 = vmatpush1.bf16.msra.mxu0 %v168
    %3670 = vmatprep.subr.bf16.mxu0 0
    %3671 = vmatpush1.bf16.msra.mxu0 0
    %3672 = vmatprep.subr.bf16.mxu0 0
    %3673 = vmatpush1.bf16.msra.mxu0 0
    %3674 = vmatprep.subr.bf16.mxu0 0
    %3675 = vmatpush1.bf16.msra.mxu0 0
    %3676 = vmatprep.subr.bf16.mxu0 0
    %3677 = vmatpush1.bf16.msra.mxu0 0
    %3678 = vmatprep.subr.bf16.mxu0 0
    %3679 = vmatpush1.bf16.msra.mxu0 0
    %3680 = vmatprep.subr.bf16.mxu0 0
    %3681 = vmatpush1.bf16.msra.mxu0 0
    %3682 = vmatprep.subr.bf16.mxu0 0
    %3683 = vmatpush1.bf16.msra.mxu0 0
    %3684 = vmatprep.subr.bf16.mxu0 0
    %3685 = vmatpush1.bf16.msra.mxu0 0
    %3686 = vmatprep.subr.bf16.mxu0 0
    %3687 = vmatpush1.bf16.msra.mxu0 0
    %3688 = vmatprep.subr.bf16.mxu0 0
    %3689 = vmatpush1.bf16.msra.mxu0 0
    %3690 = vmatprep.subr.bf16.mxu0 0
    %3691 = vmatpush1.bf16.msra.mxu0 0
    %3692 = vmatprep.subr.bf16.mxu0 0
    %3693 = vmatpush1.bf16.msra.mxu0 0
    %3694 = vmatprep.subr.bf16.mxu0 0
    %3695 = vmatpush1.bf16.msra.mxu0 0
    %3696 = vmatprep.subr.bf16.mxu0 0
    %3697 = vmatpush1.bf16.msra.mxu0 0
    %3698 = vmatprep.subr.bf16.mxu0 0
    %3699 = vmatpush1.bf16.msra.mxu0 0
    %3700 = vmatprep.mubr.bf16.mxu0 0
    %3701 = vmatmul.mubr.bf16.gmra.mrb[0].mxu0 %v3666
    %v3702 = vpop.f32.mrb[0].mxu0
    %v3703 = vadd.f32 0.0, %v3702
    %v3704 = vpop.f32.mrb[0].mxu0
    %v3705 = vadd.f32 0.0, %v3704
    %v3706 = vpop.f32.mrb[0].mxu0
    %v3707 = vpop.f32.mrb[0].mxu0
    %3708 = vdwg.mxu0
    %v3709 = vadd.f32 %v3662, %v3703
    %v3710 = vadd.f32 %v3663, %v3705
    %v3711 = vld [vmem:[#allocation2 + $0x1d0] sm:$0x1]
    %v3713 = vsel %vm105, %v3711, 0
    %3715 = vmatprep.subr.bf16.mxu0 %v114
    %3716 = vmatpush1.bf16.msra.mxu0 %v111
    %3717 = vmatprep.subr.bf16.mxu0 0
    %3718 = vmatpush1.bf16.msra.mxu0 0
    %3719 = vmatprep.subr.bf16.mxu0 0
    %3720 = vmatpush1.bf16.msra.mxu0 0
    %3721 = vmatprep.subr.bf16.mxu0 0
    %3722 = vmatpush1.bf16.msra.mxu0 0
    %3723 = vmatprep.subr.bf16.mxu0 0
    %3724 = vmatpush1.bf16.msra.mxu0 0
    %3725 = vmatprep.subr.bf16.mxu0 0
    %3726 = vmatpush1.bf16.msra.mxu0 0
    %3727 = vmatprep.subr.bf16.mxu0 0
    %3728 = vmatpush1.bf16.msra.mxu0 0
    %3729 = vmatprep.subr.bf16.mxu0 0
    %3730 = vmatpush1.bf16.msra.mxu0 0
    %3731 = vmatprep.subr.bf16.mxu0 0
    %3732 = vmatpush1.bf16.msra.mxu0 0
    %3733 = vmatprep.subr.bf16.mxu0 0
    %3734 = vmatpush1.bf16.msra.mxu0 0
    %3735 = vmatprep.subr.bf16.mxu0 0
    %3736 = vmatpush1.bf16.msra.mxu0 0
    %3737 = vmatprep.subr.bf16.mxu0 0
    %3738 = vmatpush1.bf16.msra.mxu0 0
    %3739 = vmatprep.subr.bf16.mxu0 0
    %3740 = vmatpush1.bf16.msra.mxu0 0
    %3741 = vmatprep.subr.bf16.mxu0 0
    %3742 = vmatpush1.bf16.msra.mxu0 0
    %3743 = vmatprep.subr.bf16.mxu0 0
    %3744 = vmatpush1.bf16.msra.mxu0 0
    %3745 = vmatprep.subr.bf16.mxu0 0
    %3746 = vmatpush1.bf16.msra.mxu0 0
    %3747 = vmatprep.mubr.bf16.mxu0 0
    %3748 = vmatmul.mubr.bf16.gmra.mrb[0].mxu0 %v3713
    %v3749 = vpop.f32.mrb[0].mxu0
    %v3750 = vadd.f32 0.0, %v3749
    %v3751 = vpop.f32.mrb[0].mxu0
    %v3752 = vadd.f32 0.0, %v3751
    %v3753 = vpop.f32.mrb[0].mxu0
    %v3754 = vpop.f32.mrb[0].mxu0
    %3755 = vdwg.mxu0
    %v3756 = vadd.f32 %v3709, %v3750
    %v3757 = vadd.f32 %v3710, %v3752
    %v3758 = vld [vmem:[#allocation2 + $0x1d8] sm:$0x1]
    %v3760 = vsel %vm105, %v3758, 0
    %3762 = vmatprep.subr.bf16.mxu0 %v230
    %3763 = vmatpush1.bf16.msra.mxu0 %v227
    %3764 = vmatprep.subr.bf16.mxu0 0
    %3765 = vmatpush1.bf16.msra.mxu0 0
    %3766 = vmatprep.subr.bf16.mxu0 0
    %3767 = vmatpush1.bf16.msra.mxu0 0
    %3768 = vmatprep.subr.bf16.mxu0 0
    %3769 = vmatpush1.bf16.msra.mxu0 0
    %3770 = vmatprep.subr.bf16.mxu0 0
    %3771 = vmatpush1.bf16.msra.mxu0 0
    %3772 = vmatprep.subr.bf16.mxu0 0
    %3773 = vmatpush1.bf16.msra.mxu0 0
    %3774 = vmatprep.subr.bf16.mxu0 0
    %3775 = vmatpush1.bf16.msra.mxu0 0
    %3776 = vmatprep.subr.bf16.mxu0 0
    %3777 = vmatpush1.bf16.msra.mxu0 0
    %3778 = vmatprep.subr.bf16.mxu0 0
    %3779 = vmatpush1.bf16.msra.mxu0 0
    %3780 = vmatprep.subr.bf16.mxu0 0
    %3781 = vmatpush1.bf16.msra.mxu0 0
    %3782 = vmatprep.subr.bf16.mxu0 0
    %3783 = vmatpush1.bf16.msra.mxu0 0
    %3784 = vmatprep.subr.bf16.mxu0 0
    %3785 = vmatpush1.bf16.msra.mxu0 0
    %3786 = vmatprep.subr.bf16.mxu0 0
    %3787 = vmatpush1.bf16.msra.mxu0 0
    %3788 = vmatprep.subr.bf16.mxu0 0
    %3789 = vmatpush1.bf16.msra.mxu0 0
    %3790 = vmatprep.subr.bf16.mxu0 0
    %3791 = vmatpush1.bf16.msra.mxu0 0
    %3792 = vmatprep.subr.bf16.mxu0 0
    %3793 = vmatpush1.bf16.msra.mxu0 0
    %3794 = vmatprep.mubr.bf16.mxu0 0
    %3795 = vmatmul.mubr.bf16.gmra.mrb[0].mxu0 %v3760
    %v3796 = vpop.f32.mrb[0].mxu0
    %v3797 = vadd.f32 0.0, %v3796
    %v3798 = vpop.f32.mrb[0].mxu0
    %v3799 = vadd.f32 0.0, %v3798
    %v3800 = vpop.f32.mrb[0].mxu0
    %v3801 = vpop.f32.mrb[0].mxu0
    %3802 = vdwg.mxu0
    %v3803 = vadd.f32 %v3756, %v3797
    %v3804 = vadd.f32 %v3757, %v3799
    %v3805 = vld [vmem:[%s2 + $0x140] sm:$0x1]
    %3807 = vset.pattern.permute.xlu0 0
    %3808 = vperm.xlu0 %3807, %v3805
    %v3809 = vpop.permute.xlu0 %3808
    %v3811 = vadd.f32 %v3803, %v3809
    %v3812 = vadd.f32 %v3804, %v3809
    %v3813 = vmul.f32 %v3811, 0.1
    %v3814 = vmul.f32 %v3812, 0.1
    %v3815 = vmax.f32 %v3811, %v3813
    %v3816 = vmax.f32 %v3812, %v3814
    %v3819 = vcombine.low %v3815, %v3816
    %v3821 = vunpack.c.l.s4 1966171168
    %v3822 = vunpack.c.0.s8 %v3821
    %v3823 = vlaneseq
    %v3824 = vshrl.u32 %v3823, 7
    %v3825 = vsub.s32 %v3822, %v3824
    %v3826 = vrot.slane %v3819, %v3825
    %v3828 = vunpack.c.l.s4 1966171168
    %v3829 = vunpack.c.0.s8 %v3828
    %v3830 = vlaneseq
    %v3831 = vshrl.u32 %v3830, 7
    %v3832 = vsub.s32 %v3829, %v3831
    %v3833 = vrot.slane %v3826, %v3832
    %v3835 = vlaneseq
    %vm3836 = vcmp.ge.s32.totalorder %v3835, 0
    %vm3837 = vcmp.lt.s32.totalorder %v3835, 256
    %vm3838 = vmand %vm3836, %vm3837
    %3839 = vst.msk [vmem:[%s3] sm:$0x3] %vm3838, %v3833
    // Predicated region
    $region18: #{unet_forward.1} parent=1 // pred_check
      _
    $region19: #{unet_forward.1} parent=1 // pred_check_branch
      %3841 = sbr.rel (0) target = $region21
    $region20: #{unet_forward.1} parent=1 // pred_region
      _
    $region21: #{unet_forward.1} parent=1 // pred_fallthru
      _
    // Predicated region
    $region22: #{unet_forward.1} parent=1 // pred_check
      _
    $region23: #{unet_forward.1} parent=1 // pred_check_branch
      %3843 = sbr.rel (0) target = $region25
    $region24: #{unet_forward.1} parent=1 // pred_region
      _
    $region25: #{unet_forward.1} parent=1 // pred_fallthru
      _
    %3844 = vsyncpa [#allocation3], 1

</llo_original>
